<compile_context>
chip_gen: v5e
topology: v5e:2x2
jax: 0.10.0
libtpu: 0.0.40
codegen_flags: <defaults>
</compile_context>

<pallas_src>
import functools

import jax
import jax.numpy as jnp
from jax import lax
from jax.experimental import pallas as pl
from jax.experimental.pallas import tpu as pltpu


_VMEM_LIMIT = 32 * 1024 * 1024   # explicit scoped-VMEM budget (safe on v5e/v6e/v7x)
_MXU_DTYPE = jnp.float32         # set to jnp.bfloat16 on v6e/v7x for ~2x MXU throughput


def _round_up(x, m):
    return ((x + m - 1) // m) * m


def _mxdot(a, b):
    return jnp.dot(a.astype(_MXU_DTYPE), b.astype(_MXU_DTYPE),
                   preferred_element_type=jnp.float32)


# ---------------------------------------------------------------------------
# In-kernel math helpers
# ---------------------------------------------------------------------------
def _erf_approx(x):
    # Abramowitz & Stegun 7.1.26 polynomial, |error| < 1.5e-7 (negligible in f32).
    a1, a2, a3, a4, a5 = 0.254829592, -0.284496736, 1.421413741, -1.453152027, 1.061405429
    p = 0.3275911
    ax = jnp.abs(x)
    t = 1.0 / (1.0 + p * ax)
    poly = ((((a5 * t + a4) * t + a3) * t + a2) * t + a1) * t
    y = 1.0 - poly * jnp.exp(-ax * ax)
    return jnp.where(x >= 0, y, -y)


def _gelu_exact(x):
    # matches torch.nn.GELU() default (erf formulation)
    return 0.5 * x * (1.0 + _erf_approx(x * 0.7071067811865476))


# ---------------------------------------------------------------------------
# Fused whole-network kernel
# ---------------------------------------------------------------------------
def _resmlp_fused_kernel(patches_ref, pe_mat_ref, init_ref, mask_ref,
                         w1_ref, b1_ref, w2_ref, b2_ref, w3_ref, b3_ref,
                         head_w_ref, head_b_ref,
                         out_ref, pad1_ref, pad2_ref, *, T, D):
    """grid = (depth,).  pad1/pad2 are persistent zero-padded activation slabs.

    Slab layout: padded image pixel (tt, dd) with tt in [0,T+2), dd in [0,D+2)
    lives at buffer row 1 + tt*(D+2) + dd (one guard row at each end).  The
    "interior slab" (rows of padded image 1..T, all D+2 columns) holds the
    activation; its pad columns are kept at zero by a mask multiply so they act
    as the horizontal conv padding.  A 3x3 tap (ky, kx) is then simply the
    contiguous row range [ky*(D+2)+kx, ... + T*(D+2)) of the buffer.
    """
    W2 = D + 2
    TW2 = T * W2
    RS = 1 + W2                                   # first buffer row of the interior slab
    step = pl.program_id(0)
    last = pl.num_programs(0) - 1

    # -- step 0: zero the halo rows once; patch-embed + cls + pos into the slab --
    @pl.when(step == 0)
    def _():
        pad1_ref[...] = jnp.zeros_like(pad1_ref)
        pad2_ref[...] = jnp.zeros_like(pad2_ref)
        # emb[r, b]: token/row scatter folded into pe_mat at param-prep time.
        emb = _mxdot(pe_mat_ref[...], patches_ref[...])          # (TW2, C)
        pad1_ref[RS:RS + TW2, :] = emb + init_ref[...]           # + cls/pos/bias column

    mask = mask_ref[...]                                         # (TW2, 1): 0 at pad cols

    # -- conv1 (3x3, pad 1) + GELU: 9 MXU matmuls over contiguous row-shifted views --
    acc1 = _mxdot(pad1_ref[0:TW2, :], w1_ref[0, 0])
    for k in range(1, 9):
        ky, kx = divmod(k, 3)
        s = ky * W2 + kx
        acc1 = acc1 + _mxdot(pad1_ref[s:s + TW2, :], w1_ref[0, k])
    h1 = _gelu_exact(acc1 + b1_ref[0]) * mask                    # re-zero pad columns
    pad2_ref[RS:RS + TW2, :] = h1

    # -- conv2 (3x3, pad 1) + GELU --
    acc2 = _mxdot(pad2_ref[0:TW2, :], w2_ref[0, 0])
    for k in range(1, 9):
        ky, kx = divmod(k, 3)
        s = ky * W2 + kx
        acc2 = acc2 + _mxdot(pad2_ref[s:s + TW2, :], w2_ref[0, k])
    h2 = _gelu_exact(acc2 + b2_ref[0])

    # -- 1x1 residual conv + add; keep pad columns at zero; write the block output back --
    res = _mxdot(pad1_ref[RS:RS + TW2, :], w3_ref[0]) + b3_ref[0]
    pad1_ref[RS:RS + TW2, :] = (h2 + res) * mask

    # -- last step: fused token-mean + classifier head (1/T folded into head_w) --
    @pl.when(step == last)
    def _():
        act = pad1_ref[RS:RS + TW2, :]                           # (TW2, C)
        logits = jnp.dot(act.T, head_w_ref[...],                 # (C, NCp), lane-dense
                         preferred_element_type=jnp.float32)
        out_ref[...] = (logits + head_b_ref[...]).astype(out_ref.dtype)


# ---------------------------------------------------------------------------
# One-time parameter packing (hoisted out of the hot forward)
# ---------------------------------------------------------------------------
def prepare_params(params, *, image_size, patch_size, hidden_dim, num_classes, depth,
                   in_chans=3):
    D = hidden_dim
    Hc = D // 2
    P = patch_size
    Hp = Wp = image_size // P
    NP = Hp * Wp
    T = NP + 1
    J = in_chans * P * P
    W2 = D + 2
    TW2 = T * W2
    NCp = _round_up(num_classes, 128)
    blocks = params["blocks"]
    assert len(blocks) == depth

    # patch-embedding matrix: interior_slab = pe_mat @ patches_flat (+ init column).
    # pe_mat[t*W2 + d + 1, p*J + j] = pe_w[d, j] with t = p + 1; zeros at pad columns.
    pe_flat = params["pe_w"].reshape(D, J).astype(jnp.float32)
    pe_mat = jnp.zeros((TW2, NP * J), jnp.float32)
    for p in range(NP):
        t = p + 1
        pe_mat = pe_mat.at[t * W2 + 1:t * W2 + 1 + D, p * J:(p + 1) * J].set(pe_flat)

    # init column: pos + (pe_b for patch tokens | cls for token 0); zeros at pad cols.
    pos = params["pos_embedding"][0]                       # (T, D)
    cls = params["cls_token"][0, 0]                        # (D,)
    init = jnp.zeros((TW2, 1), jnp.float32)
    for t in range(T):
        row = pos[t] + (cls if t == 0 else params["pe_b"])
        init = init.at[t * W2 + 1:t * W2 + 1 + D, 0].set(row)

    # interior-column mask (1 inside the image, 0 at the two pad columns of each row)
    col = jnp.arange(TW2) % W2
    mask = ((col >= 1) & (col <= D)).astype(jnp.float32).reshape(TW2, 1)

    # conv weights stacked over depth; tap k = ky*3+kx packed as (C_in, C_out)
    w1 = jnp.stack([jnp.transpose(b["w1"], (2, 3, 1, 0)).reshape(9, D, Hc) for b in blocks])
    b1 = jnp.stack([b["b1"].reshape(1, Hc) for b in blocks])
    w2 = jnp.stack([jnp.transpose(b["w2"], (2, 3, 1, 0)).reshape(9, Hc, D) for b in blocks])
    b2 = jnp.stack([b["b2"].reshape(1, D) for b in blocks])
    w3 = jnp.stack([b["w3"].reshape(D, D).T for b in blocks])
    b3 = jnp.stack([b["b3"].reshape(1, D) for b in blocks])

    # head: token-mean (1/T) and the slab row layout folded into the fc weight,
    # classifier lanes padded to a dense multiple of 128.
    fc_wt = (params["fc_w"].T / T).astype(jnp.float32)     # (D, NC)
    head_w = jnp.zeros((TW2, NCp), jnp.float32)
    for t in range(T):
        head_w = head_w.at[t * W2 + 1:t * W2 + 1 + D, :num_classes].set(fc_wt)
    head_b = jnp.zeros((1, NCp), jnp.float32).at[0, :num_classes].set(params["fc_b"])

    return {"pe_mat": pe_mat, "init": init, "mask": mask,
            "w1": w1, "b1": b1, "w2": w2, "b2": b2, "w3": w3, "b3": b3,
            "head_w": head_w, "head_b": head_b}


# ---------------------------------------------------------------------------
# Forward pass (single pallas_call)
# ---------------------------------------------------------------------------
def resmlp_forward(packed, x, *, patch_size, hidden_dim, num_classes, depth):
    B, Cin, H, W = x.shape
    D = hidden_dim
    Hc = D // 2
    P = patch_size
    Hp, Wp = H // P, W // P
    NP = Hp * Wp
    J = Cin * P * P
    T = NP + 1
    W2 = D + 2
    TW2 = T * W2
    NROWS = (T + 2) * W2 + 2          # padded slab + one guard row at each end
    NCp = packed["head_w"].shape[1]
    assert B == D, "the PyTorch forward only type-checks when batch == hidden_dim"

    # per-forward input layout prep: patches in (p-major, (ci,i,j)-minor) x batch order
    patches = x.reshape(B, Cin, Hp, P, Wp, P).transpose(2, 4, 1, 3, 5, 0).reshape(NP * J, B)

    kernel = functools.partial(_resmlp_fused_kernel, T=T, D=D)
    cmap = lambda d: (0, 0)           # depth-invariant operands
    out = pl.pallas_call(
        kernel,
        out_shape=jax.ShapeDtypeStruct((B, NCp), jnp.float32),
        grid=(depth,),
        in_specs=[
            pl.BlockSpec((NP * J, B), cmap),                        # patches
            pl.BlockSpec((TW2, NP * J), cmap),                      # pe_mat
            pl.BlockSpec((TW2, 1), cmap),                           # init
            pl.BlockSpec((TW2, 1), cmap),                           # mask
            pl.BlockSpec((1, 9, D, Hc), lambda d: (d, 0, 0, 0)),    # w1 (per-depth prefetch)
            pl.BlockSpec((1, 1, Hc), lambda d: (d, 0, 0)),          # b1
            pl.BlockSpec((1, 9, Hc, D), lambda d: (d, 0, 0, 0)),    # w2
            pl.BlockSpec((1, 1, D), lambda d: (d, 0, 0)),           # b2
            pl.BlockSpec((1, D, D), lambda d: (d, 0, 0)),           # w3
            pl.BlockSpec((1, 1, D), lambda d: (d, 0, 0)),           # b3
            pl.BlockSpec((TW2, NCp), cmap),                         # head_w
            pl.BlockSpec((1, NCp), cmap),                           # head_b
        ],
        out_specs=pl.BlockSpec((B, NCp), cmap),
        scratch_shapes=[
            pltpu.VMEM((NROWS, B), jnp.float32),    # persistent padded activation slab
            pltpu.VMEM((NROWS, Hc), jnp.float32),   # padded hidden (Hc-channel) slab
        ],
        compiler_params=pltpu.CompilerParams(
            dimension_semantics=("arbitrary",),     # depth is sequential (scratch carry)
            vmem_limit_bytes=_VMEM_LIMIT),
    )(patches, packed["pe_mat"], packed["init"], packed["mask"],
      packed["w1"], packed["b1"], packed["w2"], packed["b2"],
      packed["w3"], packed["b3"], packed["head_w"], packed["head_b"])
    return out[:, :num_classes]


# ---------------------------------------------------------------------------
# Model parameters
# ---------------------------------------------------------------------------
def init_params(key, *, hidden_dim, patch_size, num_classes, num_patches, depth, in_chans=3):
    D = hidden_dim
    Hc = D // 2

    def unif(k, shape, fan_in):
        bound = 1.0 / (fan_in ** 0.5)
        return jax.random.uniform(k, shape, jnp.float32, -bound, bound)

    keys = iter(jax.random.split(key, 8 + 6 * depth))
    patch_dim = in_chans * patch_size * patch_size
    params = {
        "pe_w": unif(next(keys), (D, in_chans, patch_size, patch_size), patch_dim),
        "pe_b": unif(next(keys), (D,), patch_dim),
        "cls_token": jax.random.normal(next(keys), (1, 1, D), jnp.float32),
        "pos_embedding": jax.random.normal(next(keys), (1, num_patches + 1, D), jnp.float32),
        "fc_w": unif(next(keys), (num_classes, D), D),
        "fc_b": unif(next(keys), (num_classes,), D),
        "blocks": [],
    }
    for _ in range(depth):
        params["blocks"].append({
            "w1": unif(next(keys), (Hc, D, 3, 3), D * 9),
            "b1": unif(next(keys), (Hc,), D * 9),
            "w2": unif(next(keys), (D, Hc, 3, 3), Hc * 9),
            "b2": unif(next(keys), (D,), Hc * 9),
            "w3": unif(next(keys), (D, D, 1, 1), D),
            "b3": unif(next(keys), (D,), D),
        })
    return params


# ---------------------------------------------------------------------------
# Pure-JAX reference (mirrors the PyTorch ops) for correctness checking
# ---------------------------------------------------------------------------
def resmlp_reference(params, x, *, patch_size, hidden_dim):
    P, D = patch_size, hidden_dim
    B = x.shape[0]
    dn = ("NCHW", "OIHW", "NCHW")
    gelu = lambda v: jax.nn.gelu(v, approximate=False)

    y = lax.conv_general_dilated(x, params["pe_w"], (P, P), "VALID", dimension_numbers=dn)
    y = y + params["pe_b"][None, :, None, None]
    y = y.reshape(B, D, -1).transpose(0, 2, 1)
    cls = jnp.broadcast_to(params["cls_token"], (B, 1, D))
    y = jnp.concatenate([cls, y], axis=1) + params["pos_embedding"]
    for blk in params["blocks"]:
        r = y
        h = lax.conv_general_dilated(y[None], blk["w1"], (1, 1), ((1, 1), (1, 1)),
                                     dimension_numbers=dn)
        h = gelu(h + blk["b1"][None, :, None, None])
        h = lax.conv_general_dilated(h, blk["w2"], (1, 1), ((1, 1), (1, 1)),
                                     dimension_numbers=dn)
        h = gelu(h + blk["b2"][None, :, None, None])
        rr = lax.conv_general_dilated(r[None], blk["w3"], (1, 1), ((0, 0), (0, 0)),
                                      dimension_numbers=dn)
        rr = rr + blk["b3"][None, :, None, None]
        y = (h + rr)[0]
    y = y.mean(axis=1)
    return y @ params["fc_w"].T + params["fc_b"]


# ---------------------------------------------------------------------------
if __name__ == "__main__":
    IMAGE_SIZE, PATCH_SIZE, NUM_CLASSES, HIDDEN_DIM, DEPTH = 8, 4, 10, 8, 2
    NUM_PATCHES = (IMAGE_SIZE // PATCH_SIZE) ** 2
    BATCH = HIDDEN_DIM  # required by the PyTorch forward (see layout note at top)

    key = jax.random.PRNGKey(0)
    pkey, xkey = jax.random.split(key)
    params = init_params(pkey, hidden_dim=HIDDEN_DIM, patch_size=PATCH_SIZE,
                         num_classes=NUM_CLASSES, num_patches=NUM_PATCHES, depth=DEPTH)
    x = jax.random.normal(xkey, (BATCH, 3, IMAGE_SIZE, IMAGE_SIZE), jnp.float32)

    # one-time parameter packing (all weight-layout work hoisted out of the forward)
    packed = prepare_params(params, image_size=IMAGE_SIZE, patch_size=PATCH_SIZE,
                            hidden_dim=HIDDEN_DIM, num_classes=NUM_CLASSES, depth=DEPTH)

    fwd = jax.jit(functools.partial(resmlp_forward, patch_size=PATCH_SIZE,
                                    hidden_dim=HIDDEN_DIM, num_classes=NUM_CLASSES,
                                    depth=DEPTH))
    out = jax.block_until_ready(fwd(packed, x))

    ref = resmlp_reference(params, x, patch_size=PATCH_SIZE, hidden_dim=HIDDEN_DIM)
    assert out.shape == (BATCH, NUM_CLASSES)
    tol = 1e-3 if _MXU_DTYPE == jnp.float32 else 2e-2
    if not jnp.allclose(out, ref, rtol=tol, atol=tol):
        raise AssertionError(f"mismatch: max abs err = {jnp.max(jnp.abs(out - ref))}")
    print("KERNEL_OK")
</pallas_src>

<mosaic_0001>
module attributes {stable_mosaic.version = 11 : i64} {
  func.func @_resmlp_fused_kernel(%arg0: i32, %arg1: memref<192x8xf32, #tpu.memory_space<vmem>>, %arg2: memref<50x192xf32, #tpu.memory_space<vmem>>, %arg3: memref<50x1xf32, #tpu.memory_space<vmem>>, %arg4: memref<50x1xf32, #tpu.memory_space<vmem>>, %arg5: memref<1x9x8x4xf32, #tpu.memory_space<vmem>>, %arg6: memref<1x1x4xf32, #tpu.memory_space<vmem>>, %arg7: memref<1x9x4x8xf32, #tpu.memory_space<vmem>>, %arg8: memref<1x1x8xf32, #tpu.memory_space<vmem>>, %arg9: memref<1x8x8xf32, #tpu.memory_space<vmem>>, %arg10: memref<1x1x8xf32, #tpu.memory_space<vmem>>, %arg11: memref<50x128xf32, #tpu.memory_space<vmem>>, %arg12: memref<1x128xf32, #tpu.memory_space<vmem>>, %arg13: memref<8x128xf32, #tpu.memory_space<vmem>>, %arg14: memref<72x8xf32, #tpu.memory_space<vmem>>, %arg15: memref<72x4xf32, #tpu.memory_space<vmem>>) attributes {dimension_semantics = [#tpu.dimension_semantics<arbitrary>], iteration_bounds = array<i64: 2>, scalar_prefetch = 0 : i64, scratch_operands = 2 : i64, tpu.core_type = #tpu.core_type<tc>, window_params = [{pipeline_mode = #tpu.pipeline_mode<synchronous>, transform_indices = @transform_0, window_bounds = array<i64: 192, 8>}, {pipeline_mode = #tpu.pipeline_mode<synchronous>, transform_indices = @transform_1, window_bounds = array<i64: 50, 192>}, {pipeline_mode = #tpu.pipeline_mode<synchronous>, transform_indices = @transform_2, window_bounds = array<i64: 50, 1>}, {pipeline_mode = #tpu.pipeline_mode<synchronous>, transform_indices = @transform_3, window_bounds = array<i64: 50, 1>}, {transform_indices = @transform_4, window_bounds = array<i64: 1, 9, 8, 4>}, {transform_indices = @transform_5, window_bounds = array<i64: 1, 1, 4>}, {transform_indices = @transform_6, window_bounds = array<i64: 1, 9, 4, 8>}, {transform_indices = @transform_7, window_bounds = array<i64: 1, 1, 8>}, {transform_indices = @transform_8, window_bounds = array<i64: 1, 8, 8>}, {transform_indices = @transform_9, window_bounds = array<i64: 1, 1, 8>}, {pipeline_mode = #tpu.pipeline_mode<synchronous>, transform_indices = @transform_10, window_bounds = array<i64: 50, 128>}, {pipeline_mode = #tpu.pipeline_mode<synchronous>, transform_indices = @transform_11, window_bounds = array<i64: 1, 128>}, {pipeline_mode = #tpu.pipeline_mode<synchronous>, transform_indices = @transform_12, window_bounds = array<i64: 8, 128>}]} {
    %c0_i32 = arith.constant 0 : i32
    %0 = arith.cmpi eq, %arg0, %c0_i32 : i32
    %1 = arith.extui %0 : i1 to i32
    %c0_i32_0 = arith.constant 0 : i32
    %2 = arith.cmpi ne, %1, %c0_i32_0 : i32
    scf.if %2 {
      %cst_163 = arith.constant 0.000000e+00 : f32
      %198 = vector.broadcast %cst_163 : f32 to vector<72x8xf32>
      %c0_164 = arith.constant 0 : index
      %c0_165 = arith.constant 0 : index
      %199 = vector.load %arg14[%c0_164, %c0_165] : memref<72x8xf32, #tpu.memory_space<vmem>>, vector<72x8xf32>
      tpu.vector_store %arg14[%c0_164, %c0_165], %198 {strides = array<i32>} : memref<72x8xf32, #tpu.memory_space<vmem>>, vector<72x8xf32>,
      %cst_166 = arith.constant 0.000000e+00 : f32
      %200 = vector.broadcast %cst_166 : f32 to vector<72x4xf32>
      %c0_167 = arith.constant 0 : index
      %c0_168 = arith.constant 0 : index
      %201 = vector.load %arg15[%c0_167, %c0_168] : memref<72x4xf32, #tpu.memory_space<vmem>>, vector<72x4xf32>
      tpu.vector_store %arg15[%c0_167, %c0_168], %200 {strides = array<i32>} : memref<72x4xf32, #tpu.memory_space<vmem>>, vector<72x4xf32>,
      %c0_169 = arith.constant 0 : index
      %c0_170 = arith.constant 0 : index
      %202 = vector.load %arg2[%c0_169, %c0_170] : memref<50x192xf32, #tpu.memory_space<vmem>>, vector<50x192xf32>
      %c0_171 = arith.constant 0 : index
      %c0_172 = arith.constant 0 : index
      %203 = vector.load %arg1[%c0_171, %c0_172] : memref<192x8xf32, #tpu.memory_space<vmem>>, vector<192x8xf32>
      %cst_173 = arith.constant dense<0.000000e+00> : vector<50x8xf32>
      %204 = tpu.matmul %202, %203, %cst_173 {dimension_numbers = #tpu.dot_dimension_numbers<[1], [0], [0], [1], [0, 0, 1, 1], [], []>} : vector<50x192xf32>, vector<192x8xf32>, vector<50x8xf32> -> vector<50x8xf32>
      %c0_174 = arith.constant 0 : index
      %c0_175 = arith.constant 0 : index
      %205 = vector.load %arg3[%c0_174, %c0_175] : memref<50x1xf32, #tpu.memory_space<vmem>>, vector<50x1xf32>
      %206 = vector.broadcast %205 : vector<50x1xf32> to vector<50x8xf32>
      %207 = arith.addf %204, %206 : vector<50x8xf32>
      %c11_176 = arith.constant 11 : index
      %c0_177 = arith.constant 0 : index
      %208 = vector.load %arg14[%c11_176, %c0_177] : memref<72x8xf32, #tpu.memory_space<vmem>>, vector<50x8xf32>
      tpu.vector_store %arg14[%c11_176, %c0_177], %207 {strides = array<i32>} : memref<72x8xf32, #tpu.memory_space<vmem>>, vector<50x8xf32>,
    } else {
    }
    %c0 = arith.constant 0 : index
    %c0_1 = arith.constant 0 : index
    %3 = vector.load %arg4[%c0, %c0_1] : memref<50x1xf32, #tpu.memory_space<vmem>>, vector<50x1xf32>
    %c0_2 = arith.constant 0 : index
    %c0_3 = arith.constant 0 : index
    %4 = vector.load %arg14[%c0_2, %c0_3] : memref<72x8xf32, #tpu.memory_space<vmem>>, vector<50x8xf32>
    %c0_4 = arith.constant 0 : index
    %c0_5 = arith.constant 0 : index
    %c0_6 = arith.constant 0 : index
    %c0_7 = arith.constant 0 : index
    %5 = vector.load %arg5[%c0_4, %c0_5, %c0_6, %c0_7] : memref<1x9x8x4xf32, #tpu.memory_space<vmem>>, vector<1x1x8x4xf32>
    %6 = vector.shape_cast %5 : vector<1x1x8x4xf32> to vector<8x4xf32>
    %cst = arith.constant dense<0.000000e+00> : vector<50x4xf32>
    %7 = tpu.matmul %4, %6, %cst {dimension_numbers = #tpu.dot_dimension_numbers<[1], [0], [0], [1], [0, 0, 1, 1], [], []>} : vector<50x8xf32>, vector<8x4xf32>, vector<50x4xf32> -> vector<50x4xf32>
    %c1 = arith.constant 1 : index
    %c0_8 = arith.constant 0 : index
    %8 = vector.load %arg14[%c1, %c0_8] : memref<72x8xf32, #tpu.memory_space<vmem>>, vector<50x8xf32>
    %c0_9 = arith.constant 0 : index
    %c1_10 = arith.constant 1 : index
    %c0_11 = arith.constant 0 : index
    %c0_12 = arith.constant 0 : index
    %9 = vector.load %arg5[%c0_9, %c1_10, %c0_11, %c0_12] : memref<1x9x8x4xf32, #tpu.memory_space<vmem>>, vector<1x1x8x4xf32>
    %10 = vector.shape_cast %9 : vector<1x1x8x4xf32> to vector<8x4xf32>
    %cst_13 = arith.constant dense<0.000000e+00> : vector<50x4xf32>
    %11 = tpu.matmul %8, %10, %cst_13 {dimension_numbers = #tpu.dot_dimension_numbers<[1], [0], [0], [1], [0, 0, 1, 1], [], []>} : vector<50x8xf32>, vector<8x4xf32>, vector<50x4xf32> -> vector<50x4xf32>
    %12 = arith.addf %7, %11 : vector<50x4xf32>
    %c2 = arith.constant 2 : index
    %c0_14 = arith.constant 0 : index
    %13 = vector.load %arg14[%c2, %c0_14] : memref<72x8xf32, #tpu.memory_space<vmem>>, vector<50x8xf32>
    %c0_15 = arith.constant 0 : index
    %c2_16 = arith.constant 2 : index
    %c0_17 = arith.constant 0 : index
    %c0_18 = arith.constant 0 : index
    %14 = vector.load %arg5[%c0_15, %c2_16, %c0_17, %c0_18] : memref<1x9x8x4xf32, #tpu.memory_space<vmem>>, vector<1x1x8x4xf32>
    %15 = vector.shape_cast %14 : vector<1x1x8x4xf32> to vector<8x4xf32>
    %cst_19 = arith.constant dense<0.000000e+00> : vector<50x4xf32>
    %16 = tpu.matmul %13, %15, %cst_19 {dimension_numbers = #tpu.dot_dimension_numbers<[1], [0], [0], [1], [0, 0, 1, 1], [], []>} : vector<50x8xf32>, vector<8x4xf32>, vector<50x4xf32> -> vector<50x4xf32>
    %17 = arith.addf %12, %16 : vector<50x4xf32>
    %c10 = arith.constant 10 : index
    %c0_20 = arith.constant 0 : index
    %18 = vector.load %arg14[%c10, %c0_20] : memref<72x8xf32, #tpu.memory_space<vmem>>, vector<50x8xf32>
    %c0_21 = arith.constant 0 : index
    %c3 = arith.constant 3 : index
    %c0_22 = arith.constant 0 : index
    %c0_23 = arith.constant 0 : index
    %19 = vector.load %arg5[%c0_21, %c3, %c0_22, %c0_23] : memref<1x9x8x4xf32, #tpu.memory_space<vmem>>, vector<1x1x8x4xf32>
    %20 = vector.shape_cast %19 : vector<1x1x8x4xf32> to vector<8x4xf32>
    %cst_24 = arith.constant dense<0.000000e+00> : vector<50x4xf32>
    %21 = tpu.matmul %18, %20, %cst_24 {dimension_numbers = #tpu.dot_dimension_numbers<[1], [0], [0], [1], [0, 0, 1, 1], [], []>} : vector<50x8xf32>, vector<8x4xf32>, vector<50x4xf32> -> vector<50x4xf32>
    %22 = arith.addf %17, %21 : vector<50x4xf32>
    %c11 = arith.constant 11 : index
    %c0_25 = arith.constant 0 : index
    %23 = vector.load %arg14[%c11, %c0_25] : memref<72x8xf32, #tpu.memory_space<vmem>>, vector<50x8xf32>
    %c0_26 = arith.constant 0 : index
    %c4 = arith.constant 4 : index
    %c0_27 = arith.constant 0 : index
    %c0_28 = arith.constant 0 : index
    %24 = vector.load %arg5[%c0_26, %c4, %c0_27, %c0_28] : memref<1x9x8x4xf32, #tpu.memory_space<vmem>>, vector<1x1x8x4xf32>
    %25 = vector.shape_cast %24 : vector<1x1x8x4xf32> to vector<8x4xf32>
    %cst_29 = arith.constant dense<0.000000e+00> : vector<50x4xf32>
    %26 = tpu.matmul %23, %25, %cst_29 {dimension_numbers = #tpu.dot_dimension_numbers<[1], [0], [0], [1], [0, 0, 1, 1], [], []>} : vector<50x8xf32>, vector<8x4xf32>, vector<50x4xf32> -> vector<50x4xf32>
    %27 = arith.addf %22, %26 : vector<50x4xf32>
    %c12 = arith.constant 12 : index
    %c0_30 = arith.constant 0 : index
    %28 = vector.load %arg14[%c12, %c0_30] : memref<72x8xf32, #tpu.memory_space<vmem>>, vector<50x8xf32>
    %c0_31 = arith.constant 0 : index
    %c5 = arith.constant 5 : index
    %c0_32 = arith.constant 0 : index
    %c0_33 = arith.constant 0 : index
    %29 = vector.load %arg5[%c0_31, %c5, %c0_32, %c0_33] : memref<1x9x8x4xf32, #tpu.memory_space<vmem>>, vector<1x1x8x4xf32>
    %30 = vector.shape_cast %29 : vector<1x1x8x4xf32> to vector<8x4xf32>
    %cst_34 = arith.constant dense<0.000000e+00> : vector<50x4xf32>
    %31 = tpu.matmul %28, %30, %cst_34 {dimension_numbers = #tpu.dot_dimension_numbers<[1], [0], [0], [1], [0, 0, 1, 1], [], []>} : vector<50x8xf32>, vector<8x4xf32>, vector<50x4xf32> -> vector<50x4xf32>
    %32 = arith.addf %27, %31 : vector<50x4xf32>
    %c20 = arith.constant 20 : index
    %c0_35 = arith.constant 0 : index
    %33 = vector.load %arg14[%c20, %c0_35] : memref<72x8xf32, #tpu.memory_space<vmem>>, vector<50x8xf32>
    %c0_36 = arith.constant 0 : index
    %c6 = arith.constant 6 : index
    %c0_37 = arith.constant 0 : index
    %c0_38 = arith.constant 0 : index
    %34 = vector.load %arg5[%c0_36, %c6, %c0_37, %c0_38] : memref<1x9x8x4xf32, #tpu.memory_space<vmem>>, vector<1x1x8x4xf32>
    %35 = vector.shape_cast %34 : vector<1x1x8x4xf32> to vector<8x4xf32>
    %cst_39 = arith.constant dense<0.000000e+00> : vector<50x4xf32>
    %36 = tpu.matmul %33, %35, %cst_39 {dimension_numbers = #tpu.dot_dimension_numbers<[1], [0], [0], [1], [0, 0, 1, 1], [], []>} : vector<50x8xf32>, vector<8x4xf32>, vector<50x4xf32> -> vector<50x4xf32>
    %37 = arith.addf %32, %36 : vector<50x4xf32>
    %c21 = arith.constant 21 : index
    %c0_40 = arith.constant 0 : index
    %38 = vector.load %arg14[%c21, %c0_40] : memref<72x8xf32, #tpu.memory_space<vmem>>, vector<50x8xf32>
    %c0_41 = arith.constant 0 : index
    %c7 = arith.constant 7 : index
    %c0_42 = arith.constant 0 : index
    %c0_43 = arith.constant 0 : index
    %39 = vector.load %arg5[%c0_41, %c7, %c0_42, %c0_43] : memref<1x9x8x4xf32, #tpu.memory_space<vmem>>, vector<1x1x8x4xf32>
    %40 = vector.shape_cast %39 : vector<1x1x8x4xf32> to vector<8x4xf32>
    %cst_44 = arith.constant dense<0.000000e+00> : vector<50x4xf32>
    %41 = tpu.matmul %38, %40, %cst_44 {dimension_numbers = #tpu.dot_dimension_numbers<[1], [0], [0], [1], [0, 0, 1, 1], [], []>} : vector<50x8xf32>, vector<8x4xf32>, vector<50x4xf32> -> vector<50x4xf32>
    %42 = arith.addf %37, %41 : vector<50x4xf32>
    %c22 = arith.constant 22 : index
    %c0_45 = arith.constant 0 : index
    %43 = vector.load %arg14[%c22, %c0_45] : memref<72x8xf32, #tpu.memory_space<vmem>>, vector<50x8xf32>
    %c0_46 = arith.constant 0 : index
    %c8 = arith.constant 8 : index
    %c0_47 = arith.constant 0 : index
    %c0_48 = arith.constant 0 : index
    %44 = vector.load %arg5[%c0_46, %c8, %c0_47, %c0_48] : memref<1x9x8x4xf32, #tpu.memory_space<vmem>>, vector<1x1x8x4xf32>
    %45 = vector.shape_cast %44 : vector<1x1x8x4xf32> to vector<8x4xf32>
    %cst_49 = arith.constant dense<0.000000e+00> : vector<50x4xf32>
    %46 = tpu.matmul %43, %45, %cst_49 {dimension_numbers = #tpu.dot_dimension_numbers<[1], [0], [0], [1], [0, 0, 1, 1], [], []>} : vector<50x8xf32>, vector<8x4xf32>, vector<50x4xf32> -> vector<50x4xf32>
    %47 = arith.addf %42, %46 : vector<50x4xf32>
    %c0_50 = arith.constant 0 : index
    %c0_51 = arith.constant 0 : index
    %c0_52 = arith.constant 0 : index
    %48 = vector.load %arg6[%c0_50, %c0_51, %c0_52] : memref<1x1x4xf32, #tpu.memory_space<vmem>>, vector<1x1x4xf32>
    %49 = vector.shape_cast %48 : vector<1x1x4xf32> to vector<1x4xf32>
    %50 = vector.broadcast %49 : vector<1x4xf32> to vector<50x4xf32>
    %51 = arith.addf %47, %50 : vector<50x4xf32>
    %cst_53 = arith.constant 5.000000e-01 : f32
    %52 = vector.broadcast %cst_53 : f32 to vector<50x4xf32>
    %53 = arith.mulf %52, %51 : vector<50x4xf32>
    %cst_54 = arith.constant 0.707106769 : f32
    %54 = vector.broadcast %cst_54 : f32 to vector<50x4xf32>
    %55 = arith.mulf %51, %54 : vector<50x4xf32>
    %56 = math.absf %55 : vector<50x4xf32>
    %cst_55 = arith.constant 0.327591091 : f32
    %57 = vector.broadcast %cst_55 : f32 to vector<50x4xf32>
    %58 = arith.mulf %57, %56 : vector<50x4xf32>
    %cst_56 = arith.constant 1.000000e+00 : f32
    %59 = vector.broadcast %cst_56 : f32 to vector<50x4xf32>
    %60 = arith.addf %59, %58 : vector<50x4xf32>
    %cst_57 = arith.constant 1.000000e+00 : f32
    %61 = vector.broadcast %cst_57 : f32 to vector<50x4xf32>
    %62 = arith.divf %61, %60 : vector<50x4xf32>
    %cst_58 = arith.constant 1.06140542 : f32
    %63 = vector.broadcast %cst_58 : f32 to vector<50x4xf32>
    %64 = arith.mulf %63, %62 : vector<50x4xf32>
    %cst_59 = arith.constant -1.45315206 : f32
    %65 = vector.broadcast %cst_59 : f32 to vector<50x4xf32>
    %66 = arith.addf %64, %65 : vector<50x4xf32>
    %67 = arith.mulf %66, %62 : vector<50x4xf32>
    %cst_60 = arith.constant 1.42141378 : f32
    %68 = vector.broadcast %cst_60 : f32 to vector<50x4xf32>
    %69 = arith.addf %67, %68 : vector<50x4xf32>
    %70 = arith.mulf %69, %62 : vector<50x4xf32>
    %cst_61 = arith.constant -0.284496725 : f32
    %71 = vector.broadcast %cst_61 : f32 to vector<50x4xf32>
    %72 = arith.addf %70, %71 : vector<50x4xf32>
    %73 = arith.mulf %72, %62 : vector<50x4xf32>
    %cst_62 = arith.constant 0.254829586 : f32
    %74 = vector.broadcast %cst_62 : f32 to vector<50x4xf32>
    %75 = arith.addf %73, %74 : vector<50x4xf32>
    %76 = arith.mulf %75, %62 : vector<50x4xf32>
    %cst_63 = arith.constant 0.000000e+00 : f32
    %77 = vector.broadcast %cst_63 : f32 to vector<50x4xf32>
    %78 = arith.subf %77, %56 : vector<50x4xf32>
    %79 = arith.mulf %78, %56 : vector<50x4xf32>
    %80 = math.exp %79 : vector<50x4xf32>
    %81 = arith.mulf %76, %80 : vector<50x4xf32>
    %cst_64 = arith.constant 1.000000e+00 : f32
    %82 = vector.broadcast %cst_64 : f32 to vector<50x4xf32>
    %83 = arith.subf %82, %81 : vector<50x4xf32>
    %cst_65 = arith.constant 0.000000e+00 : f32
    %84 = vector.broadcast %cst_65 : f32 to vector<50x4xf32>
    %85 = arith.cmpf oge, %55, %84 : vector<50x4xf32>
    %cst_66 = arith.constant 0.000000e+00 : f32
    %86 = vector.broadcast %cst_66 : f32 to vector<50x4xf32>
    %87 = arith.subf %86, %83 : vector<50x4xf32>
    %88 = arith.select %85, %83, %87 : vector<50x4xi1>, vector<50x4xf32>
    %cst_67 = arith.constant 1.000000e+00 : f32
    %89 = vector.broadcast %cst_67 : f32 to vector<50x4xf32>
    %90 = arith.addf %89, %88 : vector<50x4xf32>
    %91 = arith.mulf %53, %90 : vector<50x4xf32>
    %92 = vector.broadcast %3 : vector<50x1xf32> to vector<50x4xf32>
    %93 = arith.mulf %91, %92 : vector<50x4xf32>
    %c11_68 = arith.constant 11 : index
    %c0_69 = arith.constant 0 : index
    %94 = vector.load %arg15[%c11_68, %c0_69] : memref<72x4xf32, #tpu.memory_space<vmem>>, vector<50x4xf32>
    tpu.vector_store %arg15[%c11_68, %c0_69], %93 {strides = array<i32>} : memref<72x4xf32, #tpu.memory_space<vmem>>, vector<50x4xf32>,
    %c0_70 = arith.constant 0 : index
    %c0_71 = arith.constant 0 : index
    %95 = vector.load %arg15[%c0_70, %c0_71] : memref<72x4xf32, #tpu.memory_space<vmem>>, vector<50x4xf32>
    %c0_72 = arith.constant 0 : index
    %c0_73 = arith.constant 0 : index
    %c0_74 = arith.constant 0 : index
    %c0_75 = arith.constant 0 : index
    %96 = vector.load %arg7[%c0_72, %c0_73, %c0_74, %c0_75] : memref<1x9x4x8xf32, #tpu.memory_space<vmem>>, vector<1x1x4x8xf32>
    %97 = vector.shape_cast %96 : vector<1x1x4x8xf32> to vector<4x8xf32>
    %cst_76 = arith.constant dense<0.000000e+00> : vector<50x8xf32>
    %98 = tpu.matmul %95, %97, %cst_76 {dimension_numbers = #tpu.dot_dimension_numbers<[1], [0], [0], [1], [0, 0, 1, 1], [], []>} : vector<50x4xf32>, vector<4x8xf32>, vector<50x8xf32> -> vector<50x8xf32>
    %c1_77 = arith.constant 1 : index
    %c0_78 = arith.constant 0 : index
    %99 = vector.load %arg15[%c1_77, %c0_78] : memref<72x4xf32, #tpu.memory_space<vmem>>, vector<50x4xf32>
    %c0_79 = arith.constant 0 : index
    %c1_80 = arith.constant 1 : index
    %c0_81 = arith.constant 0 : index
    %c0_82 = arith.constant 0 : index
    %100 = vector.load %arg7[%c0_79, %c1_80, %c0_81, %c0_82] : memref<1x9x4x8xf32, #tpu.memory_space<vmem>>, vector<1x1x4x8xf32>
    %101 = vector.shape_cast %100 : vector<1x1x4x8xf32> to vector<4x8xf32>
    %cst_83 = arith.constant dense<0.000000e+00> : vector<50x8xf32>
    %102 = tpu.matmul %99, %101, %cst_83 {dimension_numbers = #tpu.dot_dimension_numbers<[1], [0], [0], [1], [0, 0, 1, 1], [], []>} : vector<50x4xf32>, vector<4x8xf32>, vector<50x8xf32> -> vector<50x8xf32>
    %103 = arith.addf %98, %102 : vector<50x8xf32>
    %c2_84 = arith.constant 2 : index
    %c0_85 = arith.constant 0 : index
    %104 = vector.load %arg15[%c2_84, %c0_85] : memref<72x4xf32, #tpu.memory_space<vmem>>, vector<50x4xf32>
    %c0_86 = arith.constant 0 : index
    %c2_87 = arith.constant 2 : index
    %c0_88 = arith.constant 0 : index
    %c0_89 = arith.constant 0 : index
    %105 = vector.load %arg7[%c0_86, %c2_87, %c0_88, %c0_89] : memref<1x9x4x8xf32, #tpu.memory_space<vmem>>, vector<1x1x4x8xf32>
    %106 = vector.shape_cast %105 : vector<1x1x4x8xf32> to vector<4x8xf32>
    %cst_90 = arith.constant dense<0.000000e+00> : vector<50x8xf32>
    %107 = tpu.matmul %104, %106, %cst_90 {dimension_numbers = #tpu.dot_dimension_numbers<[1], [0], [0], [1], [0, 0, 1, 1], [], []>} : vector<50x4xf32>, vector<4x8xf32>, vector<50x8xf32> -> vector<50x8xf32>
    %108 = arith.addf %103, %107 : vector<50x8xf32>
    %c10_91 = arith.constant 10 : index
    %c0_92 = arith.constant 0 : index
    %109 = vector.load %arg15[%c10_91, %c0_92] : memref<72x4xf32, #tpu.memory_space<vmem>>, vector<50x4xf32>
    %c0_93 = arith.constant 0 : index
    %c3_94 = arith.constant 3 : index
    %c0_95 = arith.constant 0 : index
    %c0_96 = arith.constant 0 : index
    %110 = vector.load %arg7[%c0_93, %c3_94, %c0_95, %c0_96] : memref<1x9x4x8xf32, #tpu.memory_space<vmem>>, vector<1x1x4x8xf32>
    %111 = vector.shape_cast %110 : vector<1x1x4x8xf32> to vector<4x8xf32>
    %cst_97 = arith.constant dense<0.000000e+00> : vector<50x8xf32>
    %112 = tpu.matmul %109, %111, %cst_97 {dimension_numbers = #tpu.dot_dimension_numbers<[1], [0], [0], [1], [0, 0, 1, 1], [], []>} : vector<50x4xf32>, vector<4x8xf32>, vector<50x8xf32> -> vector<50x8xf32>
    %113 = arith.addf %108, %112 : vector<50x8xf32>
    %c11_98 = arith.constant 11 : index
    %c0_99 = arith.constant 0 : index
    %114 = vector.load %arg15[%c11_98, %c0_99] : memref<72x4xf32, #tpu.memory_space<vmem>>, vector<50x4xf32>
    %c0_100 = arith.constant 0 : index
    %c4_101 = arith.constant 4 : index
    %c0_102 = arith.constant 0 : index
    %c0_103 = arith.constant 0 : index
    %115 = vector.load %arg7[%c0_100, %c4_101, %c0_102, %c0_103] : memref<1x9x4x8xf32, #tpu.memory_space<vmem>>, vector<1x1x4x8xf32>
    %116 = vector.shape_cast %115 : vector<1x1x4x8xf32> to vector<4x8xf32>
    %cst_104 = arith.constant dense<0.000000e+00> : vector<50x8xf32>
    %117 = tpu.matmul %114, %116, %cst_104 {dimension_numbers = #tpu.dot_dimension_numbers<[1], [0], [0], [1], [0, 0, 1, 1], [], []>} : vector<50x4xf32>, vector<4x8xf32>, vector<50x8xf32> -> vector<50x8xf32>
    %118 = arith.addf %113, %117 : vector<50x8xf32>
    %c12_105 = arith.constant 12 : index
    %c0_106 = arith.constant 0 : index
    %119 = vector.load %arg15[%c12_105, %c0_106] : memref<72x4xf32, #tpu.memory_space<vmem>>, vector<50x4xf32>
    %c0_107 = arith.constant 0 : index
    %c5_108 = arith.constant 5 : index
    %c0_109 = arith.constant 0 : index
    %c0_110 = arith.constant 0 : index
    %120 = vector.load %arg7[%c0_107, %c5_108, %c0_109, %c0_110] : memref<1x9x4x8xf32, #tpu.memory_space<vmem>>, vector<1x1x4x8xf32>
    %121 = vector.shape_cast %120 : vector<1x1x4x8xf32> to vector<4x8xf32>
    %cst_111 = arith.constant dense<0.000000e+00> : vector<50x8xf32>
    %122 = tpu.matmul %119, %121, %cst_111 {dimension_numbers = #tpu.dot_dimension_numbers<[1], [0], [0], [1], [0, 0, 1, 1], [], []>} : vector<50x4xf32>, vector<4x8xf32>, vector<50x8xf32> -> vector<50x8xf32>
    %123 = arith.addf %118, %122 : vector<50x8xf32>
    %c20_112 = arith.constant 20 : index
    %c0_113 = arith.constant 0 : index
    %124 = vector.load %arg15[%c20_112, %c0_113] : memref<72x4xf32, #tpu.memory_space<vmem>>, vector<50x4xf32>
    %c0_114 = arith.constant 0 : index
    %c6_115 = arith.constant 6 : index
    %c0_116 = arith.constant 0 : index
    %c0_117 = arith.constant 0 : index
    %125 = vector.load %arg7[%c0_114, %c6_115, %c0_116, %c0_117] : memref<1x9x4x8xf32, #tpu.memory_space<vmem>>, vector<1x1x4x8xf32>
    %126 = vector.shape_cast %125 : vector<1x1x4x8xf32> to vector<4x8xf32>
    %cst_118 = arith.constant dense<0.000000e+00> : vector<50x8xf32>
    %127 = tpu.matmul %124, %126, %cst_118 {dimension_numbers = #tpu.dot_dimension_numbers<[1], [0], [0], [1], [0, 0, 1, 1], [], []>} : vector<50x4xf32>, vector<4x8xf32>, vector<50x8xf32> -> vector<50x8xf32>
    %128 = arith.addf %123, %127 : vector<50x8xf32>
    %c21_119 = arith.constant 21 : index
    %c0_120 = arith.constant 0 : index
    %129 = vector.load %arg15[%c21_119, %c0_120] : memref<72x4xf32, #tpu.memory_space<vmem>>, vector<50x4xf32>
    %c0_121 = arith.constant 0 : index
    %c7_122 = arith.constant 7 : index
    %c0_123 = arith.constant 0 : index
    %c0_124 = arith.constant 0 : index
    %130 = vector.load %arg7[%c0_121, %c7_122, %c0_123, %c0_124] : memref<1x9x4x8xf32, #tpu.memory_space<vmem>>, vector<1x1x4x8xf32>
    %131 = vector.shape_cast %130 : vector<1x1x4x8xf32> to vector<4x8xf32>
    %cst_125 = arith.constant dense<0.000000e+00> : vector<50x8xf32>
    %132 = tpu.matmul %129, %131, %cst_125 {dimension_numbers = #tpu.dot_dimension_numbers<[1], [0], [0], [1], [0, 0, 1, 1], [], []>} : vector<50x4xf32>, vector<4x8xf32>, vector<50x8xf32> -> vector<50x8xf32>
    %133 = arith.addf %128, %132 : vector<50x8xf32>
    %c22_126 = arith.constant 22 : index
    %c0_127 = arith.constant 0 : index
    %134 = vector.load %arg15[%c22_126, %c0_127] : memref<72x4xf32, #tpu.memory_space<vmem>>, vector<50x4xf32>
    %c0_128 = arith.constant 0 : index
    %c8_129 = arith.constant 8 : index
    %c0_130 = arith.constant 0 : index
    %c0_131 = arith.constant 0 : index
    %135 = vector.load %arg7[%c0_128, %c8_129, %c0_130, %c0_131] : memref<1x9x4x8xf32, #tpu.memory_space<vmem>>, vector<1x1x4x8xf32>
    %136 = vector.shape_cast %135 : vector<1x1x4x8xf32> to vector<4x8xf32>
    %cst_132 = arith.constant dense<0.000000e+00> : vector<50x8xf32>
    %137 = tpu.matmul %134, %136, %cst_132 {dimension_numbers = #tpu.dot_dimension_numbers<[1], [0], [0], [1], [0, 0, 1, 1], [], []>} : vector<50x4xf32>, vector<4x8xf32>, vector<50x8xf32> -> vector<50x8xf32>
    %138 = arith.addf %133, %137 : vector<50x8xf32>
    %c0_133 = arith.constant 0 : index
    %c0_134 = arith.constant 0 : index
    %c0_135 = arith.constant 0 : index
    %139 = vector.load %arg8[%c0_133, %c0_134, %c0_135] : memref<1x1x8xf32, #tpu.memory_space<vmem>>, vector<1x1x8xf32>
    %140 = vector.shape_cast %139 : vector<1x1x8xf32> to vector<1x8xf32>
    %141 = vector.broadcast %140 : vector<1x8xf32> to vector<50x8xf32>
    %142 = arith.addf %138, %141 : vector<50x8xf32>
    %cst_136 = arith.constant 5.000000e-01 : f32
    %143 = vector.broadcast %cst_136 : f32 to vector<50x8xf32>
    %144 = arith.mulf %143, %142 : vector<50x8xf32>
    %cst_137 = arith.constant 0.707106769 : f32
    %145 = vector.broadcast %cst_137 : f32 to vector<50x8xf32>
    %146 = arith.mulf %142, %145 : vector<50x8xf32>
    %147 = math.absf %146 : vector<50x8xf32>
    %cst_138 = arith.constant 0.327591091 : f32
    %148 = vector.broadcast %cst_138 : f32 to vector<50x8xf32>
    %149 = arith.mulf %148, %147 : vector<50x8xf32>
    %cst_139 = arith.constant 1.000000e+00 : f32
    %150 = vector.broadcast %cst_139 : f32 to vector<50x8xf32>
    %151 = arith.addf %150, %149 : vector<50x8xf32>
    %cst_140 = arith.constant 1.000000e+00 : f32
    %152 = vector.broadcast %cst_140 : f32 to vector<50x8xf32>
    %153 = arith.divf %152, %151 : vector<50x8xf32>
    %cst_141 = arith.constant 1.06140542 : f32
    %154 = vector.broadcast %cst_141 : f32 to vector<50x8xf32>
    %155 = arith.mulf %154, %153 : vector<50x8xf32>
    %cst_142 = arith.constant -1.45315206 : f32
    %156 = vector.broadcast %cst_142 : f32 to vector<50x8xf32>
    %157 = arith.addf %155, %156 : vector<50x8xf32>
    %158 = arith.mulf %157, %153 : vector<50x8xf32>
    %cst_143 = arith.constant 1.42141378 : f32
    %159 = vector.broadcast %cst_143 : f32 to vector<50x8xf32>
    %160 = arith.addf %158, %159 : vector<50x8xf32>
    %161 = arith.mulf %160, %153 : vector<50x8xf32>
    %cst_144 = arith.constant -0.284496725 : f32
    %162 = vector.broadcast %cst_144 : f32 to vector<50x8xf32>
    %163 = arith.addf %161, %162 : vector<50x8xf32>
    %164 = arith.mulf %163, %153 : vector<50x8xf32>
    %cst_145 = arith.constant 0.254829586 : f32
    %165 = vector.broadcast %cst_145 : f32 to vector<50x8xf32>
    %166 = arith.addf %164, %165 : vector<50x8xf32>
    %167 = arith.mulf %166, %153 : vector<50x8xf32>
    %cst_146 = arith.constant 0.000000e+00 : f32
    %168 = vector.broadcast %cst_146 : f32 to vector<50x8xf32>
    %169 = arith.subf %168, %147 : vector<50x8xf32>
    %170 = arith.mulf %169, %147 : vector<50x8xf32>
    %171 = math.exp %170 : vector<50x8xf32>
    %172 = arith.mulf %167, %171 : vector<50x8xf32>
    %cst_147 = arith.constant 1.000000e+00 : f32
    %173 = vector.broadcast %cst_147 : f32 to vector<50x8xf32>
    %174 = arith.subf %173, %172 : vector<50x8xf32>
    %cst_148 = arith.constant 0.000000e+00 : f32
    %175 = vector.broadcast %cst_148 : f32 to vector<50x8xf32>
    %176 = arith.cmpf oge, %146, %175 : vector<50x8xf32>
    %cst_149 = arith.constant 0.000000e+00 : f32
    %177 = vector.broadcast %cst_149 : f32 to vector<50x8xf32>
    %178 = arith.subf %177, %174 : vector<50x8xf32>
    %179 = arith.select %176, %174, %178 : vector<50x8xi1>, vector<50x8xf32>
    %cst_150 = arith.constant 1.000000e+00 : f32
    %180 = vector.broadcast %cst_150 : f32 to vector<50x8xf32>
    %181 = arith.addf %180, %179 : vector<50x8xf32>
    %182 = arith.mulf %144, %181 : vector<50x8xf32>
    %c11_151 = arith.constant 11 : index
    %c0_152 = arith.constant 0 : index
    %183 = vector.load %arg14[%c11_151, %c0_152] : memref<72x8xf32, #tpu.memory_space<vmem>>, vector<50x8xf32>
    %c0_153 = arith.constant 0 : index
    %c0_154 = arith.constant 0 : index
    %c0_155 = arith.constant 0 : index
    %184 = vector.load %arg9[%c0_153, %c0_154, %c0_155] : memref<1x8x8xf32, #tpu.memory_space<vmem>>, vector<1x8x8xf32>
    %185 = vector.shape_cast %184 : vector<1x8x8xf32> to vector<8x8xf32>
    %cst_156 = arith.constant dense<0.000000e+00> : vector<50x8xf32>
    %186 = tpu.matmul %183, %185, %cst_156 {dimension_numbers = #tpu.dot_dimension_numbers<[1], [0], [0], [1], [0, 0, 1, 1], [], []>} : vector<50x8xf32>, vector<8x8xf32>, vector<50x8xf32> -> vector<50x8xf32>
    %c0_157 = arith.constant 0 : index
    %c0_158 = arith.constant 0 : index
    %c0_159 = arith.constant 0 : index
    %187 = vector.load %arg10[%c0_157, %c0_158, %c0_159] : memref<1x1x8xf32, #tpu.memory_space<vmem>>, vector<1x1x8xf32>
    %188 = vector.shape_cast %187 : vector<1x1x8xf32> to vector<1x8xf32>
    %189 = vector.broadcast %188 : vector<1x8xf32> to vector<50x8xf32>
    %190 = arith.addf %186, %189 : vector<50x8xf32>
    %191 = arith.addf %182, %190 : vector<50x8xf32>
    %192 = vector.broadcast %3 : vector<50x1xf32> to vector<50x8xf32>
    %193 = arith.mulf %191, %192 : vector<50x8xf32>
    %c11_160 = arith.constant 11 : index
    %c0_161 = arith.constant 0 : index
    %194 = vector.load %arg14[%c11_160, %c0_161] : memref<72x8xf32, #tpu.memory_space<vmem>>, vector<50x8xf32>
    tpu.vector_store %arg14[%c11_160, %c0_161], %193 {strides = array<i32>} : memref<72x8xf32, #tpu.memory_space<vmem>>, vector<50x8xf32>,
    %c1_i32 = arith.constant 1 : i32
    %195 = arith.cmpi eq, %arg0, %c1_i32 : i32
    %196 = arith.extui %195 : i1 to i32
    %c0_i32_162 = arith.constant 0 : i32
    %197 = arith.cmpi ne, %196, %c0_i32_162 : i32
    scf.if %197 {
      %c11_163 = arith.constant 11 : index
      %c0_164 = arith.constant 0 : index
      %198 = vector.load %arg14[%c11_163, %c0_164] : memref<72x8xf32, #tpu.memory_space<vmem>>, vector<50x8xf32>
      %199 = tpu.transpose %198, [1, 0] : vector<50x8xf32> -> vector<8x50xf32>
      %c0_165 = arith.constant 0 : index
      %c0_166 = arith.constant 0 : index
      %200 = vector.load %arg11[%c0_165, %c0_166] : memref<50x128xf32, #tpu.memory_space<vmem>>, vector<50x128xf32>
      %cst_167 = arith.constant dense<0.000000e+00> : vector<8x128xf32>
      %201 = tpu.matmul %199, %200, %cst_167 {dimension_numbers = #tpu.dot_dimension_numbers<[1], [0], [0], [1], [0, 0, 1, 1], [], []>} : vector<8x50xf32>, vector<50x128xf32>, vector<8x128xf32> -> vector<8x128xf32>
      %c0_168 = arith.constant 0 : index
      %c0_169 = arith.constant 0 : index
      %202 = vector.load %arg12[%c0_168, %c0_169] : memref<1x128xf32, #tpu.memory_space<vmem>>, vector<1x128xf32>
      %203 = vector.broadcast %202 : vector<1x128xf32> to vector<8x128xf32>
      %204 = arith.addf %201, %203 : vector<8x128xf32>
      %c0_170 = arith.constant 0 : index
      %c0_171 = arith.constant 0 : index
      %205 = vector.load %arg13[%c0_170, %c0_171] : memref<8x128xf32, #tpu.memory_space<vmem>>, vector<8x128xf32>
      tpu.vector_store %arg13[%c0_170, %c0_171], %204 {strides = array<i32>} : memref<8x128xf32, #tpu.memory_space<vmem>>, vector<8x128xf32>,
    } else {
    }
    return
  }
  func.func @transform_0(%arg0: i32) -> (i32, i32) {
    %c0_i32 = arith.constant 0 : i32
    %c0_i32_0 = arith.constant 0 : i32
    %c0_i32_1 = arith.constant 0 : i32
    return %c0_i32, %c0_i32_0 : i32, i32
  }
  func.func @transform_1(%arg0: i32) -> (i32, i32) {
    %c0_i32 = arith.constant 0 : i32
    %c0_i32_0 = arith.constant 0 : i32
    %c0_i32_1 = arith.constant 0 : i32
    return %c0_i32, %c0_i32_0 : i32, i32
  }
  func.func @transform_2(%arg0: i32) -> (i32, i32) {
    %c0_i32 = arith.constant 0 : i32
    %c0_i32_0 = arith.constant 0 : i32
    %c0_i32_1 = arith.constant 0 : i32
    return %c0_i32, %c0_i32_0 : i32, i32
  }
  func.func @transform_3(%arg0: i32) -> (i32, i32) {
    %c0_i32 = arith.constant 0 : i32
    %c0_i32_0 = arith.constant 0 : i32
    %c0_i32_1 = arith.constant 0 : i32
    return %c0_i32, %c0_i32_0 : i32, i32
  }
  func.func @transform_4(%arg0: i32) -> (i32, i32, i32, i32) {
    %c0_i32 = arith.constant 0 : i32
    %c0_i32_0 = arith.constant 0 : i32
    %c0_i32_1 = arith.constant 0 : i32
    %c0_i32_2 = arith.constant 0 : i32
    return %arg0, %c0_i32, %c0_i32_0, %c0_i32_1 : i32, i32, i32, i32
  }
  func.func @transform_5(%arg0: i32) -> (i32, i32, i32) {
    %c0_i32 = arith.constant 0 : i32
    %c0_i32_0 = arith.constant 0 : i32
    %c0_i32_1 = arith.constant 0 : i32
    return %arg0, %c0_i32, %c0_i32_0 : i32, i32, i32
  }
  func.func @transform_6(%arg0: i32) -> (i32, i32, i32, i32) {
    %c0_i32 = arith.constant 0 : i32
    %c0_i32_0 = arith.constant 0 : i32
    %c0_i32_1 = arith.constant 0 : i32
    %c0_i32_2 = arith.constant 0 : i32
    return %arg0, %c0_i32, %c0_i32_0, %c0_i32_1 : i32, i32, i32, i32
  }
  func.func @transform_7(%arg0: i32) -> (i32, i32, i32) {
    %c0_i32 = arith.constant 0 : i32
    %c0_i32_0 = arith.constant 0 : i32
    %c0_i32_1 = arith.constant 0 : i32
    return %arg0, %c0_i32, %c0_i32_0 : i32, i32, i32
  }
  func.func @transform_8(%arg0: i32) -> (i32, i32, i32) {
    %c0_i32 = arith.constant 0 : i32
    %c0_i32_0 = arith.constant 0 : i32
    %c0_i32_1 = arith.constant 0 : i32
    return %arg0, %c0_i32, %c0_i32_0 : i32, i32, i32
  }
  func.func @transform_9(%arg0: i32) -> (i32, i32, i32) {
    %c0_i32 = arith.constant 0 : i32
    %c0_i32_0 = arith.constant 0 : i32
    %c0_i32_1 = arith.constant 0 : i32
    return %arg0, %c0_i32, %c0_i32_0 : i32, i32, i32
  }
  func.func @transform_10(%arg0: i32) -> (i32, i32) {
    %c0_i32 = arith.constant 0 : i32
    %c0_i32_0 = arith.constant 0 : i32
    %c0_i32_1 = arith.constant 0 : i32
    return %c0_i32, %c0_i32_0 : i32, i32
  }
  func.func @transform_11(%arg0: i32) -> (i32, i32) {
    %c0_i32 = arith.constant 0 : i32
    %c0_i32_0 = arith.constant 0 : i32
    %c0_i32_1 = arith.constant 0 : i32
    return %c0_i32, %c0_i32_0 : i32, i32
  }
  func.func @transform_12(%arg0: i32) -> (i32, i32) {
    %c0_i32 = arith.constant 0 : i32
    %c0_i32_0 = arith.constant 0 : i32
    %c0_i32_1 = arith.constant 0 : i32
    return %c0_i32, %c0_i32_0 : i32, i32
  }
}

</mosaic_0001>

<llo_original>
// kernel: resmlp_forward.1
$region0: #{resmlp_forward.1}
  #allocation0 [shape = 'u32[]', space=smem, size = 0x4, offset = 0x4, fixed_abs, tag = 'smem constant byte address 0x4 - core index']
  #allocation1 [shape = 'u32[72,128]{1,0:T(1,128)}', space=vmem, size = 0x9000, scoped, tag = 'internal scratch']
  #allocation2 [shape = 'f32[72,8]{1,0:T(8,128)}', space=vmem, size = 0x9000, scoped, tag = 'scratch operand']
  #allocation3 [shape = 'f32[72,4]{1,0:T(8,128)}', space=vmem, size = 0x9000, scoped, tag = 'scratch operand']
  %s0 = inlined_call_operand.vmem [shape: f32[192,8], index: 0, kind: input, shape index: {}]
  %s1 = inlined_call_operand.vmem [shape: f32[50,192], index: 1, kind: input, shape index: {}]
  %s2 = inlined_call_operand.vmem [shape: f32[50,1], index: 2, kind: input, shape index: {}]
  %s3 = inlined_call_operand.vmem [shape: f32[50,1], index: 3, kind: input, shape index: {}]
  %s4 = inlined_call_operand.vmem [shape: f32[2,9,8,4], index: 4, kind: input, shape index: {}]
  %s5 = inlined_call_operand.vmem [shape: f32[2,1,4], index: 5, kind: input, shape index: {}]
  %s6 = inlined_call_operand.vmem [shape: f32[2,9,4,8], index: 6, kind: input, shape index: {}]
  %s7 = inlined_call_operand.vmem [shape: f32[2,1,8], index: 7, kind: input, shape index: {}]
  %s8 = inlined_call_operand.vmem [shape: f32[2,8,8], index: 8, kind: input, shape index: {}]
  %s9 = inlined_call_operand.vmem [shape: f32[2,1,8], index: 9, kind: input, shape index: {}]
  %s10 = inlined_call_operand.vmem [shape: f32[50,128], index: 10, kind: input, shape index: {}]
  %s11 = inlined_call_operand.vmem [shape: f32[1,128], index: 11, kind: input, shape index: {}]
  %s12 = inlined_call_operand.hbm [shape: f32[8,128], index: 12, kind: output, shape index: {}]
  %s13 = sld [smem:[#allocation0]]
  $region89: #{resmlp_forward.1} parent=0
    _
  %s15 = ssub.s32 1, %s13
  %s16 = scalar_select 0, %s15, %s13
  $region1: #{resmlp_forward.1} parent=0
    #allocation4 [shape = 'u8[4096]{0}', space=vmem, size = 0x1000, scoped, tag = 'output window, operand 0, single buffered']
    #allocation5 [shape = 's32[2]{0}', space=sflag, size = 0x8, scoped, tag = 'scoped memory for resmlp_forward.1']
    %17 = vsyncpa [#allocation5], 0
    loop: start=0, step=1, limit=4
    $region2: #{resmlp_forward.1} parent=1 // loop_pre_header
      _
    $region3: #{resmlp_forward.1} parent=1 // loop_header
      %s19 = sphi 0, %s23
      %p20 = scmp.ge.s32.totalorder %s19, 4
      %s27 = sphi 0, %s27
      %s29 = sphi 0, %s27
      %s30 = sphi 0, %s29
      %s44 = sphi 0, %s30
      %s48 = sphi 0, %s48
      %s50 = sphi 0, %s48
      %s51 = sphi 0, %s50
      %s65 = sphi 0, %s51
      %s69 = sphi 0, %s69
      %s71 = sphi 0, %s69
      %s72 = sphi 0, %s71
      %s86 = sphi 0, %s72
      %s90 = sphi 0, %s90
      %s92 = sphi 0, %s90
      %s93 = sphi 0, %s92
      %s107 = sphi 0, %s93
      %s113 = sphi 0, %s115
      %s116 = sphi 0, %s113
      %s117 = sphi 0, %s116
      %s133 = sphi 0, %s117
      %s139 = sphi 0, %s141
      %s142 = sphi 0, %s139
      %s143 = sphi 0, %s142
      %s159 = sphi 0, %s143
      %s165 = sphi 0, %s167
      %s168 = sphi 0, %s165
      %s169 = sphi 0, %s168
      %s185 = sphi 0, %s169
      %s191 = sphi 0, %s193
      %s194 = sphi 0, %s191
      %s195 = sphi 0, %s194
      %s211 = sphi 0, %s195
      %s217 = sphi 0, %s219
      %s220 = sphi 0, %s217
      %s221 = sphi 0, %s220
      %s237 = sphi 0, %s221
      %s243 = sphi 0, %s245
      %s246 = sphi 0, %s243
      %s247 = sphi 0, %s246
      %s263 = sphi 0, %s247
      %s267 = sphi 0, %s267
      %s269 = sphi 0, %s267
      %s270 = sphi 0, %s269
      %s284 = sphi 0, %s270
      %s288 = sphi 0, %s288
      %s290 = sphi 0, %s288
      %s291 = sphi 0, %s290
      %s305 = sphi 0, %s291
      %s309 = sphi 0, %s309
      %s311 = sphi 0, %s309
      %s312 = sphi 0, %s311
      %s326 = sphi 0, %s312
    $region4: #{resmlp_forward.1} parent=1 // loop_header_branch
      %22 = sbr.rel (%p20) target = $region8
    $region5: #{resmlp_forward.1} parent=1 // loop_body
      %s24 = ssub.s32 %s19, 1
      %s25 = ssub.s32 %s19, 2
      %s26 = sadd.s32 %s19, 1
      %s28 = sadd.s32 %s27, 1
      %p31 = scmp.eq.s32.totalorder %s19, 1
      %p32 = scmp.ne.s32.totalorder %s27, %s29
      %p33 = scmp.eq.s32.totalorder %s19, 0
      %p34 = por %p32, %p33
      %p35 = scmp.ne.s32.totalorder %s27, %s29
      %p36 = scmp.eq.s32.totalorder %s24, 1
      %p37 = por %p35, %p36
      %p38 = scmp.ne.s32.totalorder %s29, %s30
      %p39 = scmp.eq.s32.totalorder %s24, 0
      %p40 = por %p38, %p39
      %p41 = scmp.ne.s32.totalorder %s29, %s30
      %p42 = scmp.eq.s32.totalorder %s25, 1
      %p43 = por %p41, %p42
      %p45 = scmp.ne.s32.totalorder %s30, %s44
      %p46 = scmp.eq.s32.totalorder %s25, 0
      %p47 = por %p45, %p46
      %s49 = sadd.s32 %s48, 1
      %p52 = scmp.eq.s32.totalorder %s19, 1
      %p53 = scmp.ne.s32.totalorder %s48, %s50
      %p54 = scmp.eq.s32.totalorder %s19, 0
      %p55 = por %p53, %p54
      %p56 = scmp.ne.s32.totalorder %s48, %s50
      %p57 = scmp.eq.s32.totalorder %s24, 1
      %p58 = por %p56, %p57
      %p59 = scmp.ne.s32.totalorder %s50, %s51
      %p60 = scmp.eq.s32.totalorder %s24, 0
      %p61 = por %p59, %p60
      %p62 = scmp.ne.s32.totalorder %s50, %s51
      %p63 = scmp.eq.s32.totalorder %s25, 1
      %p64 = por %p62, %p63
      %p66 = scmp.ne.s32.totalorder %s51, %s65
      %p67 = scmp.eq.s32.totalorder %s25, 0
      %p68 = por %p66, %p67
      %s70 = sadd.s32 %s69, 1
      %p73 = scmp.eq.s32.totalorder %s19, 1
      %p74 = scmp.ne.s32.totalorder %s69, %s71
      %p75 = scmp.eq.s32.totalorder %s19, 0
      %p76 = por %p74, %p75
      %p77 = scmp.ne.s32.totalorder %s69, %s71
      %p78 = scmp.eq.s32.totalorder %s24, 1
      %p79 = por %p77, %p78
      %p80 = scmp.ne.s32.totalorder %s71, %s72
      %p81 = scmp.eq.s32.totalorder %s24, 0
      %p82 = por %p80, %p81
      %p83 = scmp.ne.s32.totalorder %s71, %s72
      %p84 = scmp.eq.s32.totalorder %s25, 1
      %p85 = por %p83, %p84
      %p87 = scmp.ne.s32.totalorder %s72, %s86
      %p88 = scmp.eq.s32.totalorder %s25, 0
      %p89 = por %p87, %p88
      %s91 = sadd.s32 %s90, 1
      %p94 = scmp.eq.s32.totalorder %s19, 1
      %p95 = scmp.ne.s32.totalorder %s90, %s92
      %p96 = scmp.eq.s32.totalorder %s19, 0
      %p97 = por %p95, %p96
      %p98 = scmp.ne.s32.totalorder %s90, %s92
      %p99 = scmp.eq.s32.totalorder %s24, 1
      %p100 = por %p98, %p99
      %p101 = scmp.ne.s32.totalorder %s92, %s93
      %p102 = scmp.eq.s32.totalorder %s24, 0
      %p103 = por %p101, %p102
      %p104 = scmp.ne.s32.totalorder %s92, %s93
      %p105 = scmp.eq.s32.totalorder %s25, 1
      %p106 = por %p104, %p105
      %p108 = scmp.ne.s32.totalorder %s93, %s107
      %p109 = scmp.eq.s32.totalorder %s25, 0
      %p110 = por %p108, %p109
      %s111 = ssub.s32 %s19, %s26
      %p112 = scmp.eq.s32.totalorder %s111, 0
      %s114 = sadd.s32 %s113, 1
      %s115 = scalar_select %p112, %s113, %s114
      %p118 = pneg %p112
      %p119 = scmp.eq.s32.totalorder %s19, 1
      %p120 = por %p118, %p119
      %p121 = scmp.ne.s32.totalorder %s113, %s116
      %p122 = scmp.eq.s32.totalorder %s19, 0
      %p123 = por %p121, %p122
      %p124 = scmp.ne.s32.totalorder %s113, %s116
      %p125 = scmp.eq.s32.totalorder %s24, 1
      %p126 = por %p124, %p125
      %p127 = scmp.ne.s32.totalorder %s116, %s117
      %p128 = scmp.eq.s32.totalorder %s24, 0
      %p129 = por %p127, %p128
      %p130 = scmp.ne.s32.totalorder %s116, %s117
      %p131 = scmp.eq.s32.totalorder %s25, 1
      %p132 = por %p130, %p131
      %p134 = scmp.ne.s32.totalorder %s117, %s133
      %p135 = scmp.eq.s32.totalorder %s25, 0
      %p136 = por %p134, %p135
      %s137 = ssub.s32 %s19, %s26
      %p138 = scmp.eq.s32.totalorder %s137, 0
      %s140 = sadd.s32 %s139, 1
      %s141 = scalar_select %p138, %s139, %s140
      %p144 = pneg %p138
      %p145 = scmp.eq.s32.totalorder %s19, 1
      %p146 = por %p144, %p145
      %p147 = scmp.ne.s32.totalorder %s139, %s142
      %p148 = scmp.eq.s32.totalorder %s19, 0
      %p149 = por %p147, %p148
      %p150 = scmp.ne.s32.totalorder %s139, %s142
      %p151 = scmp.eq.s32.totalorder %s24, 1
      %p152 = por %p150, %p151
      %p153 = scmp.ne.s32.totalorder %s142, %s143
      %p154 = scmp.eq.s32.totalorder %s24, 0
      %p155 = por %p153, %p154
      %p156 = scmp.ne.s32.totalorder %s142, %s143
      %p157 = scmp.eq.s32.totalorder %s25, 1
      %p158 = por %p156, %p157
      %p160 = scmp.ne.s32.totalorder %s143, %s159
      %p161 = scmp.eq.s32.totalorder %s25, 0
      %p162 = por %p160, %p161
      %s163 = ssub.s32 %s19, %s26
      %p164 = scmp.eq.s32.totalorder %s163, 0
      %s166 = sadd.s32 %s165, 1
      %s167 = scalar_select %p164, %s165, %s166
      %p170 = pneg %p164
      %p171 = scmp.eq.s32.totalorder %s19, 1
      %p172 = por %p170, %p171
      %p173 = scmp.ne.s32.totalorder %s165, %s168
      %p174 = scmp.eq.s32.totalorder %s19, 0
      %p175 = por %p173, %p174
      %p176 = scmp.ne.s32.totalorder %s165, %s168
      %p177 = scmp.eq.s32.totalorder %s24, 1
      %p178 = por %p176, %p177
      %p179 = scmp.ne.s32.totalorder %s168, %s169
      %p180 = scmp.eq.s32.totalorder %s24, 0
      %p181 = por %p179, %p180
      %p182 = scmp.ne.s32.totalorder %s168, %s169
      %p183 = scmp.eq.s32.totalorder %s25, 1
      %p184 = por %p182, %p183
      %p186 = scmp.ne.s32.totalorder %s169, %s185
      %p187 = scmp.eq.s32.totalorder %s25, 0
      %p188 = por %p186, %p187
      %s189 = ssub.s32 %s19, %s26
      %p190 = scmp.eq.s32.totalorder %s189, 0
      %s192 = sadd.s32 %s191, 1
      %s193 = scalar_select %p190, %s191, %s192
      %p196 = pneg %p190
      %p197 = scmp.eq.s32.totalorder %s19, 1
      %p198 = por %p196, %p197
      %p199 = scmp.ne.s32.totalorder %s191, %s194
      %p200 = scmp.eq.s32.totalorder %s19, 0
      %p201 = por %p199, %p200
      %p202 = scmp.ne.s32.totalorder %s191, %s194
      %p203 = scmp.eq.s32.totalorder %s24, 1
      %p204 = por %p202, %p203
      %p205 = scmp.ne.s32.totalorder %s194, %s195
      %p206 = scmp.eq.s32.totalorder %s24, 0
      %p207 = por %p205, %p206
      %p208 = scmp.ne.s32.totalorder %s194, %s195
      %p209 = scmp.eq.s32.totalorder %s25, 1
      %p210 = por %p208, %p209
      %p212 = scmp.ne.s32.totalorder %s195, %s211
      %p213 = scmp.eq.s32.totalorder %s25, 0
      %p214 = por %p212, %p213
      %s215 = ssub.s32 %s19, %s26
      %p216 = scmp.eq.s32.totalorder %s215, 0
      %s218 = sadd.s32 %s217, 1
      %s219 = scalar_select %p216, %s217, %s218
      %p222 = pneg %p216
      %p223 = scmp.eq.s32.totalorder %s19, 1
      %p224 = por %p222, %p223
      %p225 = scmp.ne.s32.totalorder %s217, %s220
      %p226 = scmp.eq.s32.totalorder %s19, 0
      %p227 = por %p225, %p226
      %p228 = scmp.ne.s32.totalorder %s217, %s220
      %p229 = scmp.eq.s32.totalorder %s24, 1
      %p230 = por %p228, %p229
      %p231 = scmp.ne.s32.totalorder %s220, %s221
      %p232 = scmp.eq.s32.totalorder %s24, 0
      %p233 = por %p231, %p232
      %p234 = scmp.ne.s32.totalorder %s220, %s221
      %p235 = scmp.eq.s32.totalorder %s25, 1
      %p236 = por %p234, %p235
      %p238 = scmp.ne.s32.totalorder %s221, %s237
      %p239 = scmp.eq.s32.totalorder %s25, 0
      %p240 = por %p238, %p239
      %s241 = ssub.s32 %s19, %s26
      %p242 = scmp.eq.s32.totalorder %s241, 0
      %s244 = sadd.s32 %s243, 1
      %s245 = scalar_select %p242, %s243, %s244
      %p248 = pneg %p242
      %p249 = scmp.eq.s32.totalorder %s19, 1
      %p250 = por %p248, %p249
      %p251 = scmp.ne.s32.totalorder %s243, %s246
      %p252 = scmp.eq.s32.totalorder %s19, 0
      %p253 = por %p251, %p252
      %p254 = scmp.ne.s32.totalorder %s243, %s246
      %p255 = scmp.eq.s32.totalorder %s24, 1
      %p256 = por %p254, %p255
      %p257 = scmp.ne.s32.totalorder %s246, %s247
      %p258 = scmp.eq.s32.totalorder %s24, 0
      %p259 = por %p257, %p258
      %p260 = scmp.ne.s32.totalorder %s246, %s247
      %p261 = scmp.eq.s32.totalorder %s25, 1
      %p262 = por %p260, %p261
      %p264 = scmp.ne.s32.totalorder %s247, %s263
      %p265 = scmp.eq.s32.totalorder %s25, 0
      %p266 = por %p264, %p265
      %s268 = sadd.s32 %s267, 1
      %p271 = scmp.eq.s32.totalorder %s19, 1
      %p272 = scmp.ne.s32.totalorder %s267, %s269
      %p273 = scmp.eq.s32.totalorder %s19, 0
      %p274 = por %p272, %p273
      %p275 = scmp.ne.s32.totalorder %s267, %s269
      %p276 = scmp.eq.s32.totalorder %s24, 1
      %p277 = por %p275, %p276
      %p278 = scmp.ne.s32.totalorder %s269, %s270
      %p279 = scmp.eq.s32.totalorder %s24, 0
      %p280 = por %p278, %p279
      %p281 = scmp.ne.s32.totalorder %s269, %s270
      %p282 = scmp.eq.s32.totalorder %s25, 1
      %p283 = por %p281, %p282
      %p285 = scmp.ne.s32.totalorder %s270, %s284
      %p286 = scmp.eq.s32.totalorder %s25, 0
      %p287 = por %p285, %p286
      %s289 = sadd.s32 %s288, 1
      %p292 = scmp.eq.s32.totalorder %s19, 1
      %p293 = scmp.ne.s32.totalorder %s288, %s290
      %p294 = scmp.eq.s32.totalorder %s19, 0
      %p295 = por %p293, %p294
      %p296 = scmp.ne.s32.totalorder %s288, %s290
      %p297 = scmp.eq.s32.totalorder %s24, 1
      %p298 = por %p296, %p297
      %p299 = scmp.ne.s32.totalorder %s290, %s291
      %p300 = scmp.eq.s32.totalorder %s24, 0
      %p301 = por %p299, %p300
      %p302 = scmp.ne.s32.totalorder %s290, %s291
      %p303 = scmp.eq.s32.totalorder %s25, 1
      %p304 = por %p302, %p303
      %p306 = scmp.ne.s32.totalorder %s291, %s305
      %p307 = scmp.eq.s32.totalorder %s25, 0
      %p308 = por %p306, %p307
      %s310 = sadd.s32 %s309, 1
      %p313 = scmp.eq.s32.totalorder %s19, 1
      %p314 = scmp.ne.s32.totalorder %s309, %s311
      %p315 = scmp.eq.s32.totalorder %s19, 0
      %p316 = por %p314, %p315
      %p317 = scmp.ne.s32.totalorder %s309, %s311
      %p318 = scmp.eq.s32.totalorder %s24, 1
      %p319 = por %p317, %p318
      %p320 = scmp.ne.s32.totalorder %s311, %s312
      %p321 = scmp.eq.s32.totalorder %s24, 0
      %p322 = por %p320, %p321
      %p323 = scmp.ne.s32.totalorder %s311, %s312
      %p324 = scmp.eq.s32.totalorder %s25, 1
      %p325 = por %p323, %p324
      %p327 = scmp.ne.s32.totalorder %s312, %s326
      %p328 = scmp.eq.s32.totalorder %s25, 0
      %p329 = por %p327, %p328
      %p330 = scmp.le.s32.totalorder 1, %s19
      %p331 = scmp.lt.s32.totalorder %s19, 3
      %p332 = pnand %p330, %p331
      %p333 = pneg %p332
      // Predicated region
      $region9: #{resmlp_forward.1} parent=5 // pred_check
        _
      $region10: #{resmlp_forward.1} parent=5 // pred_check_branch
        %335 = sbr.rel (%p332) target = $region12
      $region11: #{resmlp_forward.1} parent=5 // pred_region
        %s336 = ssub.s32 %s19, 1
        // Predicated region
        $region13: #{resmlp_forward.1} parent=11 // pred_check
          %p337 = pneg %p40
        $region14: #{resmlp_forward.1} parent=11 // pred_check_branch
          %339 = sbr.rel (%p337) target = $region16
        $region15: #{resmlp_forward.1} parent=11 // pred_region
          _
        $region16: #{resmlp_forward.1} parent=11 // pred_fallthru
          _
        // Predicated region
        $region17: #{resmlp_forward.1} parent=11 // pred_check
          %p340 = pneg %p61
        $region18: #{resmlp_forward.1} parent=11 // pred_check_branch
          %342 = sbr.rel (%p340) target = $region20
        $region19: #{resmlp_forward.1} parent=11 // pred_region
          _
        $region20: #{resmlp_forward.1} parent=11 // pred_fallthru
          _
        // Predicated region
        $region21: #{resmlp_forward.1} parent=11 // pred_check
          %p343 = pneg %p82
        $region22: #{resmlp_forward.1} parent=11 // pred_check_branch
          %345 = sbr.rel (%p343) target = $region24
        $region23: #{resmlp_forward.1} parent=11 // pred_region
          _
        $region24: #{resmlp_forward.1} parent=11 // pred_fallthru
          _
        // Predicated region
        $region25: #{resmlp_forward.1} parent=11 // pred_check
          %p346 = pneg %p103
        $region26: #{resmlp_forward.1} parent=11 // pred_check_branch
          %348 = sbr.rel (%p346) target = $region28
        $region27: #{resmlp_forward.1} parent=11 // pred_region
          _
        $region28: #{resmlp_forward.1} parent=11 // pred_fallthru
          _
        // Predicated region
        $region29: #{resmlp_forward.1} parent=11 // pred_check
          %p349 = pneg %p280
        $region30: #{resmlp_forward.1} parent=11 // pred_check_branch
          %351 = sbr.rel (%p349) target = $region32
        $region31: #{resmlp_forward.1} parent=11 // pred_region
          _
        $region32: #{resmlp_forward.1} parent=11 // pred_fallthru
          _
        // Predicated region
        $region33: #{resmlp_forward.1} parent=11 // pred_check
          %p352 = pneg %p301
        $region34: #{resmlp_forward.1} parent=11 // pred_check_branch
          %354 = sbr.rel (%p352) target = $region36
        $region35: #{resmlp_forward.1} parent=11 // pred_region
          _
        $region36: #{resmlp_forward.1} parent=11 // pred_fallthru
          _
      $region12: #{resmlp_forward.1} parent=5 // pred_fallthru
        _
      %p355 = scmp.lt.s32.totalorder %s19, 2
      // Predicated region
      $region37: #{resmlp_forward.1} parent=5 // pred_check
        %p356 = pneg %p355
      $region38: #{resmlp_forward.1} parent=5 // pred_check_branch
        %358 = sbr.rel (%p356) target = $region40
      $region39: #{resmlp_forward.1} parent=5 // pred_region
        // Predicated region
        $region41: #{resmlp_forward.1} parent=39 // pred_check
          %p359 = pneg %p123
        $region42: #{resmlp_forward.1} parent=39 // pred_check_branch
          %361 = sbr.rel (%p359) target = $region44
        $region43: #{resmlp_forward.1} parent=39 // pred_region
          %p362 = scmp.lt.s32.totalorder %s19, 1
          %s363 = scalar_select %p362, %s19, 1
          %s364 = smul.addr %s363, 9
          %s365 = smul.addr %s364, 8
          %s366 = scalar_lea.vmem %s4, %s365
        $region44: #{resmlp_forward.1} parent=39 // pred_fallthru
          _
        // Predicated region
        $region45: #{resmlp_forward.1} parent=39 // pred_check
          %p367 = pneg %p149
        $region46: #{resmlp_forward.1} parent=39 // pred_check_branch
          %369 = sbr.rel (%p367) target = $region48
        $region47: #{resmlp_forward.1} parent=39 // pred_region
          %p370 = scmp.lt.s32.totalorder %s19, 1
          %s371 = scalar_select %p370, %s19, 1
          %s372 = scalar_lea.vmem %s5, %s371
        $region48: #{resmlp_forward.1} parent=39 // pred_fallthru
          _
        // Predicated region
        $region49: #{resmlp_forward.1} parent=39 // pred_check
          %p373 = pneg %p175
        $region50: #{resmlp_forward.1} parent=39 // pred_check_branch
          %375 = sbr.rel (%p373) target = $region52
        $region51: #{resmlp_forward.1} parent=39 // pred_region
          %p376 = scmp.lt.s32.totalorder %s19, 1
          %s377 = scalar_select %p376, %s19, 1
          %s378 = smul.addr %s377, 9
          %s379 = smul.addr %s378, 4
          %s380 = scalar_lea.vmem %s6, %s379
        $region52: #{resmlp_forward.1} parent=39 // pred_fallthru
          _
        // Predicated region
        $region53: #{resmlp_forward.1} parent=39 // pred_check
          %p381 = pneg %p201
        $region54: #{resmlp_forward.1} parent=39 // pred_check_branch
          %383 = sbr.rel (%p381) target = $region56
        $region55: #{resmlp_forward.1} parent=39 // pred_region
          %p384 = scmp.lt.s32.totalorder %s19, 1
          %s385 = scalar_select %p384, %s19, 1
          %s386 = scalar_lea.vmem %s7, %s385
        $region56: #{resmlp_forward.1} parent=39 // pred_fallthru
          _
        // Predicated region
        $region57: #{resmlp_forward.1} parent=39 // pred_check
          %p387 = pneg %p227
        $region58: #{resmlp_forward.1} parent=39 // pred_check_branch
          %389 = sbr.rel (%p387) target = $region60
        $region59: #{resmlp_forward.1} parent=39 // pred_region
          %p390 = scmp.lt.s32.totalorder %s19, 1
          %s391 = scalar_select %p390, %s19, 1
          %s392 = smul.addr %s391, 8
          %s393 = scalar_lea.vmem %s8, %s392
        $region60: #{resmlp_forward.1} parent=39 // pred_fallthru
          _
        // Predicated region
        $region61: #{resmlp_forward.1} parent=39 // pred_check
          %p394 = pneg %p253
        $region62: #{resmlp_forward.1} parent=39 // pred_check_branch
          %396 = sbr.rel (%p394) target = $region64
        $region63: #{resmlp_forward.1} parent=39 // pred_region
          %p397 = scmp.lt.s32.totalorder %s19, 1
          %s398 = scalar_select %p397, %s19, 1
          %s399 = scalar_lea.vmem %s9, %s398
        $region64: #{resmlp_forward.1} parent=39 // pred_fallthru
          _
      $region40: #{resmlp_forward.1} parent=5 // pred_fallthru
        _
      %p400 = scmp.le.s32.totalorder 1, %s19
      %p401 = scmp.lt.s32.totalorder %s19, 3
      %p402 = pnand %p400, %p401
      %p403 = pneg %p402
      // Predicated region
      $region65: #{resmlp_forward.1} parent=5 // pred_check
        _
      $region66: #{resmlp_forward.1} parent=5 // pred_check_branch
        %405 = sbr.rel (%p402) target = $region68
      $region67: #{resmlp_forward.1} parent=5 // pred_region
        %s406 = ssub.s32 %s19, 1
        %p407 = pneg %p40
        %p408 = pneg %p37
        %p409 = pneg %p61
        %p410 = pneg %p58
        %p411 = pneg %p82
        %p412 = pneg %p79
        %p413 = pneg %p103
        %p414 = pneg %p100
        %p415 = scmp.lt.s32.totalorder %s24, 1
        %s416 = scalar_select %p415, %s24, 1
        %s417 = smul.addr %s416, 9
        %s418 = smul.addr %s417, 8
        %s419 = scalar_lea.vmem %s4, %s418
        %p420 = pneg %p129
        %p421 = pneg %p126
        %p422 = scmp.lt.s32.totalorder %s24, 1
        %s423 = scalar_select %p422, %s24, 1
        %s424 = scalar_lea.vmem %s5, %s423
        %p425 = pneg %p155
        %p426 = pneg %p152
        %p427 = scmp.lt.s32.totalorder %s24, 1
        %s428 = scalar_select %p427, %s24, 1
        %s429 = smul.addr %s428, 9
        %s430 = smul.addr %s429, 4
        %s431 = scalar_lea.vmem %s6, %s430
        %p432 = pneg %p181
        %p433 = pneg %p178
        %p434 = scmp.lt.s32.totalorder %s24, 1
        %s435 = scalar_select %p434, %s24, 1
        %s436 = scalar_lea.vmem %s7, %s435
        %p437 = pneg %p207
        %p438 = pneg %p204
        %p439 = scmp.lt.s32.totalorder %s24, 1
        %s440 = scalar_select %p439, %s24, 1
        %s441 = smul.addr %s440, 8
        %s442 = scalar_lea.vmem %s8, %s441
        %p443 = pneg %p233
        %p444 = pneg %p230
        %p445 = scmp.lt.s32.totalorder %s24, 1
        %s446 = scalar_select %p445, %s24, 1
        %s447 = scalar_lea.vmem %s9, %s446
        %p448 = pneg %p259
        %p449 = pneg %p256
        %p450 = pneg %p280
        %p451 = pneg %p277
        %p452 = pneg %p301
        %p453 = pneg %p298
        %p454 = pneg %p322
        %p455 = pneg %p319
        %p456 = scmp.lt.s32.totalorder %s24, 1
        %s457 = scalar_select %p456, %s24, 1
        %s458 = smul.addr %s457, 9
        %s459 = smul.addr %s458, 8
        %s460 = scalar_lea.vmem %s4, %s459
        %p461 = scmp.lt.s32.totalorder %s24, 1
        %s462 = scalar_select %p461, %s24, 1
        %s463 = scalar_lea.vmem %s5, %s462
        %p464 = scmp.lt.s32.totalorder %s24, 1
        %s465 = scalar_select %p464, %s24, 1
        %s466 = smul.addr %s465, 9
        %s467 = smul.addr %s466, 4
        %s468 = scalar_lea.vmem %s6, %s467
        %p469 = scmp.lt.s32.totalorder %s24, 1
        %s470 = scalar_select %p469, %s24, 1
        %s471 = scalar_lea.vmem %s7, %s470
        %p472 = scmp.lt.s32.totalorder %s24, 1
        %s473 = scalar_select %p472, %s24, 1
        %s474 = smul.addr %s473, 8
        %s475 = scalar_lea.vmem %s8, %s474
        %p476 = scmp.lt.s32.totalorder %s24, 1
        %s477 = scalar_select %p476, %s24, 1
        %s478 = scalar_lea.vmem %s9, %s477
        %p479 = scmp.eq.s32.totalorder %s24, 0
        // Predicated region
        $region69: #{resmlp_forward.1} parent=67 // pred_check
          %p480 = pneg %p479
        $region70: #{resmlp_forward.1} parent=67 // pred_check_branch
          %482 = sbr.rel (%p480) target = $region72
        $region71: #{resmlp_forward.1} parent=67 // pred_region
          %vm483 = vcmask 64512
          %484 = vst.msk [vmem:[#allocation2] sm:$0xff] %vm483, 0.0
          %485 = vst.msk [vmem:[#allocation2 + $0x8] sm:$0xff] %vm483, 0.0
          %486 = vst.msk [vmem:[#allocation2 + $0x10] sm:$0xff] %vm483, 0.0
          %487 = vst.msk [vmem:[#allocation2 + $0x18] sm:$0xff] %vm483, 0.0
          %488 = vst.msk [vmem:[#allocation2 + $0x20] sm:$0xff] %vm483, 0.0
          %489 = vst.msk [vmem:[#allocation2 + $0x28] sm:$0xff] %vm483, 0.0
          %490 = vst.msk [vmem:[#allocation2 + $0x30] sm:$0xff] %vm483, 0.0
          %491 = vst.msk [vmem:[#allocation2 + $0x38] sm:$0xff] %vm483, 0.0
          %492 = vst.msk [vmem:[#allocation2 + $0x40] sm:$0xff] %vm483, 0.0
          %vm493 = vcmask 31744
          %494 = vst.msk [vmem:[#allocation3] sm:$0xff] %vm493, 0.0
          %495 = vst.msk [vmem:[#allocation3 + $0x8] sm:$0xff] %vm493, 0.0
          %496 = vst.msk [vmem:[#allocation3 + $0x10] sm:$0xff] %vm493, 0.0
          %497 = vst.msk [vmem:[#allocation3 + $0x18] sm:$0xff] %vm493, 0.0
          %498 = vst.msk [vmem:[#allocation3 + $0x20] sm:$0xff] %vm493, 0.0
          %499 = vst.msk [vmem:[#allocation3 + $0x28] sm:$0xff] %vm493, 0.0
          %500 = vst.msk [vmem:[#allocation3 + $0x30] sm:$0xff] %vm493, 0.0
          %501 = vst.msk [vmem:[#allocation3 + $0x38] sm:$0xff] %vm493, 0.0
          %502 = vst.msk [vmem:[#allocation3 + $0x40] sm:$0xff] %vm493, 0.0
          %v503 = vld [vmem:[%s1] sm:$0xff]
          %v504 = vld [vmem:[%s1 + $0x8] sm:$0xff]
          %v505 = vld [vmem:[%s1 + $0x10] sm:$0xff]
          %v506 = vld [vmem:[%s1 + $0x18] sm:$0xff]
          %v507 = vld [vmem:[%s1 + $0x20] sm:$0xff]
          %v508 = vld [vmem:[%s1 + $0x28] sm:$0xff]
          %v509 = vld [vmem:[%s1 + $0x30] sm:$0xff]
          %v510 = vld [vmem:[%s1 + $0x38] sm:$0xff]
          %v511 = vld [vmem:[%s1 + $0x40] sm:$0xff]
          %v512 = vld [vmem:[%s1 + $0x48] sm:$0xff]
          %v513 = vld [vmem:[%s1 + $0x50] sm:$0xff]
          %v514 = vld [vmem:[%s1 + $0x58] sm:$0xff]
          %v515 = vld [vmem:[%s1 + $0x60] sm:$0x3]
          %v516 = vld [vmem:[%s1 + $0x68] sm:$0x3]
          %v517 = vld [vmem:[%s0] sm:$0xff]
          %v518 = vld [vmem:[%s0 + $0x8] sm:$0xff]
          %v519 = vld [vmem:[%s0 + $0x10] sm:$0xff]
          %v520 = vld [vmem:[%s0 + $0x18] sm:$0xff]
          %v521 = vld [vmem:[%s0 + $0x20] sm:$0xff]
          %v522 = vld [vmem:[%s0 + $0x28] sm:$0xff]
          %v523 = vld [vmem:[%s0 + $0x30] sm:$0xff]
          %v524 = vld [vmem:[%s0 + $0x38] sm:$0xff]
          %v525 = vld [vmem:[%s0 + $0x40] sm:$0xff]
          %v526 = vld [vmem:[%s0 + $0x48] sm:$0xff]
          %v527 = vld [vmem:[%s0 + $0x50] sm:$0xff]
          %v528 = vld [vmem:[%s0 + $0x58] sm:$0xff]
          %v529 = vld [vmem:[%s0 + $0x60] sm:$0xff]
          %v530 = vld [vmem:[%s0 + $0x68] sm:$0xff]
          %v531 = vld [vmem:[%s0 + $0x70] sm:$0xff]
          %v532 = vld [vmem:[%s0 + $0x78] sm:$0xff]
          %v533 = vld [vmem:[%s0 + $0x80] sm:$0xff]
          %v534 = vld [vmem:[%s0 + $0x88] sm:$0xff]
          %v535 = vld [vmem:[%s0 + $0x90] sm:$0xff]
          %v536 = vld [vmem:[%s0 + $0x98] sm:$0xff]
          %v537 = vld [vmem:[%s0 + $0xa0] sm:$0xff]
          %v538 = vld [vmem:[%s0 + $0xa8] sm:$0xff]
          %v539 = vld [vmem:[%s0 + $0xb0] sm:$0xff]
          %v540 = vld [vmem:[%s0 + $0xb8] sm:$0xff]
          %v541 = vld [vmem:[%s2] sm:$0xff]
          %v542 = vld [vmem:[%s2 + $0x8] sm:$0xff]
          %v543 = vld [vmem:[%s2 + $0x10] sm:$0xff]
          %v544 = vld [vmem:[%s2 + $0x18] sm:$0xff]
          %v545 = vld [vmem:[%s2 + $0x20] sm:$0xff]
          %v546 = vld [vmem:[%s2 + $0x28] sm:$0xff]
          %v547 = vld [vmem:[%s2 + $0x30] sm:$0x3]
          %549 = vset.pattern.permute.xlu0 0
          %550 = vperm.xlu0 %549, %v541
          %v551 = vpop.permute.xlu0 %550
          %554 = vset.pattern.permute.xlu0 0
          %555 = vperm.xlu0 %554, %v542
          %v556 = vpop.permute.xlu0 %555
          %559 = vset.pattern.permute.xlu0 0
          %560 = vperm.xlu0 %559, %v543
          %v561 = vpop.permute.xlu0 %560
          %564 = vset.pattern.permute.xlu0 0
          %565 = vperm.xlu0 %564, %v544
          %v566 = vpop.permute.xlu0 %565
          %569 = vset.pattern.permute.xlu0 0
          %570 = vperm.xlu0 %569, %v545
          %v571 = vpop.permute.xlu0 %570
          %574 = vset.pattern.permute.xlu0 0
          %575 = vperm.xlu0 %574, %v546
          %v576 = vpop.permute.xlu0 %575
          %579 = vset.pattern.permute.xlu0 0
          %580 = vperm.xlu0 %579, %v547
          %v581 = vpop.permute.xlu0 %580
          %vm583 = vcmask 523264
          %v585 = vsel %vm583, %v504, 0
          %v588 = vsel %vm583, %v506, 0
          %v591 = vsel %vm583, %v508, 0
          %v594 = vsel %vm583, %v510, 0
          %v597 = vsel %vm583, %v512, 0
          %v600 = vsel %vm583, %v514, 0
          %v603 = vsel %vm583, %v516, 0
          %605 = vmatpush.msra.mxu0 %v532
          %606 = vmatpush.msra.mxu0 %v531
          %607 = vmatpush.msra.mxu0 %v530
          %608 = vmatpush.msra.mxu0 %v529
          %609 = vmatpush.msra.mxu0 %v528
          %610 = vmatpush.msra.mxu0 %v527
          %611 = vmatpush.msra.mxu0 %v526
          %612 = vmatpush.msra.mxu0 %v525
          %613 = vmatpush.msra.mxu0 %v524
          %614 = vmatpush.msra.mxu0 %v523
          %615 = vmatpush.msra.mxu0 %v522
          %616 = vmatpush.msra.mxu0 %v521
          %617 = vmatpush.msra.mxu0 %v520
          %618 = vmatpush.msra.mxu0 %v519
          %619 = vmatpush.msra.mxu0 %v518
          %620 = vmatpush.msra.mxu0 %v517
          %621 = vmatmul.f32.gmra.mxu0 %v503
          %v622 = vpop.f32.mrf.mxu0
          %v623 = vadd.f32 %v551, %v622
          %624 = vmatmul.f32.gmra.mxu0 %v505
          %v625 = vpop.f32.mrf.mxu0
          %v626 = vadd.f32 %v556, %v625
          %627 = vmatmul.f32.gmra.mxu0 %v507
          %v628 = vpop.f32.mrf.mxu0
          %v629 = vadd.f32 %v561, %v628
          %630 = vmatmul.f32.gmra.mxu0 %v509
          %v631 = vpop.f32.mrf.mxu0
          %v632 = vadd.f32 %v566, %v631
          %633 = vmatmul.f32.gmra.mxu0 %v511
          %v634 = vpop.f32.mrf.mxu0
          %v635 = vadd.f32 %v571, %v634
          %636 = vmatmul.f32.gmra.mxu0 %v513
          %v637 = vpop.f32.mrf.mxu0
          %v638 = vadd.f32 %v576, %v637
          %639 = vmatmul.f32.gmra.mxu0 %v515
          %v640 = vpop.f32.mrf.mxu0
          %v641 = vadd.f32 %v581, %v640
          %642 = vdwg.mxu0
          %643 = vmatpush.msra.mxu0 0.0
          %644 = vmatpush.msra.mxu0 0.0
          %645 = vmatpush.msra.mxu0 0.0
          %646 = vmatpush.msra.mxu0 0.0
          %647 = vmatpush.msra.mxu0 0.0
          %648 = vmatpush.msra.mxu0 0.0
          %649 = vmatpush.msra.mxu0 0.0
          %650 = vmatpush.msra.mxu0 0.0
          %651 = vmatpush.msra.mxu0 %v540
          %652 = vmatpush.msra.mxu0 %v539
          %653 = vmatpush.msra.mxu0 %v538
          %654 = vmatpush.msra.mxu0 %v537
          %655 = vmatpush.msra.mxu0 %v536
          %656 = vmatpush.msra.mxu0 %v535
          %657 = vmatpush.msra.mxu0 %v534
          %658 = vmatpush.msra.mxu0 %v533
          %659 = vmatmul.f32.gmra.mxu0 %v585
          %v660 = vpop.f32.mrf.mxu0
          %v661 = vadd.f32 %v623, %v660
          %662 = vmatmul.f32.gmra.mxu0 %v588
          %v663 = vpop.f32.mrf.mxu0
          %v664 = vadd.f32 %v626, %v663
          %665 = vmatmul.f32.gmra.mxu0 %v591
          %v666 = vpop.f32.mrf.mxu0
          %v667 = vadd.f32 %v629, %v666
          %668 = vmatmul.f32.gmra.mxu0 %v594
          %v669 = vpop.f32.mrf.mxu0
          %v670 = vadd.f32 %v632, %v669
          %671 = vmatmul.f32.gmra.mxu0 %v597
          %v672 = vpop.f32.mrf.mxu0
          %v673 = vadd.f32 %v635, %v672
          %674 = vmatmul.f32.gmra.mxu0 %v600
          %v675 = vpop.f32.mrf.mxu0
          %v676 = vadd.f32 %v638, %v675
          %677 = vmatmul.f32.gmra.mxu0 %v603
          %v678 = vpop.f32.mrf.mxu0
          %v679 = vadd.f32 %v641, %v678
          %680 = vdwg.mxu0
          %681 = vst.msk [vmem:[#allocation2 + $0xb] sm:$0xff] %vm483, %v661
          %682 = vst.msk [vmem:[#allocation2 + $0x13] sm:$0xff] %vm483, %v664
          %683 = vst.msk [vmem:[#allocation2 + $0x1b] sm:$0xff] %vm483, %v667
          %684 = vst.msk [vmem:[#allocation2 + $0x23] sm:$0xff] %vm483, %v670
          %685 = vst.msk [vmem:[#allocation2 + $0x2b] sm:$0xff] %vm483, %v673
          %686 = vst.msk [vmem:[#allocation2 + $0x33] sm:$0xff] %vm483, %v676
          %vm687 = vcmask 58368
          %688 = vst.msk [vmem:[#allocation2 + $0x3b] sm:$0x3] %vm687, %v679
        $region72: #{resmlp_forward.1} parent=67 // pred_fallthru
          _
        %v689 = vld [vmem:[%s3] sm:$0xff]
        %v690 = vld [vmem:[%s3 + $0x8] sm:$0xff]
        %v691 = vld [vmem:[%s3 + $0x10] sm:$0xff]
        %v692 = vld [vmem:[%s3 + $0x18] sm:$0xff]
        %v693 = vld [vmem:[%s3 + $0x20] sm:$0xff]
        %v694 = vld [vmem:[%s3 + $0x28] sm:$0xff]
        %v695 = vld [vmem:[%s3 + $0x30] sm:$0x3]
        %v696 = vld [vmem:[#allocation2] sm:$0xff]
        %v697 = vld [vmem:[#allocation2 + $0x8] sm:$0xff]
        %v698 = vld [vmem:[#allocation2 + $0x10] sm:$0xff]
        %v699 = vld [vmem:[#allocation2 + $0x18] sm:$0xff]
        %v700 = vld [vmem:[#allocation2 + $0x20] sm:$0xff]
        %v701 = vld [vmem:[#allocation2 + $0x28] sm:$0xff]
        %v702 = vld [vmem:[#allocation2 + $0x30] sm:$0x3]
        %v703 = vld [vmem:[%s460] sm:$0xff]
        %v704 = vld [vmem:[#allocation2 + $0x1] sm:$0xff]
        %v705 = vld [vmem:[#allocation2 + $0x9] sm:$0xff]
        %v706 = vld [vmem:[#allocation2 + $0x11] sm:$0xff]
        %v707 = vld [vmem:[#allocation2 + $0x19] sm:$0xff]
        %v708 = vld [vmem:[#allocation2 + $0x21] sm:$0xff]
        %v709 = vld [vmem:[#allocation2 + $0x29] sm:$0xff]
        %v710 = vld [vmem:[#allocation2 + $0x31] sm:$0x3]
        %s711 = scalar_lea.vmem %s460, 8
        %v712 = vld [vmem:[%s711] sm:$0xff]
        %vm713 = vcmask 64512
        %v715 = vsel %vm713, %v704, 0
        %v718 = vsel %vm713, %v705, 0
        %v721 = vsel %vm713, %v706, 0
        %v724 = vsel %vm713, %v707, 0
        %v727 = vsel %vm713, %v708, 0
        %v730 = vsel %vm713, %v709, 0
        %v733 = vsel %vm713, %v710, 0
        %735 = vmatpush.msra.mxu0 0.0
        %736 = vmatpush.msra.mxu0 0.0
        %737 = vmatpush.msra.mxu0 0.0
        %738 = vmatpush.msra.mxu0 0.0
        %739 = vmatpush.msra.mxu0 0.0
        %740 = vmatpush.msra.mxu0 0.0
        %741 = vmatpush.msra.mxu0 0.0
        %742 = vmatpush.msra.mxu0 0.0
        %743 = vmatpush.msra.mxu0 0.0
        %744 = vmatpush.msra.mxu0 0.0
        %745 = vmatpush.msra.mxu0 0.0
        %746 = vmatpush.msra.mxu0 0.0
        %747 = vmatpush.msra.mxu0 0.0
        %748 = vmatpush.msra.mxu0 0.0
        %749 = vmatpush.msra.mxu0 0.0
        %750 = vmatpush.msra.mxu0 %v712
        %751 = vmatmul.f32.gmra.mxu0 %v715
        %v752 = vpop.f32.mrf.mxu0
        %v753 = vadd.f32 0.0, %v752
        %754 = vmatmul.f32.gmra.mxu0 %v718
        %v755 = vpop.f32.mrf.mxu0
        %v756 = vadd.f32 0.0, %v755
        %757 = vmatmul.f32.gmra.mxu0 %v721
        %v758 = vpop.f32.mrf.mxu0
        %v759 = vadd.f32 0.0, %v758
        %760 = vmatmul.f32.gmra.mxu0 %v724
        %v761 = vpop.f32.mrf.mxu0
        %v762 = vadd.f32 0.0, %v761
        %763 = vmatmul.f32.gmra.mxu0 %v727
        %v764 = vpop.f32.mrf.mxu0
        %v765 = vadd.f32 0.0, %v764
        %766 = vmatmul.f32.gmra.mxu0 %v730
        %v767 = vpop.f32.mrf.mxu0
        %v768 = vadd.f32 0.0, %v767
        %769 = vmatmul.f32.gmra.mxu0 %v733
        %v770 = vpop.f32.mrf.mxu0
        %v771 = vadd.f32 0.0, %v770
        %772 = vdwg.mxu0
        %v774 = vsel %vm713, %v696, 0
        %v777 = vsel %vm713, %v697, 0
        %v780 = vsel %vm713, %v698, 0
        %v783 = vsel %vm713, %v699, 0
        %v786 = vsel %vm713, %v700, 0
        %v789 = vsel %vm713, %v701, 0
        %v792 = vsel %vm713, %v702, 0
        %794 = vmatpush.msra.mxu0 0.0
        %795 = vmatpush.msra.mxu0 0.0
        %796 = vmatpush.msra.mxu0 0.0
        %797 = vmatpush.msra.mxu0 0.0
        %798 = vmatpush.msra.mxu0 0.0
        %799 = vmatpush.msra.mxu0 0.0
        %800 = vmatpush.msra.mxu0 0.0
        %801 = vmatpush.msra.mxu0 0.0
        %802 = vmatpush.msra.mxu0 0.0
        %803 = vmatpush.msra.mxu0 0.0
        %804 = vmatpush.msra.mxu0 0.0
        %805 = vmatpush.msra.mxu0 0.0
        %806 = vmatpush.msra.mxu0 0.0
        %807 = vmatpush.msra.mxu0 0.0
        %808 = vmatpush.msra.mxu0 0.0
        %809 = vmatpush.msra.mxu0 %v703
        %810 = vmatmul.f32.gmra.mxu0 %v774
        %v811 = vpop.f32.mrf.mxu0
        %v812 = vadd.f32 %v753, %v811
        %813 = vmatmul.f32.gmra.mxu0 %v777
        %v814 = vpop.f32.mrf.mxu0
        %v815 = vadd.f32 %v756, %v814
        %816 = vmatmul.f32.gmra.mxu0 %v780
        %v817 = vpop.f32.mrf.mxu0
        %v818 = vadd.f32 %v759, %v817
        %819 = vmatmul.f32.gmra.mxu0 %v783
        %v820 = vpop.f32.mrf.mxu0
        %v821 = vadd.f32 %v762, %v820
        %822 = vmatmul.f32.gmra.mxu0 %v786
        %v823 = vpop.f32.mrf.mxu0
        %v824 = vadd.f32 %v765, %v823
        %825 = vmatmul.f32.gmra.mxu0 %v789
        %v826 = vpop.f32.mrf.mxu0
        %v827 = vadd.f32 %v768, %v826
        %828 = vmatmul.f32.gmra.mxu0 %v792
        %v829 = vpop.f32.mrf.mxu0
        %v830 = vadd.f32 %v771, %v829
        %831 = vdwg.mxu0
        %v832 = vld [vmem:[#allocation2 + $0x2] sm:$0xff]
        %v833 = vld [vmem:[#allocation2 + $0xa] sm:$0xff]
        %v834 = vld [vmem:[#allocation2 + $0x12] sm:$0xff]
        %v835 = vld [vmem:[#allocation2 + $0x1a] sm:$0xff]
        %v836 = vld [vmem:[#allocation2 + $0x22] sm:$0xff]
        %v837 = vld [vmem:[#allocation2 + $0x2a] sm:$0xff]
        %v838 = vld [vmem:[#allocation2 + $0x32] sm:$0x3]
        %s839 = scalar_lea.vmem %s460, 16
        %v840 = vld [vmem:[%s839] sm:$0xff]
        %v842 = vsel %vm713, %v832, 0
        %v845 = vsel %vm713, %v833, 0
        %v848 = vsel %vm713, %v834, 0
        %v851 = vsel %vm713, %v835, 0
        %v854 = vsel %vm713, %v836, 0
        %v857 = vsel %vm713, %v837, 0
        %v860 = vsel %vm713, %v838, 0
        %862 = vmatpush.msra.mxu0 0.0
        %863 = vmatpush.msra.mxu0 0.0
        %864 = vmatpush.msra.mxu0 0.0
        %865 = vmatpush.msra.mxu0 0.0
        %866 = vmatpush.msra.mxu0 0.0
        %867 = vmatpush.msra.mxu0 0.0
        %868 = vmatpush.msra.mxu0 0.0
        %869 = vmatpush.msra.mxu0 0.0
        %870 = vmatpush.msra.mxu0 0.0
        %871 = vmatpush.msra.mxu0 0.0
        %872 = vmatpush.msra.mxu0 0.0
        %873 = vmatpush.msra.mxu0 0.0
        %874 = vmatpush.msra.mxu0 0.0
        %875 = vmatpush.msra.mxu0 0.0
        %876 = vmatpush.msra.mxu0 0.0
        %877 = vmatpush.msra.mxu0 %v840
        %878 = vmatmul.f32.gmra.mxu0 %v842
        %v879 = vpop.f32.mrf.mxu0
        %v880 = vadd.f32 0.0, %v879
        %881 = vmatmul.f32.gmra.mxu0 %v845
        %v882 = vpop.f32.mrf.mxu0
        %v883 = vadd.f32 0.0, %v882
        %884 = vmatmul.f32.gmra.mxu0 %v848
        %v885 = vpop.f32.mrf.mxu0
        %v886 = vadd.f32 0.0, %v885
        %887 = vmatmul.f32.gmra.mxu0 %v851
        %v888 = vpop.f32.mrf.mxu0
        %v889 = vadd.f32 0.0, %v888
        %890 = vmatmul.f32.gmra.mxu0 %v854
        %v891 = vpop.f32.mrf.mxu0
        %v892 = vadd.f32 0.0, %v891
        %893 = vmatmul.f32.gmra.mxu0 %v857
        %v894 = vpop.f32.mrf.mxu0
        %v895 = vadd.f32 0.0, %v894
        %896 = vmatmul.f32.gmra.mxu0 %v860
        %v897 = vpop.f32.mrf.mxu0
        %v898 = vadd.f32 0.0, %v897
        %899 = vdwg.mxu0
        %v900 = vadd.f32 %v812, %v880
        %v901 = vadd.f32 %v815, %v883
        %v902 = vadd.f32 %v818, %v886
        %v903 = vadd.f32 %v821, %v889
        %v904 = vadd.f32 %v824, %v892
        %v905 = vadd.f32 %v827, %v895
        %v906 = vadd.f32 %v830, %v898
        %v907 = vld [vmem:[#allocation2 + $0xa] sm:$0xff]
        %v908 = vld [vmem:[#allocation2 + $0x12] sm:$0xff]
        %v909 = vld [vmem:[#allocation2 + $0x1a] sm:$0xff]
        %v910 = vld [vmem:[#allocation2 + $0x22] sm:$0xff]
        %v911 = vld [vmem:[#allocation2 + $0x2a] sm:$0xff]
        %v912 = vld [vmem:[#allocation2 + $0x32] sm:$0xff]
        %v913 = vld [vmem:[#allocation2 + $0x3a] sm:$0x3]
        %s914 = scalar_lea.vmem %s460, 24
        %v915 = vld [vmem:[%s914] sm:$0xff]
        %v917 = vsel %vm713, %v907, 0
        %v920 = vsel %vm713, %v908, 0
        %v923 = vsel %vm713, %v909, 0
        %v926 = vsel %vm713, %v910, 0
        %v929 = vsel %vm713, %v911, 0
        %v932 = vsel %vm713, %v912, 0
        %v935 = vsel %vm713, %v913, 0
        %937 = vmatpush.msra.mxu0 0.0
        %938 = vmatpush.msra.mxu0 0.0
        %939 = vmatpush.msra.mxu0 0.0
        %940 = vmatpush.msra.mxu0 0.0
        %941 = vmatpush.msra.mxu0 0.0
        %942 = vmatpush.msra.mxu0 0.0
        %943 = vmatpush.msra.mxu0 0.0
        %944 = vmatpush.msra.mxu0 0.0
        %945 = vmatpush.msra.mxu0 0.0
        %946 = vmatpush.msra.mxu0 0.0
        %947 = vmatpush.msra.mxu0 0.0
        %948 = vmatpush.msra.mxu0 0.0
        %949 = vmatpush.msra.mxu0 0.0
        %950 = vmatpush.msra.mxu0 0.0
        %951 = vmatpush.msra.mxu0 0.0
        %952 = vmatpush.msra.mxu0 %v915
        %953 = vmatmul.f32.gmra.mxu0 %v917
        %v954 = vpop.f32.mrf.mxu0
        %v955 = vadd.f32 0.0, %v954
        %956 = vmatmul.f32.gmra.mxu0 %v920
        %v957 = vpop.f32.mrf.mxu0
        %v958 = vadd.f32 0.0, %v957
        %959 = vmatmul.f32.gmra.mxu0 %v923
        %v960 = vpop.f32.mrf.mxu0
        %v961 = vadd.f32 0.0, %v960
        %962 = vmatmul.f32.gmra.mxu0 %v926
        %v963 = vpop.f32.mrf.mxu0
        %v964 = vadd.f32 0.0, %v963
        %965 = vmatmul.f32.gmra.mxu0 %v929
        %v966 = vpop.f32.mrf.mxu0
        %v967 = vadd.f32 0.0, %v966
        %968 = vmatmul.f32.gmra.mxu0 %v932
        %v969 = vpop.f32.mrf.mxu0
        %v970 = vadd.f32 0.0, %v969
        %971 = vmatmul.f32.gmra.mxu0 %v935
        %v972 = vpop.f32.mrf.mxu0
        %v973 = vadd.f32 0.0, %v972
        %974 = vdwg.mxu0
        %v975 = vadd.f32 %v900, %v955
        %v976 = vadd.f32 %v901, %v958
        %v977 = vadd.f32 %v902, %v961
        %v978 = vadd.f32 %v903, %v964
        %v979 = vadd.f32 %v904, %v967
        %v980 = vadd.f32 %v905, %v970
        %v981 = vadd.f32 %v906, %v973
        %v982 = vld [vmem:[#allocation2 + $0xb] sm:$0xff]
        %v983 = vld [vmem:[#allocation2 + $0x13] sm:$0xff]
        %v984 = vld [vmem:[#allocation2 + $0x1b] sm:$0xff]
        %v985 = vld [vmem:[#allocation2 + $0x23] sm:$0xff]
        %v986 = vld [vmem:[#allocation2 + $0x2b] sm:$0xff]
        %v987 = vld [vmem:[#allocation2 + $0x33] sm:$0xff]
        %v988 = vld [vmem:[#allocation2 + $0x3b] sm:$0x3]
        %s989 = scalar_lea.vmem %s460, 32
        %v990 = vld [vmem:[%s989] sm:$0xff]
        %v992 = vsel %vm713, %v982, 0
        %v995 = vsel %vm713, %v983, 0
        %v998 = vsel %vm713, %v984, 0
        %v1001 = vsel %vm713, %v985, 0
        %v1004 = vsel %vm713, %v986, 0
        %v1007 = vsel %vm713, %v987, 0
        %v1010 = vsel %vm713, %v988, 0
        %1012 = vmatpush.msra.mxu0 0.0
        %1013 = vmatpush.msra.mxu0 0.0
        %1014 = vmatpush.msra.mxu0 0.0
        %1015 = vmatpush.msra.mxu0 0.0
        %1016 = vmatpush.msra.mxu0 0.0
        %1017 = vmatpush.msra.mxu0 0.0
        %1018 = vmatpush.msra.mxu0 0.0
        %1019 = vmatpush.msra.mxu0 0.0
        %1020 = vmatpush.msra.mxu0 0.0
        %1021 = vmatpush.msra.mxu0 0.0
        %1022 = vmatpush.msra.mxu0 0.0
        %1023 = vmatpush.msra.mxu0 0.0
        %1024 = vmatpush.msra.mxu0 0.0
        %1025 = vmatpush.msra.mxu0 0.0
        %1026 = vmatpush.msra.mxu0 0.0
        %1027 = vmatpush.msra.mxu0 %v990
        %1028 = vmatmul.f32.gmra.mxu0 %v992
        %v1029 = vpop.f32.mrf.mxu0
        %v1030 = vadd.f32 0.0, %v1029
        %1031 = vmatmul.f32.gmra.mxu0 %v995
        %v1032 = vpop.f32.mrf.mxu0
        %v1033 = vadd.f32 0.0, %v1032
        %1034 = vmatmul.f32.gmra.mxu0 %v998
        %v1035 = vpop.f32.mrf.mxu0
        %v1036 = vadd.f32 0.0, %v1035
        %1037 = vmatmul.f32.gmra.mxu0 %v1001
        %v1038 = vpop.f32.mrf.mxu0
        %v1039 = vadd.f32 0.0, %v1038
        %1040 = vmatmul.f32.gmra.mxu0 %v1004
        %v1041 = vpop.f32.mrf.mxu0
        %v1042 = vadd.f32 0.0, %v1041
        %1043 = vmatmul.f32.gmra.mxu0 %v1007
        %v1044 = vpop.f32.mrf.mxu0
        %v1045 = vadd.f32 0.0, %v1044
        %1046 = vmatmul.f32.gmra.mxu0 %v1010
        %v1047 = vpop.f32.mrf.mxu0
        %v1048 = vadd.f32 0.0, %v1047
        %1049 = vdwg.mxu0
        %v1050 = vadd.f32 %v975, %v1030
        %v1051 = vadd.f32 %v976, %v1033
        %v1052 = vadd.f32 %v977, %v1036
        %v1053 = vadd.f32 %v978, %v1039
        %v1054 = vadd.f32 %v979, %v1042
        %v1055 = vadd.f32 %v980, %v1045
        %v1056 = vadd.f32 %v981, %v1048
        %v1057 = vld [vmem:[#allocation2 + $0xc] sm:$0xff]
        %v1058 = vld [vmem:[#allocation2 + $0x14] sm:$0xff]
        %v1059 = vld [vmem:[#allocation2 + $0x1c] sm:$0xff]
        %v1060 = vld [vmem:[#allocation2 + $0x24] sm:$0xff]
        %v1061 = vld [vmem:[#allocation2 + $0x2c] sm:$0xff]
        %v1062 = vld [vmem:[#allocation2 + $0x34] sm:$0xff]
        %v1063 = vld [vmem:[#allocation2 + $0x3c] sm:$0x3]
        %s1064 = scalar_lea.vmem %s460, 40
        %v1065 = vld [vmem:[%s1064] sm:$0xff]
        %v1067 = vsel %vm713, %v1057, 0
        %v1070 = vsel %vm713, %v1058, 0
        %v1073 = vsel %vm713, %v1059, 0
        %v1076 = vsel %vm713, %v1060, 0
        %v1079 = vsel %vm713, %v1061, 0
        %v1082 = vsel %vm713, %v1062, 0
        %v1085 = vsel %vm713, %v1063, 0
        %1087 = vmatpush.msra.mxu0 0.0
        %1088 = vmatpush.msra.mxu0 0.0
        %1089 = vmatpush.msra.mxu0 0.0
        %1090 = vmatpush.msra.mxu0 0.0
        %1091 = vmatpush.msra.mxu0 0.0
        %1092 = vmatpush.msra.mxu0 0.0
        %1093 = vmatpush.msra.mxu0 0.0
        %1094 = vmatpush.msra.mxu0 0.0
        %1095 = vmatpush.msra.mxu0 0.0
        %1096 = vmatpush.msra.mxu0 0.0
        %1097 = vmatpush.msra.mxu0 0.0
        %1098 = vmatpush.msra.mxu0 0.0
        %1099 = vmatpush.msra.mxu0 0.0
        %1100 = vmatpush.msra.mxu0 0.0
        %1101 = vmatpush.msra.mxu0 0.0
        %1102 = vmatpush.msra.mxu0 %v1065
        %1103 = vmatmul.f32.gmra.mxu0 %v1067
        %v1104 = vpop.f32.mrf.mxu0
        %v1105 = vadd.f32 0.0, %v1104
        %1106 = vmatmul.f32.gmra.mxu0 %v1070
        %v1107 = vpop.f32.mrf.mxu0
        %v1108 = vadd.f32 0.0, %v1107
        %1109 = vmatmul.f32.gmra.mxu0 %v1073
        %v1110 = vpop.f32.mrf.mxu0
        %v1111 = vadd.f32 0.0, %v1110
        %1112 = vmatmul.f32.gmra.mxu0 %v1076
        %v1113 = vpop.f32.mrf.mxu0
        %v1114 = vadd.f32 0.0, %v1113
        %1115 = vmatmul.f32.gmra.mxu0 %v1079
        %v1116 = vpop.f32.mrf.mxu0
        %v1117 = vadd.f32 0.0, %v1116
        %1118 = vmatmul.f32.gmra.mxu0 %v1082
        %v1119 = vpop.f32.mrf.mxu0
        %v1120 = vadd.f32 0.0, %v1119
        %1121 = vmatmul.f32.gmra.mxu0 %v1085
        %v1122 = vpop.f32.mrf.mxu0
        %v1123 = vadd.f32 0.0, %v1122
        %1124 = vdwg.mxu0
        %v1125 = vadd.f32 %v1050, %v1105
        %v1126 = vadd.f32 %v1051, %v1108
        %v1127 = vadd.f32 %v1052, %v1111
        %v1128 = vadd.f32 %v1053, %v1114
        %v1129 = vadd.f32 %v1054, %v1117
        %v1130 = vadd.f32 %v1055, %v1120
        %v1131 = vadd.f32 %v1056, %v1123
        %v1132 = vld [vmem:[#allocation2 + $0x14] sm:$0xff]
        %v1133 = vld [vmem:[#allocation2 + $0x1c] sm:$0xff]
        %v1134 = vld [vmem:[#allocation2 + $0x24] sm:$0xff]
        %v1135 = vld [vmem:[#allocation2 + $0x2c] sm:$0xff]
        %v1136 = vld [vmem:[#allocation2 + $0x34] sm:$0xff]
        %v1137 = vld [vmem:[#allocation2 + $0x3c] sm:$0xff]
        %v1138 = vld [vmem:[#allocation2 + $0x44] sm:$0x3]
        %s1139 = scalar_lea.vmem %s460, 48
        %v1140 = vld [vmem:[%s1139] sm:$0xff]
        %v1142 = vsel %vm713, %v1132, 0
        %v1145 = vsel %vm713, %v1133, 0
        %v1148 = vsel %vm713, %v1134, 0
        %v1151 = vsel %vm713, %v1135, 0
        %v1154 = vsel %vm713, %v1136, 0
        %v1157 = vsel %vm713, %v1137, 0
        %v1160 = vsel %vm713, %v1138, 0
        %1162 = vmatpush.msra.mxu0 0.0
        %1163 = vmatpush.msra.mxu0 0.0
        %1164 = vmatpush.msra.mxu0 0.0
        %1165 = vmatpush.msra.mxu0 0.0
        %1166 = vmatpush.msra.mxu0 0.0
        %1167 = vmatpush.msra.mxu0 0.0
        %1168 = vmatpush.msra.mxu0 0.0
        %1169 = vmatpush.msra.mxu0 0.0
        %1170 = vmatpush.msra.mxu0 0.0
        %1171 = vmatpush.msra.mxu0 0.0
        %1172 = vmatpush.msra.mxu0 0.0
        %1173 = vmatpush.msra.mxu0 0.0
        %1174 = vmatpush.msra.mxu0 0.0
        %1175 = vmatpush.msra.mxu0 0.0
        %1176 = vmatpush.msra.mxu0 0.0
        %1177 = vmatpush.msra.mxu0 %v1140
        %1178 = vmatmul.f32.gmra.mxu0 %v1142
        %v1179 = vpop.f32.mrf.mxu0
        %v1180 = vadd.f32 0.0, %v1179
        %1181 = vmatmul.f32.gmra.mxu0 %v1145
        %v1182 = vpop.f32.mrf.mxu0
        %v1183 = vadd.f32 0.0, %v1182
        %1184 = vmatmul.f32.gmra.mxu0 %v1148
        %v1185 = vpop.f32.mrf.mxu0
        %v1186 = vadd.f32 0.0, %v1185
        %1187 = vmatmul.f32.gmra.mxu0 %v1151
        %v1188 = vpop.f32.mrf.mxu0
        %v1189 = vadd.f32 0.0, %v1188
        %1190 = vmatmul.f32.gmra.mxu0 %v1154
        %v1191 = vpop.f32.mrf.mxu0
        %v1192 = vadd.f32 0.0, %v1191
        %1193 = vmatmul.f32.gmra.mxu0 %v1157
        %v1194 = vpop.f32.mrf.mxu0
        %v1195 = vadd.f32 0.0, %v1194
        %1196 = vmatmul.f32.gmra.mxu0 %v1160
        %v1197 = vpop.f32.mrf.mxu0
        %v1198 = vadd.f32 0.0, %v1197
        %1199 = vdwg.mxu0
        %v1200 = vadd.f32 %v1125, %v1180
        %v1201 = vadd.f32 %v1126, %v1183
        %v1202 = vadd.f32 %v1127, %v1186
        %v1203 = vadd.f32 %v1128, %v1189
        %v1204 = vadd.f32 %v1129, %v1192
        %v1205 = vadd.f32 %v1130, %v1195
        %v1206 = vadd.f32 %v1131, %v1198
        %v1207 = vld [vmem:[#allocation2 + $0x15] sm:$0xff]
        %v1208 = vld [vmem:[#allocation2 + $0x1d] sm:$0xff]
        %v1209 = vld [vmem:[#allocation2 + $0x25] sm:$0xff]
        %v1210 = vld [vmem:[#allocation2 + $0x2d] sm:$0xff]
        %v1211 = vld [vmem:[#allocation2 + $0x35] sm:$0xff]
        %v1212 = vld [vmem:[#allocation2 + $0x3d] sm:$0xff]
        %v1213 = vld [vmem:[#allocation2 + $0x45] sm:$0x3]
        %s1214 = scalar_lea.vmem %s460, 56
        %v1215 = vld [vmem:[%s1214] sm:$0xff]
        %v1217 = vsel %vm713, %v1207, 0
        %v1220 = vsel %vm713, %v1208, 0
        %v1223 = vsel %vm713, %v1209, 0
        %v1226 = vsel %vm713, %v1210, 0
        %v1229 = vsel %vm713, %v1211, 0
        %v1232 = vsel %vm713, %v1212, 0
        %v1235 = vsel %vm713, %v1213, 0
        %1237 = vmatpush.msra.mxu0 0.0
        %1238 = vmatpush.msra.mxu0 0.0
        %1239 = vmatpush.msra.mxu0 0.0
        %1240 = vmatpush.msra.mxu0 0.0
        %1241 = vmatpush.msra.mxu0 0.0
        %1242 = vmatpush.msra.mxu0 0.0
        %1243 = vmatpush.msra.mxu0 0.0
        %1244 = vmatpush.msra.mxu0 0.0
        %1245 = vmatpush.msra.mxu0 0.0
        %1246 = vmatpush.msra.mxu0 0.0
        %1247 = vmatpush.msra.mxu0 0.0
        %1248 = vmatpush.msra.mxu0 0.0
        %1249 = vmatpush.msra.mxu0 0.0
        %1250 = vmatpush.msra.mxu0 0.0
        %1251 = vmatpush.msra.mxu0 0.0
        %1252 = vmatpush.msra.mxu0 %v1215
        %1253 = vmatmul.f32.gmra.mxu0 %v1217
        %v1254 = vpop.f32.mrf.mxu0
        %v1255 = vadd.f32 0.0, %v1254
        %1256 = vmatmul.f32.gmra.mxu0 %v1220
        %v1257 = vpop.f32.mrf.mxu0
        %v1258 = vadd.f32 0.0, %v1257
        %1259 = vmatmul.f32.gmra.mxu0 %v1223
        %v1260 = vpop.f32.mrf.mxu0
        %v1261 = vadd.f32 0.0, %v1260
        %1262 = vmatmul.f32.gmra.mxu0 %v1226
        %v1263 = vpop.f32.mrf.mxu0
        %v1264 = vadd.f32 0.0, %v1263
        %1265 = vmatmul.f32.gmra.mxu0 %v1229
        %v1266 = vpop.f32.mrf.mxu0
        %v1267 = vadd.f32 0.0, %v1266
        %1268 = vmatmul.f32.gmra.mxu0 %v1232
        %v1269 = vpop.f32.mrf.mxu0
        %v1270 = vadd.f32 0.0, %v1269
        %1271 = vmatmul.f32.gmra.mxu0 %v1235
        %v1272 = vpop.f32.mrf.mxu0
        %v1273 = vadd.f32 0.0, %v1272
        %1274 = vdwg.mxu0
        %v1275 = vadd.f32 %v1200, %v1255
        %v1276 = vadd.f32 %v1201, %v1258
        %v1277 = vadd.f32 %v1202, %v1261
        %v1278 = vadd.f32 %v1203, %v1264
        %v1279 = vadd.f32 %v1204, %v1267
        %v1280 = vadd.f32 %v1205, %v1270
        %v1281 = vadd.f32 %v1206, %v1273
        %v1282 = vld [vmem:[#allocation2 + $0x16] sm:$0xff]
        %v1283 = vld [vmem:[#allocation2 + $0x1e] sm:$0xff]
        %v1284 = vld [vmem:[#allocation2 + $0x26] sm:$0xff]
        %v1285 = vld [vmem:[#allocation2 + $0x2e] sm:$0xff]
        %v1286 = vld [vmem:[#allocation2 + $0x36] sm:$0xff]
        %v1287 = vld [vmem:[#allocation2 + $0x3e] sm:$0xff]
        %v1288 = vld [vmem:[#allocation2 + $0x46] sm:$0x3]
        %s1289 = scalar_lea.vmem %s460, 64
        %v1290 = vld [vmem:[%s1289] sm:$0xff]
        %v1292 = vsel %vm713, %v1282, 0
        %v1295 = vsel %vm713, %v1283, 0
        %v1298 = vsel %vm713, %v1284, 0
        %v1301 = vsel %vm713, %v1285, 0
        %v1304 = vsel %vm713, %v1286, 0
        %v1307 = vsel %vm713, %v1287, 0
        %v1310 = vsel %vm713, %v1288, 0
        %1312 = vmatpush.msra.mxu0 0.0
        %1313 = vmatpush.msra.mxu0 0.0
        %1314 = vmatpush.msra.mxu0 0.0
        %1315 = vmatpush.msra.mxu0 0.0
        %1316 = vmatpush.msra.mxu0 0.0
        %1317 = vmatpush.msra.mxu0 0.0
        %1318 = vmatpush.msra.mxu0 0.0
        %1319 = vmatpush.msra.mxu0 0.0
        %1320 = vmatpush.msra.mxu0 0.0
        %1321 = vmatpush.msra.mxu0 0.0
        %1322 = vmatpush.msra.mxu0 0.0
        %1323 = vmatpush.msra.mxu0 0.0
        %1324 = vmatpush.msra.mxu0 0.0
        %1325 = vmatpush.msra.mxu0 0.0
        %1326 = vmatpush.msra.mxu0 0.0
        %1327 = vmatpush.msra.mxu0 %v1290
        %1328 = vmatmul.f32.gmra.mxu0 %v1292
        %v1329 = vpop.f32.mrf.mxu0
        %v1330 = vadd.f32 0.0, %v1329
        %1331 = vmatmul.f32.gmra.mxu0 %v1295
        %v1332 = vpop.f32.mrf.mxu0
        %v1333 = vadd.f32 0.0, %v1332
        %1334 = vmatmul.f32.gmra.mxu0 %v1298
        %v1335 = vpop.f32.mrf.mxu0
        %v1336 = vadd.f32 0.0, %v1335
        %1337 = vmatmul.f32.gmra.mxu0 %v1301
        %v1338 = vpop.f32.mrf.mxu0
        %v1339 = vadd.f32 0.0, %v1338
        %1340 = vmatmul.f32.gmra.mxu0 %v1304
        %v1341 = vpop.f32.mrf.mxu0
        %v1342 = vadd.f32 0.0, %v1341
        %1343 = vmatmul.f32.gmra.mxu0 %v1307
        %v1344 = vpop.f32.mrf.mxu0
        %v1345 = vadd.f32 0.0, %v1344
        %1346 = vmatmul.f32.gmra.mxu0 %v1310
        %v1347 = vpop.f32.mrf.mxu0
        %v1348 = vadd.f32 0.0, %v1347
        %1349 = vdwg.mxu0
        %v1350 = vadd.f32 %v1275, %v1330
        %v1351 = vadd.f32 %v1276, %v1333
        %v1352 = vadd.f32 %v1277, %v1336
        %v1353 = vadd.f32 %v1278, %v1339
        %v1354 = vadd.f32 %v1279, %v1342
        %v1355 = vadd.f32 %v1280, %v1345
        %v1356 = vadd.f32 %v1281, %v1348
        %v1357 = vld [vmem:[%s463] sm:$0x1]
        %v1359 = vperm.slane %v1357, 0
        %v1361 = vadd.f32 %v1350, %v1359
        %v1362 = vadd.f32 %v1351, %v1359
        %v1363 = vadd.f32 %v1352, %v1359
        %v1364 = vadd.f32 %v1353, %v1359
        %v1365 = vadd.f32 %v1354, %v1359
        %v1366 = vadd.f32 %v1355, %v1359
        %v1367 = vadd.f32 %v1356, %v1359
        %v1368 = vmul.f32 %v1361, 0.5
        %v1369 = vmul.f32 %v1362, 0.5
        %v1370 = vmul.f32 %v1363, 0.5
        %v1371 = vmul.f32 %v1364, 0.5
        %v1372 = vmul.f32 %v1365, 0.5
        %v1373 = vmul.f32 %v1366, 0.5
        %v1374 = vmul.f32 %v1367, 0.5
        %v1375 = vmul.f32 %v1361, 0.70710677
        %v1376 = vmul.f32 %v1362, 0.70710677
        %v1377 = vmul.f32 %v1363, 0.70710677
        %v1378 = vmul.f32 %v1364, 0.70710677
        %v1379 = vmul.f32 %v1365, 0.70710677
        %v1380 = vmul.f32 %v1366, 0.70710677
        %v1381 = vmul.f32 %v1367, 0.70710677
        %v1382 = vand.u32 2147483647, %v1375
        %v1383 = vand.u32 2147483647, %v1376
        %v1384 = vand.u32 2147483647, %v1377
        %v1385 = vand.u32 2147483647, %v1378
        %v1386 = vand.u32 2147483647, %v1379
        %v1387 = vand.u32 2147483647, %v1380
        %v1388 = vand.u32 2147483647, %v1381
        %v1389 = vmul.f32 %v1382, 0.3275911
        %v1390 = vmul.f32 %v1383, 0.3275911
        %v1391 = vmul.f32 %v1384, 0.3275911
        %v1392 = vmul.f32 %v1385, 0.3275911
        %v1393 = vmul.f32 %v1386, 0.3275911
        %v1394 = vmul.f32 %v1387, 0.3275911
        %v1395 = vmul.f32 %v1388, 0.3275911
        %v1396 = vadd.f32 %v1389, 1.0
        %v1397 = vadd.f32 %v1390, 1.0
        %v1398 = vadd.f32 %v1391, 1.0
        %v1399 = vadd.f32 %v1392, 1.0
        %v1400 = vadd.f32 %v1393, 1.0
        %v1401 = vadd.f32 %v1394, 1.0
        %v1402 = vadd.f32 %v1395, 1.0
        %v1403 = vrcp.pop %v1396
        %v1404 = vmul.f32 %v1396, %v1403
        %v1405 = vsub.f32 1.0, %v1404
        %v1406 = vmul.f32 %v1403, %v1405
        %v1407 = vadd.f32 %v1403, %v1406
        %vm1408 = vweird.f32 %v1396
        %vm1409 = vweird.f32 %v1403
        %vm1410 = vmor %vm1408, %vm1409
        %v1411 = vsel %vm1410, %v1403, %v1407
        %v1412 = vand.u32 2147483647, %v1396
        %vm1413 = vcmp.eq.f32.partialorder %v1412, 8.507059e+37
        %v1414 = vand.u32 %v1396, 2147483648
        %v1415 = vor.u32 1.1754944e-38, %v1414
        %v1416 = vsel %vm1413, %v1415, %v1411
        %v1417 = vmul.f32 1.0, %v1416
        %v1418 = vrcp.pop %v1397
        %v1419 = vmul.f32 %v1397, %v1418
        %v1420 = vsub.f32 1.0, %v1419
        %v1421 = vmul.f32 %v1418, %v1420
        %v1422 = vadd.f32 %v1418, %v1421
        %vm1423 = vweird.f32 %v1397
        %vm1424 = vweird.f32 %v1418
        %vm1425 = vmor %vm1423, %vm1424
        %v1426 = vsel %vm1425, %v1418, %v1422
        %v1427 = vand.u32 2147483647, %v1397
        %vm1428 = vcmp.eq.f32.partialorder %v1427, 8.507059e+37
        %v1429 = vand.u32 %v1397, 2147483648
        %v1430 = vor.u32 1.1754944e-38, %v1429
        %v1431 = vsel %vm1428, %v1430, %v1426
        %v1432 = vmul.f32 1.0, %v1431
        %v1433 = vrcp.pop %v1398
        %v1434 = vmul.f32 %v1398, %v1433
        %v1435 = vsub.f32 1.0, %v1434
        %v1436 = vmul.f32 %v1433, %v1435
        %v1437 = vadd.f32 %v1433, %v1436
        %vm1438 = vweird.f32 %v1398
        %vm1439 = vweird.f32 %v1433
        %vm1440 = vmor %vm1438, %vm1439
        %v1441 = vsel %vm1440, %v1433, %v1437
        %v1442 = vand.u32 2147483647, %v1398
        %vm1443 = vcmp.eq.f32.partialorder %v1442, 8.507059e+37
        %v1444 = vand.u32 %v1398, 2147483648
        %v1445 = vor.u32 1.1754944e-38, %v1444
        %v1446 = vsel %vm1443, %v1445, %v1441
        %v1447 = vmul.f32 1.0, %v1446
        %v1448 = vrcp.pop %v1399
        %v1449 = vmul.f32 %v1399, %v1448
        %v1450 = vsub.f32 1.0, %v1449
        %v1451 = vmul.f32 %v1448, %v1450
        %v1452 = vadd.f32 %v1448, %v1451
        %vm1453 = vweird.f32 %v1399
        %vm1454 = vweird.f32 %v1448
        %vm1455 = vmor %vm1453, %vm1454
        %v1456 = vsel %vm1455, %v1448, %v1452
        %v1457 = vand.u32 2147483647, %v1399
        %vm1458 = vcmp.eq.f32.partialorder %v1457, 8.507059e+37
        %v1459 = vand.u32 %v1399, 2147483648
        %v1460 = vor.u32 1.1754944e-38, %v1459
        %v1461 = vsel %vm1458, %v1460, %v1456
        %v1462 = vmul.f32 1.0, %v1461
        %v1463 = vrcp.pop %v1400
        %v1464 = vmul.f32 %v1400, %v1463
        %v1465 = vsub.f32 1.0, %v1464
        %v1466 = vmul.f32 %v1463, %v1465
        %v1467 = vadd.f32 %v1463, %v1466
        %vm1468 = vweird.f32 %v1400
        %vm1469 = vweird.f32 %v1463
        %vm1470 = vmor %vm1468, %vm1469
        %v1471 = vsel %vm1470, %v1463, %v1467
        %v1472 = vand.u32 2147483647, %v1400
        %vm1473 = vcmp.eq.f32.partialorder %v1472, 8.507059e+37
        %v1474 = vand.u32 %v1400, 2147483648
        %v1475 = vor.u32 1.1754944e-38, %v1474
        %v1476 = vsel %vm1473, %v1475, %v1471
        %v1477 = vmul.f32 1.0, %v1476
        %v1478 = vrcp.pop %v1401
        %v1479 = vmul.f32 %v1401, %v1478
        %v1480 = vsub.f32 1.0, %v1479
        %v1481 = vmul.f32 %v1478, %v1480
        %v1482 = vadd.f32 %v1478, %v1481
        %vm1483 = vweird.f32 %v1401
        %vm1484 = vweird.f32 %v1478
        %vm1485 = vmor %vm1483, %vm1484
        %v1486 = vsel %vm1485, %v1478, %v1482
        %v1487 = vand.u32 2147483647, %v1401
        %vm1488 = vcmp.eq.f32.partialorder %v1487, 8.507059e+37
        %v1489 = vand.u32 %v1401, 2147483648
        %v1490 = vor.u32 1.1754944e-38, %v1489
        %v1491 = vsel %vm1488, %v1490, %v1486
        %v1492 = vmul.f32 1.0, %v1491
        %v1493 = vrcp.pop %v1402
        %v1494 = vmul.f32 %v1402, %v1493
        %v1495 = vsub.f32 1.0, %v1494
        %v1496 = vmul.f32 %v1493, %v1495
        %v1497 = vadd.f32 %v1493, %v1496
        %vm1498 = vweird.f32 %v1402
        %vm1499 = vweird.f32 %v1493
        %vm1500 = vmor %vm1498, %vm1499
        %v1501 = vsel %vm1500, %v1493, %v1497
        %v1502 = vand.u32 2147483647, %v1402
        %vm1503 = vcmp.eq.f32.partialorder %v1502, 8.507059e+37
        %v1504 = vand.u32 %v1402, 2147483648
        %v1505 = vor.u32 1.1754944e-38, %v1504
        %v1506 = vsel %vm1503, %v1505, %v1501
        %v1507 = vmul.f32 1.0, %v1506
        %v1508 = vmul.f32 %v1417, 1.0614054
        %v1509 = vmul.f32 %v1432, 1.0614054
        %v1510 = vmul.f32 %v1447, 1.0614054
        %v1511 = vmul.f32 %v1462, 1.0614054
        %v1512 = vmul.f32 %v1477, 1.0614054
        %v1513 = vmul.f32 %v1492, 1.0614054
        %v1514 = vmul.f32 %v1507, 1.0614054
        %v1515 = vadd.f32 %v1508, -1.4531521
        %v1516 = vadd.f32 %v1509, -1.4531521
        %v1517 = vadd.f32 %v1510, -1.4531521
        %v1518 = vadd.f32 %v1511, -1.4531521
        %v1519 = vadd.f32 %v1512, -1.4531521
        %v1520 = vadd.f32 %v1513, -1.4531521
        %v1521 = vadd.f32 %v1514, -1.4531521
        %v1522 = vmul.f32 %v1515, %v1417
        %v1523 = vmul.f32 %v1516, %v1432
        %v1524 = vmul.f32 %v1517, %v1447
        %v1525 = vmul.f32 %v1518, %v1462
        %v1526 = vmul.f32 %v1519, %v1477
        %v1527 = vmul.f32 %v1520, %v1492
        %v1528 = vmul.f32 %v1521, %v1507
        %v1529 = vadd.f32 %v1522, 1.4214138
        %v1530 = vadd.f32 %v1523, 1.4214138
        %v1531 = vadd.f32 %v1524, 1.4214138
        %v1532 = vadd.f32 %v1525, 1.4214138
        %v1533 = vadd.f32 %v1526, 1.4214138
        %v1534 = vadd.f32 %v1527, 1.4214138
        %v1535 = vadd.f32 %v1528, 1.4214138
        %v1536 = vmul.f32 %v1529, %v1417
        %v1537 = vmul.f32 %v1530, %v1432
        %v1538 = vmul.f32 %v1531, %v1447
        %v1539 = vmul.f32 %v1532, %v1462
        %v1540 = vmul.f32 %v1533, %v1477
        %v1541 = vmul.f32 %v1534, %v1492
        %v1542 = vmul.f32 %v1535, %v1507
        %v1543 = vadd.f32 %v1536, -0.28449672
        %v1544 = vadd.f32 %v1537, -0.28449672
        %v1545 = vadd.f32 %v1538, -0.28449672
        %v1546 = vadd.f32 %v1539, -0.28449672
        %v1547 = vadd.f32 %v1540, -0.28449672
        %v1548 = vadd.f32 %v1541, -0.28449672
        %v1549 = vadd.f32 %v1542, -0.28449672
        %v1550 = vmul.f32 %v1543, %v1417
        %v1551 = vmul.f32 %v1544, %v1432
        %v1552 = vmul.f32 %v1545, %v1447
        %v1553 = vmul.f32 %v1546, %v1462
        %v1554 = vmul.f32 %v1547, %v1477
        %v1555 = vmul.f32 %v1548, %v1492
        %v1556 = vmul.f32 %v1549, %v1507
        %v1557 = vadd.f32 %v1550, 0.2548296
        %v1558 = vadd.f32 %v1551, 0.2548296
        %v1559 = vadd.f32 %v1552, 0.2548296
        %v1560 = vadd.f32 %v1553, 0.2548296
        %v1561 = vadd.f32 %v1554, 0.2548296
        %v1562 = vadd.f32 %v1555, 0.2548296
        %v1563 = vadd.f32 %v1556, 0.2548296
        %v1564 = vmul.f32 %v1557, %v1417
        %v1565 = vmul.f32 %v1558, %v1432
        %v1566 = vmul.f32 %v1559, %v1447
        %v1567 = vmul.f32 %v1560, %v1462
        %v1568 = vmul.f32 %v1561, %v1477
        %v1569 = vmul.f32 %v1562, %v1492
        %v1570 = vmul.f32 %v1563, %v1507
        %v1571 = vsub.f32 0.0, %v1382
        %v1572 = vsub.f32 0.0, %v1383
        %v1573 = vsub.f32 0.0, %v1384
        %v1574 = vsub.f32 0.0, %v1385
        %v1575 = vsub.f32 0.0, %v1386
        %v1576 = vsub.f32 0.0, %v1387
        %v1577 = vsub.f32 0.0, %v1388
        %v1578 = vmul.f32 %v1571, %v1382
        %v1579 = vmul.f32 %v1572, %v1383
        %v1580 = vmul.f32 %v1573, %v1384
        %v1581 = vmul.f32 %v1574, %v1385
        %v1582 = vmul.f32 %v1575, %v1386
        %v1583 = vmul.f32 %v1576, %v1387
        %v1584 = vmul.f32 %v1577, %v1388
        %v1585 = vmul.f32 %v1578, 1.442695
        %v1586 = vpow.pop %v1585
        %v1587 = vmul.f32 %v1579, 1.442695
        %v1588 = vpow.pop %v1587
        %v1589 = vmul.f32 %v1580, 1.442695
        %v1590 = vpow.pop %v1589
        %v1591 = vmul.f32 %v1581, 1.442695
        %v1592 = vpow.pop %v1591
        %v1593 = vmul.f32 %v1582, 1.442695
        %v1594 = vpow.pop %v1593
        %v1595 = vmul.f32 %v1583, 1.442695
        %v1596 = vpow.pop %v1595
        %v1597 = vmul.f32 %v1584, 1.442695
        %v1598 = vpow.pop %v1597
        %v1599 = vmul.f32 %v1564, %v1586
        %v1600 = vmul.f32 %v1565, %v1588
        %v1601 = vmul.f32 %v1566, %v1590
        %v1602 = vmul.f32 %v1567, %v1592
        %v1603 = vmul.f32 %v1568, %v1594
        %v1604 = vmul.f32 %v1569, %v1596
        %v1605 = vmul.f32 %v1570, %v1598
        %v1606 = vsub.f32 1.0, %v1599
        %v1607 = vsub.f32 1.0, %v1600
        %v1608 = vsub.f32 1.0, %v1601
        %v1609 = vsub.f32 1.0, %v1602
        %v1610 = vsub.f32 1.0, %v1603
        %v1611 = vsub.f32 1.0, %v1604
        %v1612 = vsub.f32 1.0, %v1605
        %vm1613 = vcmp.ge.f32.partialorder %v1375, 0.0
        %vm1614 = vcmp.ge.f32.partialorder %v1376, 0.0
        %vm1615 = vcmp.ge.f32.partialorder %v1377, 0.0
        %vm1616 = vcmp.ge.f32.partialorder %v1378, 0.0
        %vm1617 = vcmp.ge.f32.partialorder %v1379, 0.0
        %vm1618 = vcmp.ge.f32.partialorder %v1380, 0.0
        %vm1619 = vcmp.ge.f32.partialorder %v1381, 0.0
        %v1620 = vsub.f32 0.0, %v1606
        %v1621 = vsub.f32 0.0, %v1607
        %v1622 = vsub.f32 0.0, %v1608
        %v1623 = vsub.f32 0.0, %v1609
        %v1624 = vsub.f32 0.0, %v1610
        %v1625 = vsub.f32 0.0, %v1611
        %v1626 = vsub.f32 0.0, %v1612
        %v1627 = vsel %vm1613, %v1606, %v1620
        %v1628 = vsel %vm1614, %v1607, %v1621
        %v1629 = vsel %vm1615, %v1608, %v1622
        %v1630 = vsel %vm1616, %v1609, %v1623
        %v1631 = vsel %vm1617, %v1610, %v1624
        %v1632 = vsel %vm1618, %v1611, %v1625
        %v1633 = vsel %vm1619, %v1612, %v1626
        %v1634 = vadd.f32 %v1627, 1.0
        %v1635 = vadd.f32 %v1628, 1.0
        %v1636 = vadd.f32 %v1629, 1.0
        %v1637 = vadd.f32 %v1630, 1.0
        %v1638 = vadd.f32 %v1631, 1.0
        %v1639 = vadd.f32 %v1632, 1.0
        %v1640 = vadd.f32 %v1633, 1.0
        %v1641 = vmul.f32 %v1368, %v1634
        %v1642 = vmul.f32 %v1369, %v1635
        %v1643 = vmul.f32 %v1370, %v1636
        %v1644 = vmul.f32 %v1371, %v1637
        %v1645 = vmul.f32 %v1372, %v1638
        %v1646 = vmul.f32 %v1373, %v1639
        %v1647 = vmul.f32 %v1374, %v1640
        %1649 = vset.pattern.permute.xlu0 0
        %1650 = vperm.xlu0 %1649, %v689
        %v1651 = vpop.permute.xlu0 %1650
        %1654 = vset.pattern.permute.xlu0 0
        %1655 = vperm.xlu0 %1654, %v690
        %v1656 = vpop.permute.xlu0 %1655
        %1659 = vset.pattern.permute.xlu0 0
        %1660 = vperm.xlu0 %1659, %v691
        %v1661 = vpop.permute.xlu0 %1660
        %1664 = vset.pattern.permute.xlu0 0
        %1665 = vperm.xlu0 %1664, %v692
        %v1666 = vpop.permute.xlu0 %1665
        %1669 = vset.pattern.permute.xlu0 0
        %1670 = vperm.xlu0 %1669, %v693
        %v1671 = vpop.permute.xlu0 %1670
        %1674 = vset.pattern.permute.xlu0 0
        %1675 = vperm.xlu0 %1674, %v694
        %v1676 = vpop.permute.xlu0 %1675
        %1679 = vset.pattern.permute.xlu0 0
        %1680 = vperm.xlu0 %1679, %v695
        %v1681 = vpop.permute.xlu0 %1680
        %v1683 = vmul.f32 %v1641, %v1651
        %v1684 = vmul.f32 %v1642, %v1656
        %v1685 = vmul.f32 %v1643, %v1661
        %v1686 = vmul.f32 %v1644, %v1666
        %v1687 = vmul.f32 %v1645, %v1671
        %v1688 = vmul.f32 %v1646, %v1676
        %v1689 = vmul.f32 %v1647, %v1681
        %vm1690 = vcmask 31744
        %1691 = vst.msk [vmem:[#allocation3 + $0xb] sm:$0xff] %vm1690, %v1683
        %1692 = vst.msk [vmem:[#allocation3 + $0x13] sm:$0xff] %vm1690, %v1684
        %1693 = vst.msk [vmem:[#allocation3 + $0x1b] sm:$0xff] %vm1690, %v1685
        %1694 = vst.msk [vmem:[#allocation3 + $0x23] sm:$0xff] %vm1690, %v1686
        %1695 = vst.msk [vmem:[#allocation3 + $0x2b] sm:$0xff] %vm1690, %v1687
        %1696 = vst.msk [vmem:[#allocation3 + $0x33] sm:$0xff] %vm1690, %v1688
        %vm1697 = vcmask 25600
        %1698 = vst.msk [vmem:[#allocation3 + $0x3b] sm:$0x3] %vm1697, %v1689
        %v1699 = vld [vmem:[#allocation3] sm:$0xff]
        %v1700 = vld [vmem:[#allocation3 + $0x8] sm:$0xff]
        %v1701 = vld [vmem:[#allocation3 + $0x10] sm:$0xff]
        %v1702 = vld [vmem:[#allocation3 + $0x18] sm:$0xff]
        %v1703 = vld [vmem:[#allocation3 + $0x20] sm:$0xff]
        %v1704 = vld [vmem:[#allocation3 + $0x28] sm:$0xff]
        %v1705 = vld [vmem:[#allocation3 + $0x30] sm:$0x3]
        %v1706 = vld [vmem:[%s468] sm:$0xf]
        %v1707 = vld [vmem:[#allocation3 + $0x1] sm:$0xff]
        %v1708 = vld [vmem:[#allocation3 + $0x9] sm:$0xff]
        %v1709 = vld [vmem:[#allocation3 + $0x11] sm:$0xff]
        %v1710 = vld [vmem:[#allocation3 + $0x19] sm:$0xff]
        %v1711 = vld [vmem:[#allocation3 + $0x21] sm:$0xff]
        %v1712 = vld [vmem:[#allocation3 + $0x29] sm:$0xff]
        %v1713 = vld [vmem:[#allocation3 + $0x31] sm:$0x3]
        %s1714 = scalar_lea.vmem %s468, 4
        %v1715 = vld [vmem:[%s1714] sm:$0xf]
        %v1717 = vsel %vm1690, %v1707, 0
        %v1720 = vsel %vm1690, %v1708, 0
        %v1723 = vsel %vm1690, %v1709, 0
        %v1726 = vsel %vm1690, %v1710, 0
        %v1729 = vsel %vm1690, %v1711, 0
        %v1732 = vsel %vm1690, %v1712, 0
        %v1735 = vsel %vm1690, %v1713, 0
        %vm1737 = vcmask 1043456
        %v1739 = vsel %vm1737, %v1715, 0
        %1741 = vmatpush.msra.mxu0 0.0
        %1742 = vmatpush.msra.mxu0 0.0
        %1743 = vmatpush.msra.mxu0 0.0
        %1744 = vmatpush.msra.mxu0 0.0
        %1745 = vmatpush.msra.mxu0 0.0
        %1746 = vmatpush.msra.mxu0 0.0
        %1747 = vmatpush.msra.mxu0 0.0
        %1748 = vmatpush.msra.mxu0 0.0
        %1749 = vmatpush.msra.mxu0 0.0
        %1750 = vmatpush.msra.mxu0 0.0
        %1751 = vmatpush.msra.mxu0 0.0
        %1752 = vmatpush.msra.mxu0 0.0
        %1753 = vmatpush.msra.mxu0 0.0
        %1754 = vmatpush.msra.mxu0 0.0
        %1755 = vmatpush.msra.mxu0 0.0
        %1756 = vmatpush.msra.mxu0 %v1739
        %1757 = vmatmul.f32.gmra.mxu0 %v1717
        %v1758 = vpop.f32.mrf.mxu0
        %v1759 = vadd.f32 0.0, %v1758
        %1760 = vmatmul.f32.gmra.mxu0 %v1720
        %v1761 = vpop.f32.mrf.mxu0
        %v1762 = vadd.f32 0.0, %v1761
        %1763 = vmatmul.f32.gmra.mxu0 %v1723
        %v1764 = vpop.f32.mrf.mxu0
        %v1765 = vadd.f32 0.0, %v1764
        %1766 = vmatmul.f32.gmra.mxu0 %v1726
        %v1767 = vpop.f32.mrf.mxu0
        %v1768 = vadd.f32 0.0, %v1767
        %1769 = vmatmul.f32.gmra.mxu0 %v1729
        %v1770 = vpop.f32.mrf.mxu0
        %v1771 = vadd.f32 0.0, %v1770
        %1772 = vmatmul.f32.gmra.mxu0 %v1732
        %v1773 = vpop.f32.mrf.mxu0
        %v1774 = vadd.f32 0.0, %v1773
        %1775 = vmatmul.f32.gmra.mxu0 %v1735
        %v1776 = vpop.f32.mrf.mxu0
        %v1777 = vadd.f32 0.0, %v1776
        %1778 = vdwg.mxu0
        %v1780 = vsel %vm1690, %v1699, 0
        %v1783 = vsel %vm1690, %v1700, 0
        %v1786 = vsel %vm1690, %v1701, 0
        %v1789 = vsel %vm1690, %v1702, 0
        %v1792 = vsel %vm1690, %v1703, 0
        %v1795 = vsel %vm1690, %v1704, 0
        %v1798 = vsel %vm1690, %v1705, 0
        %v1801 = vsel %vm1737, %v1706, 0
        %1803 = vmatpush.msra.mxu0 0.0
        %1804 = vmatpush.msra.mxu0 0.0
        %1805 = vmatpush.msra.mxu0 0.0
        %1806 = vmatpush.msra.mxu0 0.0
        %1807 = vmatpush.msra.mxu0 0.0
        %1808 = vmatpush.msra.mxu0 0.0
        %1809 = vmatpush.msra.mxu0 0.0
        %1810 = vmatpush.msra.mxu0 0.0
        %1811 = vmatpush.msra.mxu0 0.0
        %1812 = vmatpush.msra.mxu0 0.0
        %1813 = vmatpush.msra.mxu0 0.0
        %1814 = vmatpush.msra.mxu0 0.0
        %1815 = vmatpush.msra.mxu0 0.0
        %1816 = vmatpush.msra.mxu0 0.0
        %1817 = vmatpush.msra.mxu0 0.0
        %1818 = vmatpush.msra.mxu0 %v1801
        %1819 = vmatmul.f32.gmra.mxu0 %v1780
        %v1820 = vpop.f32.mrf.mxu0
        %v1821 = vadd.f32 %v1759, %v1820
        %1822 = vmatmul.f32.gmra.mxu0 %v1783
        %v1823 = vpop.f32.mrf.mxu0
        %v1824 = vadd.f32 %v1762, %v1823
        %1825 = vmatmul.f32.gmra.mxu0 %v1786
        %v1826 = vpop.f32.mrf.mxu0
        %v1827 = vadd.f32 %v1765, %v1826
        %1828 = vmatmul.f32.gmra.mxu0 %v1789
        %v1829 = vpop.f32.mrf.mxu0
        %v1830 = vadd.f32 %v1768, %v1829
        %1831 = vmatmul.f32.gmra.mxu0 %v1792
        %v1832 = vpop.f32.mrf.mxu0
        %v1833 = vadd.f32 %v1771, %v1832
        %1834 = vmatmul.f32.gmra.mxu0 %v1795
        %v1835 = vpop.f32.mrf.mxu0
        %v1836 = vadd.f32 %v1774, %v1835
        %1837 = vmatmul.f32.gmra.mxu0 %v1798
        %v1838 = vpop.f32.mrf.mxu0
        %v1839 = vadd.f32 %v1777, %v1838
        %1840 = vdwg.mxu0
        %v1841 = vld [vmem:[#allocation3 + $0x2] sm:$0xff]
        %v1842 = vld [vmem:[#allocation3 + $0xa] sm:$0xff]
        %v1843 = vld [vmem:[#allocation3 + $0x12] sm:$0xff]
        %v1844 = vld [vmem:[#allocation3 + $0x1a] sm:$0xff]
        %v1845 = vld [vmem:[#allocation3 + $0x22] sm:$0xff]
        %v1846 = vld [vmem:[#allocation3 + $0x2a] sm:$0xff]
        %v1847 = vld [vmem:[#allocation3 + $0x32] sm:$0x3]
        %s1848 = scalar_lea.vmem %s468, 8
        %v1849 = vld [vmem:[%s1848] sm:$0xf]
        %v1851 = vsel %vm1690, %v1841, 0
        %v1854 = vsel %vm1690, %v1842, 0
        %v1857 = vsel %vm1690, %v1843, 0
        %v1860 = vsel %vm1690, %v1844, 0
        %v1863 = vsel %vm1690, %v1845, 0
        %v1866 = vsel %vm1690, %v1846, 0
        %v1869 = vsel %vm1690, %v1847, 0
        %v1872 = vsel %vm1737, %v1849, 0
        %1874 = vmatpush.msra.mxu0 0.0
        %1875 = vmatpush.msra.mxu0 0.0
        %1876 = vmatpush.msra.mxu0 0.0
        %1877 = vmatpush.msra.mxu0 0.0
        %1878 = vmatpush.msra.mxu0 0.0
        %1879 = vmatpush.msra.mxu0 0.0
        %1880 = vmatpush.msra.mxu0 0.0
        %1881 = vmatpush.msra.mxu0 0.0
        %1882 = vmatpush.msra.mxu0 0.0
        %1883 = vmatpush.msra.mxu0 0.0
        %1884 = vmatpush.msra.mxu0 0.0
        %1885 = vmatpush.msra.mxu0 0.0
        %1886 = vmatpush.msra.mxu0 0.0
        %1887 = vmatpush.msra.mxu0 0.0
        %1888 = vmatpush.msra.mxu0 0.0
        %1889 = vmatpush.msra.mxu0 %v1872
        %1890 = vmatmul.f32.gmra.mxu0 %v1851
        %v1891 = vpop.f32.mrf.mxu0
        %v1892 = vadd.f32 0.0, %v1891
        %1893 = vmatmul.f32.gmra.mxu0 %v1854
        %v1894 = vpop.f32.mrf.mxu0
        %v1895 = vadd.f32 0.0, %v1894
        %1896 = vmatmul.f32.gmra.mxu0 %v1857
        %v1897 = vpop.f32.mrf.mxu0
        %v1898 = vadd.f32 0.0, %v1897
        %1899 = vmatmul.f32.gmra.mxu0 %v1860
        %v1900 = vpop.f32.mrf.mxu0
        %v1901 = vadd.f32 0.0, %v1900
        %1902 = vmatmul.f32.gmra.mxu0 %v1863
        %v1903 = vpop.f32.mrf.mxu0
        %v1904 = vadd.f32 0.0, %v1903
        %1905 = vmatmul.f32.gmra.mxu0 %v1866
        %v1906 = vpop.f32.mrf.mxu0
        %v1907 = vadd.f32 0.0, %v1906
        %1908 = vmatmul.f32.gmra.mxu0 %v1869
        %v1909 = vpop.f32.mrf.mxu0
        %v1910 = vadd.f32 0.0, %v1909
        %1911 = vdwg.mxu0
        %v1912 = vadd.f32 %v1821, %v1892
        %v1913 = vadd.f32 %v1824, %v1895
        %v1914 = vadd.f32 %v1827, %v1898
        %v1915 = vadd.f32 %v1830, %v1901
        %v1916 = vadd.f32 %v1833, %v1904
        %v1917 = vadd.f32 %v1836, %v1907
        %v1918 = vadd.f32 %v1839, %v1910
        %v1919 = vld [vmem:[#allocation3 + $0xa] sm:$0xff]
        %v1920 = vld [vmem:[#allocation3 + $0x12] sm:$0xff]
        %v1921 = vld [vmem:[#allocation3 + $0x1a] sm:$0xff]
        %v1922 = vld [vmem:[#allocation3 + $0x22] sm:$0xff]
        %v1923 = vld [vmem:[#allocation3 + $0x2a] sm:$0xff]
        %v1924 = vld [vmem:[#allocation3 + $0x32] sm:$0xff]
        %v1925 = vld [vmem:[#allocation3 + $0x3a] sm:$0x3]
        %s1926 = scalar_lea.vmem %s468, 12
        %v1927 = vld [vmem:[%s1926] sm:$0xf]
        %v1929 = vsel %vm1690, %v1919, 0
        %v1932 = vsel %vm1690, %v1920, 0
        %v1935 = vsel %vm1690, %v1921, 0
        %v1938 = vsel %vm1690, %v1922, 0
        %v1941 = vsel %vm1690, %v1923, 0
        %v1944 = vsel %vm1690, %v1924, 0
        %v1947 = vsel %vm1690, %v1925, 0
        %v1950 = vsel %vm1737, %v1927, 0
        %1952 = vmatpush.msra.mxu0 0.0
        %1953 = vmatpush.msra.mxu0 0.0
        %1954 = vmatpush.msra.mxu0 0.0
        %1955 = vmatpush.msra.mxu0 0.0
        %1956 = vmatpush.msra.mxu0 0.0
        %1957 = vmatpush.msra.mxu0 0.0
        %1958 = vmatpush.msra.mxu0 0.0
        %1959 = vmatpush.msra.mxu0 0.0
        %1960 = vmatpush.msra.mxu0 0.0
        %1961 = vmatpush.msra.mxu0 0.0
        %1962 = vmatpush.msra.mxu0 0.0
        %1963 = vmatpush.msra.mxu0 0.0
        %1964 = vmatpush.msra.mxu0 0.0
        %1965 = vmatpush.msra.mxu0 0.0
        %1966 = vmatpush.msra.mxu0 0.0
        %1967 = vmatpush.msra.mxu0 %v1950
        %1968 = vmatmul.f32.gmra.mxu0 %v1929
        %v1969 = vpop.f32.mrf.mxu0
        %v1970 = vadd.f32 0.0, %v1969
        %1971 = vmatmul.f32.gmra.mxu0 %v1932
        %v1972 = vpop.f32.mrf.mxu0
        %v1973 = vadd.f32 0.0, %v1972
        %1974 = vmatmul.f32.gmra.mxu0 %v1935
        %v1975 = vpop.f32.mrf.mxu0
        %v1976 = vadd.f32 0.0, %v1975
        %1977 = vmatmul.f32.gmra.mxu0 %v1938
        %v1978 = vpop.f32.mrf.mxu0
        %v1979 = vadd.f32 0.0, %v1978
        %1980 = vmatmul.f32.gmra.mxu0 %v1941
        %v1981 = vpop.f32.mrf.mxu0
        %v1982 = vadd.f32 0.0, %v1981
        %1983 = vmatmul.f32.gmra.mxu0 %v1944
        %v1984 = vpop.f32.mrf.mxu0
        %v1985 = vadd.f32 0.0, %v1984
        %1986 = vmatmul.f32.gmra.mxu0 %v1947
        %v1987 = vpop.f32.mrf.mxu0
        %v1988 = vadd.f32 0.0, %v1987
        %1989 = vdwg.mxu0
        %v1990 = vadd.f32 %v1912, %v1970
        %v1991 = vadd.f32 %v1913, %v1973
        %v1992 = vadd.f32 %v1914, %v1976
        %v1993 = vadd.f32 %v1915, %v1979
        %v1994 = vadd.f32 %v1916, %v1982
        %v1995 = vadd.f32 %v1917, %v1985
        %v1996 = vadd.f32 %v1918, %v1988
        %v1997 = vld [vmem:[#allocation3 + $0xb] sm:$0xff]
        %v1998 = vld [vmem:[#allocation3 + $0x13] sm:$0xff]
        %v1999 = vld [vmem:[#allocation3 + $0x1b] sm:$0xff]
        %v2000 = vld [vmem:[#allocation3 + $0x23] sm:$0xff]
        %v2001 = vld [vmem:[#allocation3 + $0x2b] sm:$0xff]
        %v2002 = vld [vmem:[#allocation3 + $0x33] sm:$0xff]
        %v2003 = vld [vmem:[#allocation3 + $0x3b] sm:$0x3]
        %s2004 = scalar_lea.vmem %s468, 16
        %v2005 = vld [vmem:[%s2004] sm:$0xf]
        %v2007 = vsel %vm1690, %v1997, 0
        %v2010 = vsel %vm1690, %v1998, 0
        %v2013 = vsel %vm1690, %v1999, 0
        %v2016 = vsel %vm1690, %v2000, 0
        %v2019 = vsel %vm1690, %v2001, 0
        %v2022 = vsel %vm1690, %v2002, 0
        %v2025 = vsel %vm1690, %v2003, 0
        %v2028 = vsel %vm1737, %v2005, 0
        %2030 = vmatpush.msra.mxu0 0.0
        %2031 = vmatpush.msra.mxu0 0.0
        %2032 = vmatpush.msra.mxu0 0.0
        %2033 = vmatpush.msra.mxu0 0.0
        %2034 = vmatpush.msra.mxu0 0.0
        %2035 = vmatpush.msra.mxu0 0.0
        %2036 = vmatpush.msra.mxu0 0.0
        %2037 = vmatpush.msra.mxu0 0.0
        %2038 = vmatpush.msra.mxu0 0.0
        %2039 = vmatpush.msra.mxu0 0.0
        %2040 = vmatpush.msra.mxu0 0.0
        %2041 = vmatpush.msra.mxu0 0.0
        %2042 = vmatpush.msra.mxu0 0.0
        %2043 = vmatpush.msra.mxu0 0.0
        %2044 = vmatpush.msra.mxu0 0.0
        %2045 = vmatpush.msra.mxu0 %v2028
        %2046 = vmatmul.f32.gmra.mxu0 %v2007
        %v2047 = vpop.f32.mrf.mxu0
        %v2048 = vadd.f32 0.0, %v2047
        %2049 = vmatmul.f32.gmra.mxu0 %v2010
        %v2050 = vpop.f32.mrf.mxu0
        %v2051 = vadd.f32 0.0, %v2050
        %2052 = vmatmul.f32.gmra.mxu0 %v2013
        %v2053 = vpop.f32.mrf.mxu0
        %v2054 = vadd.f32 0.0, %v2053
        %2055 = vmatmul.f32.gmra.mxu0 %v2016
        %v2056 = vpop.f32.mrf.mxu0
        %v2057 = vadd.f32 0.0, %v2056
        %2058 = vmatmul.f32.gmra.mxu0 %v2019
        %v2059 = vpop.f32.mrf.mxu0
        %v2060 = vadd.f32 0.0, %v2059
        %2061 = vmatmul.f32.gmra.mxu0 %v2022
        %v2062 = vpop.f32.mrf.mxu0
        %v2063 = vadd.f32 0.0, %v2062
        %2064 = vmatmul.f32.gmra.mxu0 %v2025
        %v2065 = vpop.f32.mrf.mxu0
        %v2066 = vadd.f32 0.0, %v2065
        %2067 = vdwg.mxu0
        %v2068 = vadd.f32 %v1990, %v2048
        %v2069 = vadd.f32 %v1991, %v2051
        %v2070 = vadd.f32 %v1992, %v2054
        %v2071 = vadd.f32 %v1993, %v2057
        %v2072 = vadd.f32 %v1994, %v2060
        %v2073 = vadd.f32 %v1995, %v2063
        %v2074 = vadd.f32 %v1996, %v2066
        %v2075 = vld [vmem:[#allocation3 + $0xc] sm:$0xff]
        %v2076 = vld [vmem:[#allocation3 + $0x14] sm:$0xff]
        %v2077 = vld [vmem:[#allocation3 + $0x1c] sm:$0xff]
        %v2078 = vld [vmem:[#allocation3 + $0x24] sm:$0xff]
        %v2079 = vld [vmem:[#allocation3 + $0x2c] sm:$0xff]
        %v2080 = vld [vmem:[#allocation3 + $0x34] sm:$0xff]
        %v2081 = vld [vmem:[#allocation3 + $0x3c] sm:$0x3]
        %s2082 = scalar_lea.vmem %s468, 20
        %v2083 = vld [vmem:[%s2082] sm:$0xf]
        %v2085 = vsel %vm1690, %v2075, 0
        %v2088 = vsel %vm1690, %v2076, 0
        %v2091 = vsel %vm1690, %v2077, 0
        %v2094 = vsel %vm1690, %v2078, 0
        %v2097 = vsel %vm1690, %v2079, 0
        %v2100 = vsel %vm1690, %v2080, 0
        %v2103 = vsel %vm1690, %v2081, 0
        %v2106 = vsel %vm1737, %v2083, 0
        %2108 = vmatpush.msra.mxu0 0.0
        %2109 = vmatpush.msra.mxu0 0.0
        %2110 = vmatpush.msra.mxu0 0.0
        %2111 = vmatpush.msra.mxu0 0.0
        %2112 = vmatpush.msra.mxu0 0.0
        %2113 = vmatpush.msra.mxu0 0.0
        %2114 = vmatpush.msra.mxu0 0.0
        %2115 = vmatpush.msra.mxu0 0.0
        %2116 = vmatpush.msra.mxu0 0.0
        %2117 = vmatpush.msra.mxu0 0.0
        %2118 = vmatpush.msra.mxu0 0.0
        %2119 = vmatpush.msra.mxu0 0.0
        %2120 = vmatpush.msra.mxu0 0.0
        %2121 = vmatpush.msra.mxu0 0.0
        %2122 = vmatpush.msra.mxu0 0.0
        %2123 = vmatpush.msra.mxu0 %v2106
        %2124 = vmatmul.f32.gmra.mxu0 %v2085
        %v2125 = vpop.f32.mrf.mxu0
        %v2126 = vadd.f32 0.0, %v2125
        %2127 = vmatmul.f32.gmra.mxu0 %v2088
        %v2128 = vpop.f32.mrf.mxu0
        %v2129 = vadd.f32 0.0, %v2128
        %2130 = vmatmul.f32.gmra.mxu0 %v2091
        %v2131 = vpop.f32.mrf.mxu0
        %v2132 = vadd.f32 0.0, %v2131
        %2133 = vmatmul.f32.gmra.mxu0 %v2094
        %v2134 = vpop.f32.mrf.mxu0
        %v2135 = vadd.f32 0.0, %v2134
        %2136 = vmatmul.f32.gmra.mxu0 %v2097
        %v2137 = vpop.f32.mrf.mxu0
        %v2138 = vadd.f32 0.0, %v2137
        %2139 = vmatmul.f32.gmra.mxu0 %v2100
        %v2140 = vpop.f32.mrf.mxu0
        %v2141 = vadd.f32 0.0, %v2140
        %2142 = vmatmul.f32.gmra.mxu0 %v2103
        %v2143 = vpop.f32.mrf.mxu0
        %v2144 = vadd.f32 0.0, %v2143
        %2145 = vdwg.mxu0
        %v2146 = vadd.f32 %v2068, %v2126
        %v2147 = vadd.f32 %v2069, %v2129
        %v2148 = vadd.f32 %v2070, %v2132
        %v2149 = vadd.f32 %v2071, %v2135
        %v2150 = vadd.f32 %v2072, %v2138
        %v2151 = vadd.f32 %v2073, %v2141
        %v2152 = vadd.f32 %v2074, %v2144
        %v2153 = vld [vmem:[#allocation3 + $0x14] sm:$0xff]
        %v2154 = vld [vmem:[#allocation3 + $0x1c] sm:$0xff]
        %v2155 = vld [vmem:[#allocation3 + $0x24] sm:$0xff]
        %v2156 = vld [vmem:[#allocation3 + $0x2c] sm:$0xff]
        %v2157 = vld [vmem:[#allocation3 + $0x34] sm:$0xff]
        %v2158 = vld [vmem:[#allocation3 + $0x3c] sm:$0xff]
        %v2159 = vld [vmem:[#allocation3 + $0x44] sm:$0x3]
        %s2160 = scalar_lea.vmem %s468, 24
        %v2161 = vld [vmem:[%s2160] sm:$0xf]
        %v2163 = vsel %vm1690, %v2153, 0
        %v2166 = vsel %vm1690, %v2154, 0
        %v2169 = vsel %vm1690, %v2155, 0
        %v2172 = vsel %vm1690, %v2156, 0
        %v2175 = vsel %vm1690, %v2157, 0
        %v2178 = vsel %vm1690, %v2158, 0
        %v2181 = vsel %vm1690, %v2159, 0
        %v2184 = vsel %vm1737, %v2161, 0
        %2186 = vmatpush.msra.mxu0 0.0
        %2187 = vmatpush.msra.mxu0 0.0
        %2188 = vmatpush.msra.mxu0 0.0
        %2189 = vmatpush.msra.mxu0 0.0
        %2190 = vmatpush.msra.mxu0 0.0
        %2191 = vmatpush.msra.mxu0 0.0
        %2192 = vmatpush.msra.mxu0 0.0
        %2193 = vmatpush.msra.mxu0 0.0
        %2194 = vmatpush.msra.mxu0 0.0
        %2195 = vmatpush.msra.mxu0 0.0
        %2196 = vmatpush.msra.mxu0 0.0
        %2197 = vmatpush.msra.mxu0 0.0
        %2198 = vmatpush.msra.mxu0 0.0
        %2199 = vmatpush.msra.mxu0 0.0
        %2200 = vmatpush.msra.mxu0 0.0
        %2201 = vmatpush.msra.mxu0 %v2184
        %2202 = vmatmul.f32.gmra.mxu0 %v2163
        %v2203 = vpop.f32.mrf.mxu0
        %v2204 = vadd.f32 0.0, %v2203
        %2205 = vmatmul.f32.gmra.mxu0 %v2166
        %v2206 = vpop.f32.mrf.mxu0
        %v2207 = vadd.f32 0.0, %v2206
        %2208 = vmatmul.f32.gmra.mxu0 %v2169
        %v2209 = vpop.f32.mrf.mxu0
        %v2210 = vadd.f32 0.0, %v2209
        %2211 = vmatmul.f32.gmra.mxu0 %v2172
        %v2212 = vpop.f32.mrf.mxu0
        %v2213 = vadd.f32 0.0, %v2212
        %2214 = vmatmul.f32.gmra.mxu0 %v2175
        %v2215 = vpop.f32.mrf.mxu0
        %v2216 = vadd.f32 0.0, %v2215
        %2217 = vmatmul.f32.gmra.mxu0 %v2178
        %v2218 = vpop.f32.mrf.mxu0
        %v2219 = vadd.f32 0.0, %v2218
        %2220 = vmatmul.f32.gmra.mxu0 %v2181
        %v2221 = vpop.f32.mrf.mxu0
        %v2222 = vadd.f32 0.0, %v2221
        %2223 = vdwg.mxu0
        %v2224 = vadd.f32 %v2146, %v2204
        %v2225 = vadd.f32 %v2147, %v2207
        %v2226 = vadd.f32 %v2148, %v2210
        %v2227 = vadd.f32 %v2149, %v2213
        %v2228 = vadd.f32 %v2150, %v2216
        %v2229 = vadd.f32 %v2151, %v2219
        %v2230 = vadd.f32 %v2152, %v2222
        %v2231 = vld [vmem:[#allocation3 + $0x15] sm:$0xff]
        %v2232 = vld [vmem:[#allocation3 + $0x1d] sm:$0xff]
        %v2233 = vld [vmem:[#allocation3 + $0x25] sm:$0xff]
        %v2234 = vld [vmem:[#allocation3 + $0x2d] sm:$0xff]
        %v2235 = vld [vmem:[#allocation3 + $0x35] sm:$0xff]
        %v2236 = vld [vmem:[#allocation3 + $0x3d] sm:$0xff]
        %v2237 = vld [vmem:[#allocation3 + $0x45] sm:$0x3]
        %s2238 = scalar_lea.vmem %s468, 28
        %v2239 = vld [vmem:[%s2238] sm:$0xf]
        %v2241 = vsel %vm1690, %v2231, 0
        %v2244 = vsel %vm1690, %v2232, 0
        %v2247 = vsel %vm1690, %v2233, 0
        %v2250 = vsel %vm1690, %v2234, 0
        %v2253 = vsel %vm1690, %v2235, 0
        %v2256 = vsel %vm1690, %v2236, 0
        %v2259 = vsel %vm1690, %v2237, 0
        %v2262 = vsel %vm1737, %v2239, 0
        %2264 = vmatpush.msra.mxu0 0.0
        %2265 = vmatpush.msra.mxu0 0.0
        %2266 = vmatpush.msra.mxu0 0.0
        %2267 = vmatpush.msra.mxu0 0.0
        %2268 = vmatpush.msra.mxu0 0.0
        %2269 = vmatpush.msra.mxu0 0.0
        %2270 = vmatpush.msra.mxu0 0.0
        %2271 = vmatpush.msra.mxu0 0.0
        %2272 = vmatpush.msra.mxu0 0.0
        %2273 = vmatpush.msra.mxu0 0.0
        %2274 = vmatpush.msra.mxu0 0.0
        %2275 = vmatpush.msra.mxu0 0.0
        %2276 = vmatpush.msra.mxu0 0.0
        %2277 = vmatpush.msra.mxu0 0.0
        %2278 = vmatpush.msra.mxu0 0.0
        %2279 = vmatpush.msra.mxu0 %v2262
        %2280 = vmatmul.f32.gmra.mxu0 %v2241
        %v2281 = vpop.f32.mrf.mxu0
        %v2282 = vadd.f32 0.0, %v2281
        %2283 = vmatmul.f32.gmra.mxu0 %v2244
        %v2284 = vpop.f32.mrf.mxu0
        %v2285 = vadd.f32 0.0, %v2284
        %2286 = vmatmul.f32.gmra.mxu0 %v2247
        %v2287 = vpop.f32.mrf.mxu0
        %v2288 = vadd.f32 0.0, %v2287
        %2289 = vmatmul.f32.gmra.mxu0 %v2250
        %v2290 = vpop.f32.mrf.mxu0
        %v2291 = vadd.f32 0.0, %v2290
        %2292 = vmatmul.f32.gmra.mxu0 %v2253
        %v2293 = vpop.f32.mrf.mxu0
        %v2294 = vadd.f32 0.0, %v2293
        %2295 = vmatmul.f32.gmra.mxu0 %v2256
        %v2296 = vpop.f32.mrf.mxu0
        %v2297 = vadd.f32 0.0, %v2296
        %2298 = vmatmul.f32.gmra.mxu0 %v2259
        %v2299 = vpop.f32.mrf.mxu0
        %v2300 = vadd.f32 0.0, %v2299
        %2301 = vdwg.mxu0
        %v2302 = vadd.f32 %v2224, %v2282
        %v2303 = vadd.f32 %v2225, %v2285
        %v2304 = vadd.f32 %v2226, %v2288
        %v2305 = vadd.f32 %v2227, %v2291
        %v2306 = vadd.f32 %v2228, %v2294
        %v2307 = vadd.f32 %v2229, %v2297
        %v2308 = vadd.f32 %v2230, %v2300
        %v2309 = vld [vmem:[#allocation3 + $0x16] sm:$0xff]
        %v2310 = vld [vmem:[#allocation3 + $0x1e] sm:$0xff]
        %v2311 = vld [vmem:[#allocation3 + $0x26] sm:$0xff]
        %v2312 = vld [vmem:[#allocation3 + $0x2e] sm:$0xff]
        %v2313 = vld [vmem:[#allocation3 + $0x36] sm:$0xff]
        %v2314 = vld [vmem:[#allocation3 + $0x3e] sm:$0xff]
        %v2315 = vld [vmem:[#allocation3 + $0x46] sm:$0x3]
        %s2316 = scalar_lea.vmem %s468, 32
        %v2317 = vld [vmem:[%s2316] sm:$0xf]
        %v2319 = vsel %vm1690, %v2309, 0
        %v2322 = vsel %vm1690, %v2310, 0
        %v2325 = vsel %vm1690, %v2311, 0
        %v2328 = vsel %vm1690, %v2312, 0
        %v2331 = vsel %vm1690, %v2313, 0
        %v2334 = vsel %vm1690, %v2314, 0
        %v2337 = vsel %vm1690, %v2315, 0
        %v2340 = vsel %vm1737, %v2317, 0
        %2342 = vmatpush.msra.mxu0 0.0
        %2343 = vmatpush.msra.mxu0 0.0
        %2344 = vmatpush.msra.mxu0 0.0
        %2345 = vmatpush.msra.mxu0 0.0
        %2346 = vmatpush.msra.mxu0 0.0
        %2347 = vmatpush.msra.mxu0 0.0
        %2348 = vmatpush.msra.mxu0 0.0
        %2349 = vmatpush.msra.mxu0 0.0
        %2350 = vmatpush.msra.mxu0 0.0
        %2351 = vmatpush.msra.mxu0 0.0
        %2352 = vmatpush.msra.mxu0 0.0
        %2353 = vmatpush.msra.mxu0 0.0
        %2354 = vmatpush.msra.mxu0 0.0
        %2355 = vmatpush.msra.mxu0 0.0
        %2356 = vmatpush.msra.mxu0 0.0
        %2357 = vmatpush.msra.mxu0 %v2340
        %2358 = vmatmul.f32.gmra.mxu0 %v2319
        %v2359 = vpop.f32.mrf.mxu0
        %v2360 = vadd.f32 0.0, %v2359
        %2361 = vmatmul.f32.gmra.mxu0 %v2322
        %v2362 = vpop.f32.mrf.mxu0
        %v2363 = vadd.f32 0.0, %v2362
        %2364 = vmatmul.f32.gmra.mxu0 %v2325
        %v2365 = vpop.f32.mrf.mxu0
        %v2366 = vadd.f32 0.0, %v2365
        %2367 = vmatmul.f32.gmra.mxu0 %v2328
        %v2368 = vpop.f32.mrf.mxu0
        %v2369 = vadd.f32 0.0, %v2368
        %2370 = vmatmul.f32.gmra.mxu0 %v2331
        %v2371 = vpop.f32.mrf.mxu0
        %v2372 = vadd.f32 0.0, %v2371
        %2373 = vmatmul.f32.gmra.mxu0 %v2334
        %v2374 = vpop.f32.mrf.mxu0
        %v2375 = vadd.f32 0.0, %v2374
        %2376 = vmatmul.f32.gmra.mxu0 %v2337
        %v2377 = vpop.f32.mrf.mxu0
        %v2378 = vadd.f32 0.0, %v2377
        %2379 = vdwg.mxu0
        %v2380 = vadd.f32 %v2302, %v2360
        %v2381 = vadd.f32 %v2303, %v2363
        %v2382 = vadd.f32 %v2304, %v2366
        %v2383 = vadd.f32 %v2305, %v2369
        %v2384 = vadd.f32 %v2306, %v2372
        %v2385 = vadd.f32 %v2307, %v2375
        %v2386 = vadd.f32 %v2308, %v2378
        %v2387 = vld [vmem:[%s471] sm:$0x1]
        %v2389 = vperm.slane %v2387, 0
        %v2391 = vadd.f32 %v2380, %v2389
        %v2392 = vadd.f32 %v2381, %v2389
        %v2393 = vadd.f32 %v2382, %v2389
        %v2394 = vadd.f32 %v2383, %v2389
        %v2395 = vadd.f32 %v2384, %v2389
        %v2396 = vadd.f32 %v2385, %v2389
        %v2397 = vadd.f32 %v2386, %v2389
        %v2398 = vmul.f32 %v2391, 0.5
        %v2399 = vmul.f32 %v2392, 0.5
        %v2400 = vmul.f32 %v2393, 0.5
        %v2401 = vmul.f32 %v2394, 0.5
        %v2402 = vmul.f32 %v2395, 0.5
        %v2403 = vmul.f32 %v2396, 0.5
        %v2404 = vmul.f32 %v2397, 0.5
        %v2405 = vmul.f32 %v2391, 0.70710677
        %v2406 = vmul.f32 %v2392, 0.70710677
        %v2407 = vmul.f32 %v2393, 0.70710677
        %v2408 = vmul.f32 %v2394, 0.70710677
        %v2409 = vmul.f32 %v2395, 0.70710677
        %v2410 = vmul.f32 %v2396, 0.70710677
        %v2411 = vmul.f32 %v2397, 0.70710677
        %v2412 = vand.u32 2147483647, %v2405
        %v2413 = vand.u32 2147483647, %v2406
        %v2414 = vand.u32 2147483647, %v2407
        %v2415 = vand.u32 2147483647, %v2408
        %v2416 = vand.u32 2147483647, %v2409
        %v2417 = vand.u32 2147483647, %v2410
        %v2418 = vand.u32 2147483647, %v2411
        %v2419 = vmul.f32 %v2412, 0.3275911
        %v2420 = vmul.f32 %v2413, 0.3275911
        %v2421 = vmul.f32 %v2414, 0.3275911
        %v2422 = vmul.f32 %v2415, 0.3275911
        %v2423 = vmul.f32 %v2416, 0.3275911
        %v2424 = vmul.f32 %v2417, 0.3275911
        %v2425 = vmul.f32 %v2418, 0.3275911
        %v2426 = vadd.f32 %v2419, 1.0
        %v2427 = vadd.f32 %v2420, 1.0
        %v2428 = vadd.f32 %v2421, 1.0
        %v2429 = vadd.f32 %v2422, 1.0
        %v2430 = vadd.f32 %v2423, 1.0
        %v2431 = vadd.f32 %v2424, 1.0
        %v2432 = vadd.f32 %v2425, 1.0
        %v2433 = vrcp.pop %v2426
        %v2434 = vmul.f32 %v2426, %v2433
        %v2435 = vsub.f32 1.0, %v2434
        %v2436 = vmul.f32 %v2433, %v2435
        %v2437 = vadd.f32 %v2433, %v2436
        %vm2438 = vweird.f32 %v2426
        %vm2439 = vweird.f32 %v2433
        %vm2440 = vmor %vm2438, %vm2439
        %v2441 = vsel %vm2440, %v2433, %v2437
        %v2442 = vand.u32 2147483647, %v2426
        %vm2443 = vcmp.eq.f32.partialorder %v2442, 8.507059e+37
        %v2444 = vand.u32 %v2426, 2147483648
        %v2445 = vor.u32 1.1754944e-38, %v2444
        %v2446 = vsel %vm2443, %v2445, %v2441
        %v2447 = vmul.f32 1.0, %v2446
        %v2448 = vrcp.pop %v2427
        %v2449 = vmul.f32 %v2427, %v2448
        %v2450 = vsub.f32 1.0, %v2449
        %v2451 = vmul.f32 %v2448, %v2450
        %v2452 = vadd.f32 %v2448, %v2451
        %vm2453 = vweird.f32 %v2427
        %vm2454 = vweird.f32 %v2448
        %vm2455 = vmor %vm2453, %vm2454
        %v2456 = vsel %vm2455, %v2448, %v2452
        %v2457 = vand.u32 2147483647, %v2427
        %vm2458 = vcmp.eq.f32.partialorder %v2457, 8.507059e+37
        %v2459 = vand.u32 %v2427, 2147483648
        %v2460 = vor.u32 1.1754944e-38, %v2459
        %v2461 = vsel %vm2458, %v2460, %v2456
        %v2462 = vmul.f32 1.0, %v2461
        %v2463 = vrcp.pop %v2428
        %v2464 = vmul.f32 %v2428, %v2463
        %v2465 = vsub.f32 1.0, %v2464
        %v2466 = vmul.f32 %v2463, %v2465
        %v2467 = vadd.f32 %v2463, %v2466
        %vm2468 = vweird.f32 %v2428
        %vm2469 = vweird.f32 %v2463
        %vm2470 = vmor %vm2468, %vm2469
        %v2471 = vsel %vm2470, %v2463, %v2467
        %v2472 = vand.u32 2147483647, %v2428
        %vm2473 = vcmp.eq.f32.partialorder %v2472, 8.507059e+37
        %v2474 = vand.u32 %v2428, 2147483648
        %v2475 = vor.u32 1.1754944e-38, %v2474
        %v2476 = vsel %vm2473, %v2475, %v2471
        %v2477 = vmul.f32 1.0, %v2476
        %v2478 = vrcp.pop %v2429
        %v2479 = vmul.f32 %v2429, %v2478
        %v2480 = vsub.f32 1.0, %v2479
        %v2481 = vmul.f32 %v2478, %v2480
        %v2482 = vadd.f32 %v2478, %v2481
        %vm2483 = vweird.f32 %v2429
        %vm2484 = vweird.f32 %v2478
        %vm2485 = vmor %vm2483, %vm2484
        %v2486 = vsel %vm2485, %v2478, %v2482
        %v2487 = vand.u32 2147483647, %v2429
        %vm2488 = vcmp.eq.f32.partialorder %v2487, 8.507059e+37
        %v2489 = vand.u32 %v2429, 2147483648
        %v2490 = vor.u32 1.1754944e-38, %v2489
        %v2491 = vsel %vm2488, %v2490, %v2486
        %v2492 = vmul.f32 1.0, %v2491
        %v2493 = vrcp.pop %v2430
        %v2494 = vmul.f32 %v2430, %v2493
        %v2495 = vsub.f32 1.0, %v2494
        %v2496 = vmul.f32 %v2493, %v2495
        %v2497 = vadd.f32 %v2493, %v2496
        %vm2498 = vweird.f32 %v2430
        %vm2499 = vweird.f32 %v2493
        %vm2500 = vmor %vm2498, %vm2499
        %v2501 = vsel %vm2500, %v2493, %v2497
        %v2502 = vand.u32 2147483647, %v2430
        %vm2503 = vcmp.eq.f32.partialorder %v2502, 8.507059e+37
        %v2504 = vand.u32 %v2430, 2147483648
        %v2505 = vor.u32 1.1754944e-38, %v2504
        %v2506 = vsel %vm2503, %v2505, %v2501
        %v2507 = vmul.f32 1.0, %v2506
        %v2508 = vrcp.pop %v2431
        %v2509 = vmul.f32 %v2431, %v2508
        %v2510 = vsub.f32 1.0, %v2509
        %v2511 = vmul.f32 %v2508, %v2510
        %v2512 = vadd.f32 %v2508, %v2511
        %vm2513 = vweird.f32 %v2431
        %vm2514 = vweird.f32 %v2508
        %vm2515 = vmor %vm2513, %vm2514
        %v2516 = vsel %vm2515, %v2508, %v2512
        %v2517 = vand.u32 2147483647, %v2431
        %vm2518 = vcmp.eq.f32.partialorder %v2517, 8.507059e+37
        %v2519 = vand.u32 %v2431, 2147483648
        %v2520 = vor.u32 1.1754944e-38, %v2519
        %v2521 = vsel %vm2518, %v2520, %v2516
        %v2522 = vmul.f32 1.0, %v2521
        %v2523 = vrcp.pop %v2432
        %v2524 = vmul.f32 %v2432, %v2523
        %v2525 = vsub.f32 1.0, %v2524
        %v2526 = vmul.f32 %v2523, %v2525
        %v2527 = vadd.f32 %v2523, %v2526
        %vm2528 = vweird.f32 %v2432
        %vm2529 = vweird.f32 %v2523
        %vm2530 = vmor %vm2528, %vm2529
        %v2531 = vsel %vm2530, %v2523, %v2527
        %v2532 = vand.u32 2147483647, %v2432
        %vm2533 = vcmp.eq.f32.partialorder %v2532, 8.507059e+37
        %v2534 = vand.u32 %v2432, 2147483648
        %v2535 = vor.u32 1.1754944e-38, %v2534
        %v2536 = vsel %vm2533, %v2535, %v2531
        %v2537 = vmul.f32 1.0, %v2536
        %v2538 = vmul.f32 %v2447, 1.0614054
        %v2539 = vmul.f32 %v2462, 1.0614054
        %v2540 = vmul.f32 %v2477, 1.0614054
        %v2541 = vmul.f32 %v2492, 1.0614054
        %v2542 = vmul.f32 %v2507, 1.0614054
        %v2543 = vmul.f32 %v2522, 1.0614054
        %v2544 = vmul.f32 %v2537, 1.0614054
        %v2545 = vadd.f32 %v2538, -1.4531521
        %v2546 = vadd.f32 %v2539, -1.4531521
        %v2547 = vadd.f32 %v2540, -1.4531521
        %v2548 = vadd.f32 %v2541, -1.4531521
        %v2549 = vadd.f32 %v2542, -1.4531521
        %v2550 = vadd.f32 %v2543, -1.4531521
        %v2551 = vadd.f32 %v2544, -1.4531521
        %v2552 = vmul.f32 %v2545, %v2447
        %v2553 = vmul.f32 %v2546, %v2462
        %v2554 = vmul.f32 %v2547, %v2477
        %v2555 = vmul.f32 %v2548, %v2492
        %v2556 = vmul.f32 %v2549, %v2507
        %v2557 = vmul.f32 %v2550, %v2522
        %v2558 = vmul.f32 %v2551, %v2537
        %v2559 = vadd.f32 %v2552, 1.4214138
        %v2560 = vadd.f32 %v2553, 1.4214138
        %v2561 = vadd.f32 %v2554, 1.4214138
        %v2562 = vadd.f32 %v2555, 1.4214138
        %v2563 = vadd.f32 %v2556, 1.4214138
        %v2564 = vadd.f32 %v2557, 1.4214138
        %v2565 = vadd.f32 %v2558, 1.4214138
        %v2566 = vmul.f32 %v2559, %v2447
        %v2567 = vmul.f32 %v2560, %v2462
        %v2568 = vmul.f32 %v2561, %v2477
        %v2569 = vmul.f32 %v2562, %v2492
        %v2570 = vmul.f32 %v2563, %v2507
        %v2571 = vmul.f32 %v2564, %v2522
        %v2572 = vmul.f32 %v2565, %v2537
        %v2573 = vadd.f32 %v2566, -0.28449672
        %v2574 = vadd.f32 %v2567, -0.28449672
        %v2575 = vadd.f32 %v2568, -0.28449672
        %v2576 = vadd.f32 %v2569, -0.28449672
        %v2577 = vadd.f32 %v2570, -0.28449672
        %v2578 = vadd.f32 %v2571, -0.28449672
        %v2579 = vadd.f32 %v2572, -0.28449672
        %v2580 = vmul.f32 %v2573, %v2447
        %v2581 = vmul.f32 %v2574, %v2462
        %v2582 = vmul.f32 %v2575, %v2477
        %v2583 = vmul.f32 %v2576, %v2492
        %v2584 = vmul.f32 %v2577, %v2507
        %v2585 = vmul.f32 %v2578, %v2522
        %v2586 = vmul.f32 %v2579, %v2537
        %v2587 = vadd.f32 %v2580, 0.2548296
        %v2588 = vadd.f32 %v2581, 0.2548296
        %v2589 = vadd.f32 %v2582, 0.2548296
        %v2590 = vadd.f32 %v2583, 0.2548296
        %v2591 = vadd.f32 %v2584, 0.2548296
        %v2592 = vadd.f32 %v2585, 0.2548296
        %v2593 = vadd.f32 %v2586, 0.2548296
        %v2594 = vmul.f32 %v2587, %v2447
        %v2595 = vmul.f32 %v2588, %v2462
        %v2596 = vmul.f32 %v2589, %v2477
        %v2597 = vmul.f32 %v2590, %v2492
        %v2598 = vmul.f32 %v2591, %v2507
        %v2599 = vmul.f32 %v2592, %v2522
        %v2600 = vmul.f32 %v2593, %v2537
        %v2601 = vsub.f32 0.0, %v2412
        %v2602 = vsub.f32 0.0, %v2413
        %v2603 = vsub.f32 0.0, %v2414
        %v2604 = vsub.f32 0.0, %v2415
        %v2605 = vsub.f32 0.0, %v2416
        %v2606 = vsub.f32 0.0, %v2417
        %v2607 = vsub.f32 0.0, %v2418
        %v2608 = vmul.f32 %v2601, %v2412
        %v2609 = vmul.f32 %v2602, %v2413
        %v2610 = vmul.f32 %v2603, %v2414
        %v2611 = vmul.f32 %v2604, %v2415
        %v2612 = vmul.f32 %v2605, %v2416
        %v2613 = vmul.f32 %v2606, %v2417
        %v2614 = vmul.f32 %v2607, %v2418
        %v2615 = vmul.f32 %v2608, 1.442695
        %v2616 = vpow.pop %v2615
        %v2617 = vmul.f32 %v2609, 1.442695
        %v2618 = vpow.pop %v2617
        %v2619 = vmul.f32 %v2610, 1.442695
        %v2620 = vpow.pop %v2619
        %v2621 = vmul.f32 %v2611, 1.442695
        %v2622 = vpow.pop %v2621
        %v2623 = vmul.f32 %v2612, 1.442695
        %v2624 = vpow.pop %v2623
        %v2625 = vmul.f32 %v2613, 1.442695
        %v2626 = vpow.pop %v2625
        %v2627 = vmul.f32 %v2614, 1.442695
        %v2628 = vpow.pop %v2627
        %v2629 = vmul.f32 %v2594, %v2616
        %v2630 = vmul.f32 %v2595, %v2618
        %v2631 = vmul.f32 %v2596, %v2620
        %v2632 = vmul.f32 %v2597, %v2622
        %v2633 = vmul.f32 %v2598, %v2624
        %v2634 = vmul.f32 %v2599, %v2626
        %v2635 = vmul.f32 %v2600, %v2628
        %v2636 = vsub.f32 1.0, %v2629
        %v2637 = vsub.f32 1.0, %v2630
        %v2638 = vsub.f32 1.0, %v2631
        %v2639 = vsub.f32 1.0, %v2632
        %v2640 = vsub.f32 1.0, %v2633
        %v2641 = vsub.f32 1.0, %v2634
        %v2642 = vsub.f32 1.0, %v2635
        %vm2643 = vcmp.ge.f32.partialorder %v2405, 0.0
        %vm2644 = vcmp.ge.f32.partialorder %v2406, 0.0
        %vm2645 = vcmp.ge.f32.partialorder %v2407, 0.0
        %vm2646 = vcmp.ge.f32.partialorder %v2408, 0.0
        %vm2647 = vcmp.ge.f32.partialorder %v2409, 0.0
        %vm2648 = vcmp.ge.f32.partialorder %v2410, 0.0
        %vm2649 = vcmp.ge.f32.partialorder %v2411, 0.0
        %v2650 = vsub.f32 0.0, %v2636
        %v2651 = vsub.f32 0.0, %v2637
        %v2652 = vsub.f32 0.0, %v2638
        %v2653 = vsub.f32 0.0, %v2639
        %v2654 = vsub.f32 0.0, %v2640
        %v2655 = vsub.f32 0.0, %v2641
        %v2656 = vsub.f32 0.0, %v2642
        %v2657 = vsel %vm2643, %v2636, %v2650
        %v2658 = vsel %vm2644, %v2637, %v2651
        %v2659 = vsel %vm2645, %v2638, %v2652
        %v2660 = vsel %vm2646, %v2639, %v2653
        %v2661 = vsel %vm2647, %v2640, %v2654
        %v2662 = vsel %vm2648, %v2641, %v2655
        %v2663 = vsel %vm2649, %v2642, %v2656
        %v2664 = vadd.f32 %v2657, 1.0
        %v2665 = vadd.f32 %v2658, 1.0
        %v2666 = vadd.f32 %v2659, 1.0
        %v2667 = vadd.f32 %v2660, 1.0
        %v2668 = vadd.f32 %v2661, 1.0
        %v2669 = vadd.f32 %v2662, 1.0
        %v2670 = vadd.f32 %v2663, 1.0
        %v2671 = vmul.f32 %v2398, %v2664
        %v2672 = vmul.f32 %v2399, %v2665
        %v2673 = vmul.f32 %v2400, %v2666
        %v2674 = vmul.f32 %v2401, %v2667
        %v2675 = vmul.f32 %v2402, %v2668
        %v2676 = vmul.f32 %v2403, %v2669
        %v2677 = vmul.f32 %v2404, %v2670
        %v2678 = vld [vmem:[#allocation2 + $0xb] sm:$0xff]
        %v2679 = vld [vmem:[#allocation2 + $0x13] sm:$0xff]
        %v2680 = vld [vmem:[#allocation2 + $0x1b] sm:$0xff]
        %v2681 = vld [vmem:[#allocation2 + $0x23] sm:$0xff]
        %v2682 = vld [vmem:[#allocation2 + $0x2b] sm:$0xff]
        %v2683 = vld [vmem:[#allocation2 + $0x33] sm:$0xff]
        %v2684 = vld [vmem:[#allocation2 + $0x3b] sm:$0x3]
        %v2685 = vld [vmem:[%s475] sm:$0xff]
        %v2686 = vld [vmem:[%s478] sm:$0x1]
        %v2688 = vperm.slane %v2686, 0
        %v2691 = vsel %vm713, %v2678, 0
        %v2694 = vsel %vm713, %v2679, 0
        %v2697 = vsel %vm713, %v2680, 0
        %v2700 = vsel %vm713, %v2681, 0
        %v2703 = vsel %vm713, %v2682, 0
        %v2706 = vsel %vm713, %v2683, 0
        %v2709 = vsel %vm713, %v2684, 0
        %2711 = vmatpush.msra.mxu0 0.0
        %2712 = vmatpush.msra.mxu0 0.0
        %2713 = vmatpush.msra.mxu0 0.0
        %2714 = vmatpush.msra.mxu0 0.0
        %2715 = vmatpush.msra.mxu0 0.0
        %2716 = vmatpush.msra.mxu0 0.0
        %2717 = vmatpush.msra.mxu0 0.0
        %2718 = vmatpush.msra.mxu0 0.0
        %2719 = vmatpush.msra.mxu0 0.0
        %2720 = vmatpush.msra.mxu0 0.0
        %2721 = vmatpush.msra.mxu0 0.0
        %2722 = vmatpush.msra.mxu0 0.0
        %2723 = vmatpush.msra.mxu0 0.0
        %2724 = vmatpush.msra.mxu0 0.0
        %2725 = vmatpush.msra.mxu0 0.0
        %2726 = vmatpush.msra.mxu0 %v2685
        %2727 = vmatmul.f32.gmra.mxu0 %v2691
        %v2728 = vpop.f32.mrf.mxu0
        %v2729 = vadd.f32 %v2688, %v2728
        %2730 = vmatmul.f32.gmra.mxu0 %v2694
        %v2731 = vpop.f32.mrf.mxu0
        %v2732 = vadd.f32 %v2688, %v2731
        %2733 = vmatmul.f32.gmra.mxu0 %v2697
        %v2734 = vpop.f32.mrf.mxu0
        %v2735 = vadd.f32 %v2688, %v2734
        %2736 = vmatmul.f32.gmra.mxu0 %v2700
        %v2737 = vpop.f32.mrf.mxu0
        %v2738 = vadd.f32 %v2688, %v2737
        %2739 = vmatmul.f32.gmra.mxu0 %v2703
        %v2740 = vpop.f32.mrf.mxu0
        %v2741 = vadd.f32 %v2688, %v2740
        %2742 = vmatmul.f32.gmra.mxu0 %v2706
        %v2743 = vpop.f32.mrf.mxu0
        %v2744 = vadd.f32 %v2688, %v2743
        %2745 = vmatmul.f32.gmra.mxu0 %v2709
        %v2746 = vpop.f32.mrf.mxu0
        %v2747 = vadd.f32 %v2688, %v2746
        %2748 = vdwg.mxu0
        %v2749 = vadd.f32 %v2671, %v2729
        %v2750 = vadd.f32 %v2672, %v2732
        %v2751 = vadd.f32 %v2673, %v2735
        %v2752 = vadd.f32 %v2674, %v2738
        %v2753 = vadd.f32 %v2675, %v2741
        %v2754 = vadd.f32 %v2676, %v2744
        %v2755 = vadd.f32 %v2677, %v2747
        %v2756 = vmul.f32 %v2749, %v1651
        %v2757 = vmul.f32 %v2750, %v1656
        %v2758 = vmul.f32 %v2751, %v1661
        %v2759 = vmul.f32 %v2752, %v1666
        %v2760 = vmul.f32 %v2753, %v1671
        %v2761 = vmul.f32 %v2754, %v1676
        %v2762 = vmul.f32 %v2755, %v1681
        %2763 = vst.msk [vmem:[#allocation2 + $0xb] sm:$0xff] %vm713, %v2756
        %2764 = vst.msk [vmem:[#allocation2 + $0x13] sm:$0xff] %vm713, %v2757
        %2765 = vst.msk [vmem:[#allocation2 + $0x1b] sm:$0xff] %vm713, %v2758
        %2766 = vst.msk [vmem:[#allocation2 + $0x23] sm:$0xff] %vm713, %v2759
        %2767 = vst.msk [vmem:[#allocation2 + $0x2b] sm:$0xff] %vm713, %v2760
        %2768 = vst.msk [vmem:[#allocation2 + $0x33] sm:$0xff] %vm713, %v2761
        %vm2769 = vcmask 58368
        %2770 = vst.msk [vmem:[#allocation2 + $0x3b] sm:$0x3] %vm2769, %v2762
        %p2771 = scmp.eq.s32.totalorder %s24, 1
        // Predicated region
        $region73: #{resmlp_forward.1} parent=67 // pred_check
          %p2772 = pneg %p2771
        $region74: #{resmlp_forward.1} parent=67 // pred_check_branch
          %2774 = sbr.rel (%p2772) target = $region76
        $region75: #{resmlp_forward.1} parent=67 // pred_region
          %v2775 = vld [vmem:[#allocation2 + $0xb] sm:$0xff]
          %v2776 = vld [vmem:[#allocation2 + $0x13] sm:$0xff]
          %v2777 = vld [vmem:[#allocation2 + $0x1b] sm:$0xff]
          %v2778 = vld [vmem:[#allocation2 + $0x23] sm:$0xff]
          %v2779 = vld [vmem:[#allocation2 + $0x2b] sm:$0xff]
          %v2780 = vld [vmem:[#allocation2 + $0x33] sm:$0xff]
          %v2781 = vld [vmem:[#allocation2 + $0x3b] sm:$0x3]
          %2782 = vxpose.xlu0.b32.start [1/16] %v2775, 128
          %2783 = vxpose.xlu0.b32.cont [2/16] %v2776, 128
          %2784 = vxpose.xlu0.b32.cont [3/16] %v2777, 128
          %2785 = vxpose.xlu0.b32.cont [4/16] %v2778, 128
          %2786 = vxpose.xlu0.b32.cont [5/16] %v2779, 128
          %2787 = vxpose.xlu0.b32.cont [6/16] %v2780, 128
          %2788 = vxpose.xlu0.b32.cont [7/16] %v2781, 128
          %2789 = vxpose.xlu0.b32.cont [8/16] 0.0, 128
          %2790 = vxpose.xlu0.b32.cont [9/16] 0.0, 128
          %2791 = vxpose.xlu0.b32.cont [10/16] 0.0, 128
          %2792 = vxpose.xlu0.b32.cont [11/16] 0.0, 128
          %2793 = vxpose.xlu0.b32.cont [12/16] 0.0, 128
          %2794 = vxpose.xlu0.b32.cont [13/16] 0.0, 128
          %2795 = vxpose.xlu0.b32.cont [14/16] 0.0, 128
          %2796 = vxpose.xlu0.b32.cont [15/16] 0.0, 128
          %2797 = vxpose.xlu0.b32.end [16/16] 0.0, 128
          %v2798 = vpop.trf.xlu0
          %v2799 = vpop.trf.xlu0
          %v2800 = vpop.trf.xlu0
          %v2801 = vpop.trf.xlu0
          %v2802 = vpop.trf.xlu0
          %v2803 = vpop.trf.xlu0
          %v2804 = vpop.trf.xlu0
          %v2805 = vpop.trf.xlu0
          %v2806 = vpop.trf.xlu0
          %v2807 = vpop.trf.xlu0
          %v2808 = vpop.trf.xlu0
          %v2809 = vpop.trf.xlu0
          %v2810 = vpop.trf.xlu0
          %v2811 = vpop.trf.xlu0
          %v2812 = vpop.trf.xlu0
          %v2813 = vpop.trf.xlu0
          %v2814 = vld [vmem:[%s10] sm:$0xff]
          %v2815 = vld [vmem:[%s10 + $0x8] sm:$0xff]
          %v2816 = vld [vmem:[%s10 + $0x10] sm:$0xff]
          %v2817 = vld [vmem:[%s10 + $0x18] sm:$0xff]
          %v2818 = vld [vmem:[%s10 + $0x20] sm:$0xff]
          %v2819 = vld [vmem:[%s10 + $0x28] sm:$0xff]
          %v2820 = vld [vmem:[%s10 + $0x30] sm:$0x3]
          %v2821 = vld [vmem:[%s11] sm:$0x1]
          %v2823 = vperm.slane %v2821, 0
          %vm2825 = vcmask 408576
          %v2827 = vsel %vm2825, %v2798, 0
          %vm2829 = vcmask 1041408
          %v2831 = vsel %vm2829, %v2820, 0
          %2833 = vmatpush.msra.mxu0 0.0
          %2834 = vmatpush.msra.mxu0 0.0
          %2835 = vmatpush.msra.mxu0 0.0
          %2836 = vmatpush.msra.mxu0 0.0
          %2837 = vmatpush.msra.mxu0 0.0
          %2838 = vmatpush.msra.mxu0 0.0
          %2839 = vmatpush.msra.mxu0 0.0
          %2840 = vmatpush.msra.mxu0 0.0
          %2841 = vmatpush.msra.mxu0 0.0
          %2842 = vmatpush.msra.mxu0 %v2831
          %2843 = vmatpush.msra.mxu0 %v2819
          %2844 = vmatpush.msra.mxu0 %v2818
          %2845 = vmatpush.msra.mxu0 %v2817
          %2846 = vmatpush.msra.mxu0 %v2816
          %2847 = vmatpush.msra.mxu0 %v2815
          %2848 = vmatpush.msra.mxu0 %v2814
          %2849 = vmatmul.f32.gmra.mxu0 %v2827
          %v2850 = vpop.f32.mrf.mxu0
          %v2851 = vadd.f32 %v2823, %v2850
          %2852 = vdwg.mxu0
          %2853 = vst [vmem:[#allocation4] sm:$0xff] %v2851
        $region76: #{resmlp_forward.1} parent=67 // pred_fallthru
          _
        // Predicated region
        $region77: #{resmlp_forward.1} parent=67 // pred_check
          %p2854 = pneg %p319
        $region78: #{resmlp_forward.1} parent=67 // pred_check_branch
          %2856 = sbr.rel (%p2854) target = $region80
        $region79: #{resmlp_forward.1} parent=67 // pred_region
          %2858 = vsyncadd [#allocation5], 0
          %s2860 = sshll.u32 [#allocation4], 4
          %s2861 = int_to_ptr.vmem [resolvable:$true] %s2860
          %s2862 = sshll.u32 %s12, 4
          %s2863 = int_to_ptr.hbm [resolvable:$true] %s2862
          %2865 = dma.vmem_to_hbm [thread:$0]  %s2861, 128, %s2863, [#allocation5]
        $region80: #{resmlp_forward.1} parent=67 // pred_fallthru
          _
        // Predicated region
        $region81: #{resmlp_forward.1} parent=67 // pred_check
          %p2866 = pneg %p319
        $region82: #{resmlp_forward.1} parent=67 // pred_check_branch
          %2868 = sbr.rel (%p2866) target = $region84
        $region83: #{resmlp_forward.1} parent=67 // pred_region
          %2870 = dma.done [#allocation5], 128
        $region84: #{resmlp_forward.1} parent=67 // pred_fallthru
          _
      $region68: #{resmlp_forward.1} parent=5 // pred_fallthru
        _
      %p2871 = scmp.le.s32.totalorder 2, %s19
      // Predicated region
      $region85: #{resmlp_forward.1} parent=5 // pred_check
        %p2872 = pneg %p2871
      $region86: #{resmlp_forward.1} parent=5 // pred_check_branch
        %2874 = sbr.rel (%p2872) target = $region88
      $region87: #{resmlp_forward.1} parent=5 // pred_region
        %s2875 = ssub.s32 %s19, 2
      $region88: #{resmlp_forward.1} parent=5 // pred_fallthru
        _
    $region6: #{resmlp_forward.1} parent=1 // loop_footer
      %s23 = sadd.s32 1, %s19
    $region7: #{resmlp_forward.1} parent=1 // loop_footer_branch
      %18 = sbr.rel target = $region3
    $region8: #{resmlp_forward.1} parent=1 // loop_exit
      _
    %2876 = vsyncpa [#allocation5], 1
    %s2877 = scalar_lea.sflag [#allocation5], 1
    %2878 = vsyncpa %s2877, 1

</llo_original>
